<compile_context>
chip_gen: v7x
topology: tpu7x:2x2x1
jax: 0.10.0
libtpu: 0.0.40
codegen_flags: <defaults>
</compile_context>

<pallas_src>
import functools
import math

import jax
import jax.numpy as jnp
from jax.experimental import pallas as pl
from jax.experimental.pallas import tpu as pltpu


# ----------------------------------------------------------------------------
# Fused Pallas kernel: Linear -> stacked LSTM, both heads, all time steps.
# ----------------------------------------------------------------------------
def _fused_kernel(x_ref, lw_ref, lb_ref, wih_ref, whh_ref, b_ref,
                  out_ref, act_ref, gx_ref, *, S, Bp, A, Hm, L):
    # x_ref:   (S*Bp, Ds)         input sequence (shared by both heads)
    # lw_ref:  (Ds, 2*A)          fused Linear weight (head0 cols | head1 cols)
    # lb_ref:  (1, 2*A)           fused Linear bias
    # wih_ref: (L, 2*A, 8*Hm)     fused LSTM input->gate weights (block struct.)
    # whh_ref: (L, 2*Hm, 8*Hm)    fused LSTM hidden->gate weights
    # b_ref:   (L, 1, 8*Hm)       fused gate bias (b_ih + b_hh)
    # out_ref: (S, Bp, 2*Hm)      last-layer hidden states, both heads
    # act_ref: VMEM (S*Bp, 2*A)   inter-layer activation sequence
    # gx_ref:  VMEM (S*Bp, 8*Hm)  per-layer input contribution to the gates
    f32 = jnp.float32
    G2 = 2 * Hm                       # fused width of one gate group (i/f/g/o)

    def sigmoid(z):
        # logistic via a single EUP tanh pass (mathematically identical).
        return 0.5 * jnp.tanh(0.5 * z) + 0.5

    # Fused Linear projection for both heads and the whole sequence:
    # a single MXU matmul.
    act_ref[...] = (jnp.dot(x_ref[...], lw_ref[...],
                            preferred_element_type=f32) + lb_ref[...])

    for layer in range(L):
        w_ih = wih_ref[layer]         # (2A, 8Hm)
        w_hh = whh_ref[layer]         # (2Hm, 8Hm)
        bias = b_ref[layer]           # (1, 8Hm)
        last = layer == L - 1

        # Input contribution to the gates for ALL time steps and BOTH heads in
        # one matmul — only h @ W_hh remains on the sequential chain.
        gx_ref[...] = (jnp.dot(act_ref[...], w_ih,
                               preferred_element_type=f32) + bias)

        h = jnp.zeros((Bp, G2), f32)
        c = jnp.zeros((Bp, G2), f32)
        for t in range(S):            # static unroll; S is tiny here.
            gates = gx_ref[pl.ds(t * Bp, Bp), :] + jnp.dot(
                h, w_hh, preferred_element_type=f32)          # (Bp, 8Hm)
            # Full-vreg transcendentals (two EUP passes), then static slices.
            sig = sigmoid(gates)
            tnh = jnp.tanh(gates)
            i_g = sig[:, 0 * G2:1 * G2]
            f_g = sig[:, 1 * G2:2 * G2]
            g_g = tnh[:, 2 * G2:3 * G2]
            o_g = sig[:, 3 * G2:4 * G2]
            c = f_g * c + i_g * g_g
            h = o_g * jnp.tanh(c)
            if last:
                # Last layer writes straight into the output block — no final
                # act->out copy; HBM writeback overlaps the recurrence tail.
                out_ref[t] = h
            else:
                if A == Hm:
                    act_ref[pl.ds(t * Bp, Bp), :] = h
                else:
                    # Place each head's hidden state at its A-strided slot;
                    # stale columns beyond Hm are neutralized by zero w_ih rows.
                    act_ref[pl.ds(t * Bp, Bp), pl.ds(0, Hm)] = h[:, 0:Hm]
                    act_ref[pl.ds(t * Bp, Bp), pl.ds(A, Hm)] = h[:, Hm:G2]


# ----------------------------------------------------------------------------
# Parameter construction (deterministic, PyTorch-style uniform init)
# ----------------------------------------------------------------------------
def _uniform(key, shape, bound):
    return jax.random.uniform(key, shape, jnp.float32, -bound, bound)


def make_branch_params(key, state_dim, hidden_dim, out_dim, num_layers):
    """nn.Linear(state_dim, hidden_dim) + nn.LSTM(hidden_dim, out_dim, num_layers).

    Weights stored transposed vs. PyTorch ((in, out) / (in, 4H)); LSTM biases
    b_ih + b_hh pre-fused.  Gate order is PyTorch's (i, f, g, o).
    """
    keys = jax.random.split(key, 2 + 4 * num_layers)
    lin_bound = 1.0 / math.sqrt(state_dim)
    params = {
        "lin_w": _uniform(keys[0], (state_dim, hidden_dim), lin_bound),
        "lin_b": _uniform(keys[1], (hidden_dim,), lin_bound),
        "lstm": [],
    }
    lstm_bound = 1.0 / math.sqrt(out_dim)
    for layer in range(num_layers):
        din = hidden_dim if layer == 0 else out_dim
        k = keys[2 + 4 * layer: 2 + 4 * (layer + 1)]
        w_ih = _uniform(k[0], (din, 4 * out_dim), lstm_bound)
        w_hh = _uniform(k[1], (out_dim, 4 * out_dim), lstm_bound)
        b_ih = _uniform(k[2], (4 * out_dim,), lstm_bound)
        b_hh = _uniform(k[3], (4 * out_dim,), lstm_bound)
        params["lstm"].append((w_ih, w_hh, b_ih + b_hh))
    return params


# ----------------------------------------------------------------------------
# Pack both heads into fused block-structured weights (host side, done once)
# ----------------------------------------------------------------------------
def _pack_fused(policy_params, value_params, A, Hm, L):
    """Gate-major fused layout: columns = [i | f | g | o], each 2*Hm wide with
    [head0 | head1] inside; rows = [head0 inputs (A) | head1 inputs (A)]."""
    Ds = policy_params["lin_w"].shape[0]
    G2 = 2 * Hm
    lw = jnp.zeros((Ds, 2 * A), jnp.float32)
    lb = jnp.zeros((1, 2 * A), jnp.float32)
    for p, prm in enumerate((policy_params, value_params)):
        hid = prm["lin_w"].shape[1]
        lw = lw.at[:, p * A:p * A + hid].set(prm["lin_w"])
        lb = lb.at[0, p * A:p * A + hid].set(prm["lin_b"])

    wih_l, whh_l, b_l = [], [], []
    for layer in range(L):
        wih_p = jnp.zeros((2 * A, 4 * G2), jnp.float32)
        whh_p = jnp.zeros((G2, 4 * G2), jnp.float32)
        b_p = jnp.zeros((1, 4 * G2), jnp.float32)
        for p, prm in enumerate((policy_params, value_params)):
            w_ih, w_hh, b = prm["lstm"][layer]
            din, h4 = w_ih.shape
            H = h4 // 4
            for g in range(4):                         # i, f, g, o
                c0 = g * G2 + p * Hm
                wih_p = wih_p.at[p * A:p * A + din, c0:c0 + H].set(
                    w_ih[:, g * H:(g + 1) * H])
                whh_p = whh_p.at[p * Hm:p * Hm + H, c0:c0 + H].set(
                    w_hh[:, g * H:(g + 1) * H])
                b_p = b_p.at[0, c0:c0 + H].set(b[g * H:(g + 1) * H])
        wih_l.append(wih_p)
        whh_l.append(whh_p)
        b_l.append(b_p)
    return lw, lb, jnp.stack(wih_l), jnp.stack(whh_l), jnp.stack(b_l)


def build_prediction_fn(policy_params, value_params):
    """Packs both heads' params once; returns a jitted forward pass."""
    Ds, hidden = policy_params["lin_w"].shape
    h_pol = policy_params["lstm"][0][1].shape[0]    # w_hh: (H, 4H)
    h_val = value_params["lstm"][0][1].shape[0]
    L = len(policy_params["lstm"])
    assert len(value_params["lstm"]) == L
    Hm = max(h_pol, h_val)          # common (padded) LSTM hidden width
    A = max(hidden, Hm)             # common (padded) per-head layer-input width

    lw_f, lb_f, wih_f, whh_f, b_f = _pack_fused(
        policy_params, value_params, A, Hm, L)
    # shapes: (Ds,2A), (1,2A), (L,2A,8Hm), (L,2Hm,8Hm), (L,1,8Hm)

    @jax.jit
    def forward(state_normalized):
        S, B, Ds_in = state_normalized.shape
        assert Ds_in == Ds
        Bp = ((B + 7) // 8) * 8     # pad batch to the 8-sublane granularity

        # One pad op (+ a free reshape).  Padded rows carry the Linear bias
        # through the LSTM but never mix with real rows; sliced off below.
        x_p = jnp.pad(state_normalized.astype(jnp.float32),
                      ((0, 0), (0, Bp - B), (0, 0))).reshape(S * Bp, Ds)

        kernel = functools.partial(
            _fused_kernel, S=S, Bp=Bp, A=A, Hm=Hm, L=L)

        out = pl.pallas_call(
            kernel,
            out_shape=jax.ShapeDtypeStruct((S, Bp, 2 * Hm), jnp.float32),
            grid_spec=pltpu.PrefetchScalarGridSpec(
                num_scalar_prefetch=0,
                grid=(1,),                           # both heads fused
                in_specs=[
                    pl.BlockSpec((S * Bp, Ds), lambda i: (0, 0)),
                    pl.BlockSpec((Ds, 2 * A), lambda i: (0, 0)),
                    pl.BlockSpec((1, 2 * A), lambda i: (0, 0)),
                    pl.BlockSpec((L, 2 * A, 8 * Hm), lambda i: (0, 0, 0)),
                    pl.BlockSpec((L, 2 * Hm, 8 * Hm), lambda i: (0, 0, 0)),
                    pl.BlockSpec((L, 1, 8 * Hm), lambda i: (0, 0, 0)),
                ],
                out_specs=pl.BlockSpec((S, Bp, 2 * Hm), lambda i: (0, 0, 0)),
                scratch_shapes=[
                    pltpu.VMEM((S * Bp, 2 * A), jnp.float32),     # act
                    pltpu.VMEM((S * Bp, 8 * Hm), jnp.float32),    # gx
                ],
            ),
            compiler_params=pltpu.CompilerParams(
                dimension_semantics=("arbitrary",)),
        )(x_p, lw_f, lb_f, wih_f, whh_f, b_f)

        # Two static slices — no reshape/stack chain around the kernel.
        policy_out = out[:, :B, 0:h_pol]
        value_out = out[:, :B, Hm:Hm + h_val]
        return policy_out, value_out

    return forward


# ----------------------------------------------------------------------------
# Pure-JAX reference (per-head, unfused) for a correctness check
# ----------------------------------------------------------------------------
def _reference_branch(x, params):
    hi = jax.lax.Precision.HIGHEST
    h = jnp.einsum("sbd,dh->sbh", x, params["lin_w"],
                   precision=hi) + params["lin_b"]
    B = x.shape[1]
    for (w_ih, w_hh, b) in params["lstm"]:
        H = w_hh.shape[0]

        def step(carry, x_t, w_ih=w_ih, w_hh=w_hh, b=b, H=H):
            hh, cc = carry
            gates = (jnp.dot(x_t, w_ih, precision=hi)
                     + jnp.dot(hh, w_hh, precision=hi) + b)
            i = jax.nn.sigmoid(gates[:, 0 * H:1 * H])
            f = jax.nn.sigmoid(gates[:, 1 * H:2 * H])
            g = jnp.tanh(gates[:, 2 * H:3 * H])
            o = jax.nn.sigmoid(gates[:, 3 * H:4 * H])
            cc = f * cc + i * g
            hh = o * jnp.tanh(cc)
            return (hh, cc), hh

        init = (jnp.zeros((B, H), jnp.float32), jnp.zeros((B, H), jnp.float32))
        _, h = jax.lax.scan(step, init, h)
    return h


# ----------------------------------------------------------------------------
# Main
# ----------------------------------------------------------------------------
if __name__ == "__main__":
    state_dimension = 32
    action_dimension = 16
    hidden_layer_dimensions = 32
    number_of_hidden_layer = 2
    seq_len, batch = 8, 2

    root = jax.random.PRNGKey(0)
    k_in, k_pol, k_val = jax.random.split(root, 3)

    state_normalized = jax.random.normal(
        k_in, (seq_len, batch, state_dimension), jnp.float32)

    policy_params = make_branch_params(
        k_pol, state_dimension, hidden_layer_dimensions,
        action_dimension, number_of_hidden_layer)
    value_params = make_branch_params(
        k_val, state_dimension, hidden_layer_dimensions,
        state_dimension, number_of_hidden_layer)

    forward = build_prediction_fn(policy_params, value_params)
    policy_out, value_out = forward(state_normalized)
    jax.block_until_ready((policy_out, value_out))

    assert policy_out.shape == (seq_len, batch, action_dimension)
    assert value_out.shape == (seq_len, batch, state_dimension)
    assert bool(jnp.all(jnp.isfinite(policy_out)))
    assert bool(jnp.all(jnp.isfinite(value_out)))

    # Correctness vs. a pure-JAX reference.  Tolerance absorbs MXU f32
    # matmul-pass differences; packing / gate-order / head-crosstalk bugs
    # would produce errors orders of magnitude larger.
    ref_policy = _reference_branch(state_normalized, policy_params)
    ref_value = _reference_branch(state_normalized, value_params)
    assert bool(jnp.allclose(policy_out, ref_policy, rtol=5e-2, atol=5e-2))
    assert bool(jnp.allclose(value_out, ref_value, rtol=5e-2, atol=5e-2))

    print("KERNEL_OK")
</pallas_src>

<mosaic_0001>
module attributes {stable_mosaic.version = 11 : i64} {
  func.func @_fused_kernel(%arg0: i32, %arg1: memref<64x32xf32, #tpu.memory_space<vmem>>, %arg2: memref<32x64xf32, #tpu.memory_space<vmem>>, %arg3: memref<1x64xf32, #tpu.memory_space<vmem>>, %arg4: memref<2x64x256xf32, #tpu.memory_space<vmem>>, %arg5: memref<2x64x256xf32, #tpu.memory_space<vmem>>, %arg6: memref<2x1x256xf32, #tpu.memory_space<vmem>>, %arg7: memref<8x8x64xf32, #tpu.memory_space<vmem>>, %arg8: memref<64x64xf32, #tpu.memory_space<vmem>>, %arg9: memref<64x256xf32, #tpu.memory_space<vmem>>) attributes {dimension_semantics = [#tpu.dimension_semantics<arbitrary>], iteration_bounds = array<i64: 1>, scalar_prefetch = 0 : i64, scratch_operands = 2 : i64, tpu.core_type = #tpu.core_type<tc>, window_params = [{pipeline_mode = #tpu.pipeline_mode<synchronous>, transform_indices = @transform_0, window_bounds = array<i64: 64, 32>}, {pipeline_mode = #tpu.pipeline_mode<synchronous>, transform_indices = @transform_1, window_bounds = array<i64: 32, 64>}, {pipeline_mode = #tpu.pipeline_mode<synchronous>, transform_indices = @transform_2, window_bounds = array<i64: 1, 64>}, {pipeline_mode = #tpu.pipeline_mode<synchronous>, transform_indices = @transform_3, window_bounds = array<i64: 2, 64, 256>}, {pipeline_mode = #tpu.pipeline_mode<synchronous>, transform_indices = @transform_4, window_bounds = array<i64: 2, 64, 256>}, {pipeline_mode = #tpu.pipeline_mode<synchronous>, transform_indices = @transform_5, window_bounds = array<i64: 2, 1, 256>}, {pipeline_mode = #tpu.pipeline_mode<synchronous>, transform_indices = @transform_6, window_bounds = array<i64: 8, 8, 64>}]} {
    %c0 = arith.constant 0 : index
    %c0_0 = arith.constant 0 : index
    %0 = vector.load %arg1[%c0, %c0_0] : memref<64x32xf32, #tpu.memory_space<vmem>>, vector<64x32xf32>
    %c0_1 = arith.constant 0 : index
    %c0_2 = arith.constant 0 : index
    %1 = vector.load %arg2[%c0_1, %c0_2] : memref<32x64xf32, #tpu.memory_space<vmem>>, vector<32x64xf32>
    %cst = arith.constant dense<0.000000e+00> : vector<64x64xf32>
    %2 = tpu.matmul %0, %1, %cst {dimension_numbers = #tpu.dot_dimension_numbers<[1], [0], [0], [1], [0, 0, 1, 1], [], []>} : vector<64x32xf32>, vector<32x64xf32>, vector<64x64xf32> -> vector<64x64xf32>
    %c0_3 = arith.constant 0 : index
    %c0_4 = arith.constant 0 : index
    %3 = vector.load %arg3[%c0_3, %c0_4] : memref<1x64xf32, #tpu.memory_space<vmem>>, vector<1x64xf32>
    %4 = vector.broadcast %3 : vector<1x64xf32> to vector<64x64xf32>
    %5 = arith.addf %2, %4 : vector<64x64xf32>
    %c0_5 = arith.constant 0 : index
    %c0_6 = arith.constant 0 : index
    %6 = vector.load %arg8[%c0_5, %c0_6] : memref<64x64xf32, #tpu.memory_space<vmem>>, vector<64x64xf32>
    tpu.vector_store %arg8[%c0_5, %c0_6], %5 {strides = array<i32>} : memref<64x64xf32, #tpu.memory_space<vmem>>, vector<64x64xf32>,
    %c0_7 = arith.constant 0 : index
    %c0_8 = arith.constant 0 : index
    %c0_9 = arith.constant 0 : index
    %7 = vector.load %arg4[%c0_7, %c0_8, %c0_9] : memref<2x64x256xf32, #tpu.memory_space<vmem>>, vector<1x64x256xf32>
    %8 = vector.shape_cast %7 : vector<1x64x256xf32> to vector<64x256xf32>
    %c0_10 = arith.constant 0 : index
    %c0_11 = arith.constant 0 : index
    %c0_12 = arith.constant 0 : index
    %9 = vector.load %arg5[%c0_10, %c0_11, %c0_12] : memref<2x64x256xf32, #tpu.memory_space<vmem>>, vector<1x64x256xf32>
    %10 = vector.shape_cast %9 : vector<1x64x256xf32> to vector<64x256xf32>
    %c0_13 = arith.constant 0 : index
    %c0_14 = arith.constant 0 : index
    %c0_15 = arith.constant 0 : index
    %11 = vector.load %arg6[%c0_13, %c0_14, %c0_15] : memref<2x1x256xf32, #tpu.memory_space<vmem>>, vector<1x1x256xf32>
    %12 = vector.shape_cast %11 : vector<1x1x256xf32> to vector<1x256xf32>
    %c0_16 = arith.constant 0 : index
    %c0_17 = arith.constant 0 : index
    %13 = vector.load %arg8[%c0_16, %c0_17] : memref<64x64xf32, #tpu.memory_space<vmem>>, vector<64x64xf32>
    %cst_18 = arith.constant dense<0.000000e+00> : vector<64x256xf32>
    %14 = tpu.matmul %13, %8, %cst_18 {dimension_numbers = #tpu.dot_dimension_numbers<[1], [0], [0], [1], [0, 0, 1, 1], [], []>} : vector<64x64xf32>, vector<64x256xf32>, vector<64x256xf32> -> vector<64x256xf32>
    %15 = vector.broadcast %12 : vector<1x256xf32> to vector<64x256xf32>
    %16 = arith.addf %14, %15 : vector<64x256xf32>
    %c0_19 = arith.constant 0 : index
    %c0_20 = arith.constant 0 : index
    %17 = vector.load %arg9[%c0_19, %c0_20] : memref<64x256xf32, #tpu.memory_space<vmem>>, vector<64x256xf32>
    tpu.vector_store %arg9[%c0_19, %c0_20], %16 {strides = array<i32>} : memref<64x256xf32, #tpu.memory_space<vmem>>, vector<64x256xf32>,
    %cst_21 = arith.constant 0.000000e+00 : f32
    %18 = vector.broadcast %cst_21 : f32 to vector<8x64xf32>
    %cst_22 = arith.constant 0.000000e+00 : f32
    %19 = vector.broadcast %cst_22 : f32 to vector<8x64xf32>
    %c0_23 = arith.constant 0 : index
    %c0_24 = arith.constant 0 : index
    %20 = vector.load %arg9[%c0_23, %c0_24] : memref<64x256xf32, #tpu.memory_space<vmem>>, vector<8x256xf32>
    %cst_25 = arith.constant dense<0.000000e+00> : vector<8x256xf32>
    %21 = tpu.matmul %18, %10, %cst_25 {dimension_numbers = #tpu.dot_dimension_numbers<[1], [0], [0], [1], [0, 0, 1, 1], [], []>} : vector<8x64xf32>, vector<64x256xf32>, vector<8x256xf32> -> vector<8x256xf32>
    %22 = arith.addf %20, %21 : vector<8x256xf32>
    %cst_26 = arith.constant 5.000000e-01 : f32
    %23 = vector.broadcast %cst_26 : f32 to vector<8x256xf32>
    %24 = arith.mulf %23, %22 : vector<8x256xf32>
    %25 = math.tanh %24 : vector<8x256xf32>
    %cst_27 = arith.constant 5.000000e-01 : f32
    %26 = vector.broadcast %cst_27 : f32 to vector<8x256xf32>
    %27 = arith.mulf %26, %25 : vector<8x256xf32>
    %cst_28 = arith.constant 5.000000e-01 : f32
    %28 = vector.broadcast %cst_28 : f32 to vector<8x256xf32>
    %29 = arith.addf %27, %28 : vector<8x256xf32>
    %30 = math.tanh %22 : vector<8x256xf32>
    %31 = vector.extract_strided_slice %29 {offsets = [0, 0], sizes = [8, 64], strides = [1, 1]} : vector<8x256xf32> to vector<8x64xf32>
    %32 = vector.extract_strided_slice %29 {offsets = [0, 64], sizes = [8, 64], strides = [1, 1]} : vector<8x256xf32> to vector<8x64xf32>
    %33 = vector.extract_strided_slice %30 {offsets = [0, 128], sizes = [8, 64], strides = [1, 1]} : vector<8x256xf32> to vector<8x64xf32>
    %34 = vector.extract_strided_slice %29 {offsets = [0, 192], sizes = [8, 64], strides = [1, 1]} : vector<8x256xf32> to vector<8x64xf32>
    %35 = arith.mulf %32, %19 : vector<8x64xf32>
    %36 = arith.mulf %31, %33 : vector<8x64xf32>
    %37 = arith.addf %35, %36 : vector<8x64xf32>
    %38 = math.tanh %37 : vector<8x64xf32>
    %39 = arith.mulf %34, %38 : vector<8x64xf32>
    %c0_29 = arith.constant 0 : index
    %c0_30 = arith.constant 0 : index
    %40 = vector.load %arg8[%c0_29, %c0_30] : memref<64x64xf32, #tpu.memory_space<vmem>>, vector<8x64xf32>
    tpu.vector_store %arg8[%c0_29, %c0_30], %39 {strides = array<i32>} : memref<64x64xf32, #tpu.memory_space<vmem>>, vector<8x64xf32>,
    %c8 = arith.constant 8 : index
    %c0_31 = arith.constant 0 : index
    %41 = vector.load %arg9[%c8, %c0_31] : memref<64x256xf32, #tpu.memory_space<vmem>>, vector<8x256xf32>
    %cst_32 = arith.constant dense<0.000000e+00> : vector<8x256xf32>
    %42 = tpu.matmul %39, %10, %cst_32 {dimension_numbers = #tpu.dot_dimension_numbers<[1], [0], [0], [1], [0, 0, 1, 1], [], []>} : vector<8x64xf32>, vector<64x256xf32>, vector<8x256xf32> -> vector<8x256xf32>
    %43 = arith.addf %41, %42 : vector<8x256xf32>
    %cst_33 = arith.constant 5.000000e-01 : f32
    %44 = vector.broadcast %cst_33 : f32 to vector<8x256xf32>
    %45 = arith.mulf %44, %43 : vector<8x256xf32>
    %46 = math.tanh %45 : vector<8x256xf32>
    %cst_34 = arith.constant 5.000000e-01 : f32
    %47 = vector.broadcast %cst_34 : f32 to vector<8x256xf32>
    %48 = arith.mulf %47, %46 : vector<8x256xf32>
    %cst_35 = arith.constant 5.000000e-01 : f32
    %49 = vector.broadcast %cst_35 : f32 to vector<8x256xf32>
    %50 = arith.addf %48, %49 : vector<8x256xf32>
    %51 = math.tanh %43 : vector<8x256xf32>
    %52 = vector.extract_strided_slice %50 {offsets = [0, 0], sizes = [8, 64], strides = [1, 1]} : vector<8x256xf32> to vector<8x64xf32>
    %53 = vector.extract_strided_slice %50 {offsets = [0, 64], sizes = [8, 64], strides = [1, 1]} : vector<8x256xf32> to vector<8x64xf32>
    %54 = vector.extract_strided_slice %51 {offsets = [0, 128], sizes = [8, 64], strides = [1, 1]} : vector<8x256xf32> to vector<8x64xf32>
    %55 = vector.extract_strided_slice %50 {offsets = [0, 192], sizes = [8, 64], strides = [1, 1]} : vector<8x256xf32> to vector<8x64xf32>
    %56 = arith.mulf %53, %37 : vector<8x64xf32>
    %57 = arith.mulf %52, %54 : vector<8x64xf32>
    %58 = arith.addf %56, %57 : vector<8x64xf32>
    %59 = math.tanh %58 : vector<8x64xf32>
    %60 = arith.mulf %55, %59 : vector<8x64xf32>
    %c8_36 = arith.constant 8 : index
    %c0_37 = arith.constant 0 : index
    %61 = vector.load %arg8[%c8_36, %c0_37] : memref<64x64xf32, #tpu.memory_space<vmem>>, vector<8x64xf32>
    tpu.vector_store %arg8[%c8_36, %c0_37], %60 {strides = array<i32>} : memref<64x64xf32, #tpu.memory_space<vmem>>, vector<8x64xf32>,
    %c16 = arith.constant 16 : index
    %c0_38 = arith.constant 0 : index
    %62 = vector.load %arg9[%c16, %c0_38] : memref<64x256xf32, #tpu.memory_space<vmem>>, vector<8x256xf32>
    %cst_39 = arith.constant dense<0.000000e+00> : vector<8x256xf32>
    %63 = tpu.matmul %60, %10, %cst_39 {dimension_numbers = #tpu.dot_dimension_numbers<[1], [0], [0], [1], [0, 0, 1, 1], [], []>} : vector<8x64xf32>, vector<64x256xf32>, vector<8x256xf32> -> vector<8x256xf32>
    %64 = arith.addf %62, %63 : vector<8x256xf32>
    %cst_40 = arith.constant 5.000000e-01 : f32
    %65 = vector.broadcast %cst_40 : f32 to vector<8x256xf32>
    %66 = arith.mulf %65, %64 : vector<8x256xf32>
    %67 = math.tanh %66 : vector<8x256xf32>
    %cst_41 = arith.constant 5.000000e-01 : f32
    %68 = vector.broadcast %cst_41 : f32 to vector<8x256xf32>
    %69 = arith.mulf %68, %67 : vector<8x256xf32>
    %cst_42 = arith.constant 5.000000e-01 : f32
    %70 = vector.broadcast %cst_42 : f32 to vector<8x256xf32>
    %71 = arith.addf %69, %70 : vector<8x256xf32>
    %72 = math.tanh %64 : vector<8x256xf32>
    %73 = vector.extract_strided_slice %71 {offsets = [0, 0], sizes = [8, 64], strides = [1, 1]} : vector<8x256xf32> to vector<8x64xf32>
    %74 = vector.extract_strided_slice %71 {offsets = [0, 64], sizes = [8, 64], strides = [1, 1]} : vector<8x256xf32> to vector<8x64xf32>
    %75 = vector.extract_strided_slice %72 {offsets = [0, 128], sizes = [8, 64], strides = [1, 1]} : vector<8x256xf32> to vector<8x64xf32>
    %76 = vector.extract_strided_slice %71 {offsets = [0, 192], sizes = [8, 64], strides = [1, 1]} : vector<8x256xf32> to vector<8x64xf32>
    %77 = arith.mulf %74, %58 : vector<8x64xf32>
    %78 = arith.mulf %73, %75 : vector<8x64xf32>
    %79 = arith.addf %77, %78 : vector<8x64xf32>
    %80 = math.tanh %79 : vector<8x64xf32>
    %81 = arith.mulf %76, %80 : vector<8x64xf32>
    %c16_43 = arith.constant 16 : index
    %c0_44 = arith.constant 0 : index
    %82 = vector.load %arg8[%c16_43, %c0_44] : memref<64x64xf32, #tpu.memory_space<vmem>>, vector<8x64xf32>
    tpu.vector_store %arg8[%c16_43, %c0_44], %81 {strides = array<i32>} : memref<64x64xf32, #tpu.memory_space<vmem>>, vector<8x64xf32>,
    %c24 = arith.constant 24 : index
    %c0_45 = arith.constant 0 : index
    %83 = vector.load %arg9[%c24, %c0_45] : memref<64x256xf32, #tpu.memory_space<vmem>>, vector<8x256xf32>
    %cst_46 = arith.constant dense<0.000000e+00> : vector<8x256xf32>
    %84 = tpu.matmul %81, %10, %cst_46 {dimension_numbers = #tpu.dot_dimension_numbers<[1], [0], [0], [1], [0, 0, 1, 1], [], []>} : vector<8x64xf32>, vector<64x256xf32>, vector<8x256xf32> -> vector<8x256xf32>
    %85 = arith.addf %83, %84 : vector<8x256xf32>
    %cst_47 = arith.constant 5.000000e-01 : f32
    %86 = vector.broadcast %cst_47 : f32 to vector<8x256xf32>
    %87 = arith.mulf %86, %85 : vector<8x256xf32>
    %88 = math.tanh %87 : vector<8x256xf32>
    %cst_48 = arith.constant 5.000000e-01 : f32
    %89 = vector.broadcast %cst_48 : f32 to vector<8x256xf32>
    %90 = arith.mulf %89, %88 : vector<8x256xf32>
    %cst_49 = arith.constant 5.000000e-01 : f32
    %91 = vector.broadcast %cst_49 : f32 to vector<8x256xf32>
    %92 = arith.addf %90, %91 : vector<8x256xf32>
    %93 = math.tanh %85 : vector<8x256xf32>
    %94 = vector.extract_strided_slice %92 {offsets = [0, 0], sizes = [8, 64], strides = [1, 1]} : vector<8x256xf32> to vector<8x64xf32>
    %95 = vector.extract_strided_slice %92 {offsets = [0, 64], sizes = [8, 64], strides = [1, 1]} : vector<8x256xf32> to vector<8x64xf32>
    %96 = vector.extract_strided_slice %93 {offsets = [0, 128], sizes = [8, 64], strides = [1, 1]} : vector<8x256xf32> to vector<8x64xf32>
    %97 = vector.extract_strided_slice %92 {offsets = [0, 192], sizes = [8, 64], strides = [1, 1]} : vector<8x256xf32> to vector<8x64xf32>
    %98 = arith.mulf %95, %79 : vector<8x64xf32>
    %99 = arith.mulf %94, %96 : vector<8x64xf32>
    %100 = arith.addf %98, %99 : vector<8x64xf32>
    %101 = math.tanh %100 : vector<8x64xf32>
    %102 = arith.mulf %97, %101 : vector<8x64xf32>
    %c24_50 = arith.constant 24 : index
    %c0_51 = arith.constant 0 : index
    %103 = vector.load %arg8[%c24_50, %c0_51] : memref<64x64xf32, #tpu.memory_space<vmem>>, vector<8x64xf32>
    tpu.vector_store %arg8[%c24_50, %c0_51], %102 {strides = array<i32>} : memref<64x64xf32, #tpu.memory_space<vmem>>, vector<8x64xf32>,
    %c32 = arith.constant 32 : index
    %c0_52 = arith.constant 0 : index
    %104 = vector.load %arg9[%c32, %c0_52] : memref<64x256xf32, #tpu.memory_space<vmem>>, vector<8x256xf32>
    %cst_53 = arith.constant dense<0.000000e+00> : vector<8x256xf32>
    %105 = tpu.matmul %102, %10, %cst_53 {dimension_numbers = #tpu.dot_dimension_numbers<[1], [0], [0], [1], [0, 0, 1, 1], [], []>} : vector<8x64xf32>, vector<64x256xf32>, vector<8x256xf32> -> vector<8x256xf32>
    %106 = arith.addf %104, %105 : vector<8x256xf32>
    %cst_54 = arith.constant 5.000000e-01 : f32
    %107 = vector.broadcast %cst_54 : f32 to vector<8x256xf32>
    %108 = arith.mulf %107, %106 : vector<8x256xf32>
    %109 = math.tanh %108 : vector<8x256xf32>
    %cst_55 = arith.constant 5.000000e-01 : f32
    %110 = vector.broadcast %cst_55 : f32 to vector<8x256xf32>
    %111 = arith.mulf %110, %109 : vector<8x256xf32>
    %cst_56 = arith.constant 5.000000e-01 : f32
    %112 = vector.broadcast %cst_56 : f32 to vector<8x256xf32>
    %113 = arith.addf %111, %112 : vector<8x256xf32>
    %114 = math.tanh %106 : vector<8x256xf32>
    %115 = vector.extract_strided_slice %113 {offsets = [0, 0], sizes = [8, 64], strides = [1, 1]} : vector<8x256xf32> to vector<8x64xf32>
    %116 = vector.extract_strided_slice %113 {offsets = [0, 64], sizes = [8, 64], strides = [1, 1]} : vector<8x256xf32> to vector<8x64xf32>
    %117 = vector.extract_strided_slice %114 {offsets = [0, 128], sizes = [8, 64], strides = [1, 1]} : vector<8x256xf32> to vector<8x64xf32>
    %118 = vector.extract_strided_slice %113 {offsets = [0, 192], sizes = [8, 64], strides = [1, 1]} : vector<8x256xf32> to vector<8x64xf32>
    %119 = arith.mulf %116, %100 : vector<8x64xf32>
    %120 = arith.mulf %115, %117 : vector<8x64xf32>
    %121 = arith.addf %119, %120 : vector<8x64xf32>
    %122 = math.tanh %121 : vector<8x64xf32>
    %123 = arith.mulf %118, %122 : vector<8x64xf32>
    %c32_57 = arith.constant 32 : index
    %c0_58 = arith.constant 0 : index
    %124 = vector.load %arg8[%c32_57, %c0_58] : memref<64x64xf32, #tpu.memory_space<vmem>>, vector<8x64xf32>
    tpu.vector_store %arg8[%c32_57, %c0_58], %123 {strides = array<i32>} : memref<64x64xf32, #tpu.memory_space<vmem>>, vector<8x64xf32>,
    %c40 = arith.constant 40 : index
    %c0_59 = arith.constant 0 : index
    %125 = vector.load %arg9[%c40, %c0_59] : memref<64x256xf32, #tpu.memory_space<vmem>>, vector<8x256xf32>
    %cst_60 = arith.constant dense<0.000000e+00> : vector<8x256xf32>
    %126 = tpu.matmul %123, %10, %cst_60 {dimension_numbers = #tpu.dot_dimension_numbers<[1], [0], [0], [1], [0, 0, 1, 1], [], []>} : vector<8x64xf32>, vector<64x256xf32>, vector<8x256xf32> -> vector<8x256xf32>
    %127 = arith.addf %125, %126 : vector<8x256xf32>
    %cst_61 = arith.constant 5.000000e-01 : f32
    %128 = vector.broadcast %cst_61 : f32 to vector<8x256xf32>
    %129 = arith.mulf %128, %127 : vector<8x256xf32>
    %130 = math.tanh %129 : vector<8x256xf32>
    %cst_62 = arith.constant 5.000000e-01 : f32
    %131 = vector.broadcast %cst_62 : f32 to vector<8x256xf32>
    %132 = arith.mulf %131, %130 : vector<8x256xf32>
    %cst_63 = arith.constant 5.000000e-01 : f32
    %133 = vector.broadcast %cst_63 : f32 to vector<8x256xf32>
    %134 = arith.addf %132, %133 : vector<8x256xf32>
    %135 = math.tanh %127 : vector<8x256xf32>
    %136 = vector.extract_strided_slice %134 {offsets = [0, 0], sizes = [8, 64], strides = [1, 1]} : vector<8x256xf32> to vector<8x64xf32>
    %137 = vector.extract_strided_slice %134 {offsets = [0, 64], sizes = [8, 64], strides = [1, 1]} : vector<8x256xf32> to vector<8x64xf32>
    %138 = vector.extract_strided_slice %135 {offsets = [0, 128], sizes = [8, 64], strides = [1, 1]} : vector<8x256xf32> to vector<8x64xf32>
    %139 = vector.extract_strided_slice %134 {offsets = [0, 192], sizes = [8, 64], strides = [1, 1]} : vector<8x256xf32> to vector<8x64xf32>
    %140 = arith.mulf %137, %121 : vector<8x64xf32>
    %141 = arith.mulf %136, %138 : vector<8x64xf32>
    %142 = arith.addf %140, %141 : vector<8x64xf32>
    %143 = math.tanh %142 : vector<8x64xf32>
    %144 = arith.mulf %139, %143 : vector<8x64xf32>
    %c40_64 = arith.constant 40 : index
    %c0_65 = arith.constant 0 : index
    %145 = vector.load %arg8[%c40_64, %c0_65] : memref<64x64xf32, #tpu.memory_space<vmem>>, vector<8x64xf32>
    tpu.vector_store %arg8[%c40_64, %c0_65], %144 {strides = array<i32>} : memref<64x64xf32, #tpu.memory_space<vmem>>, vector<8x64xf32>,
    %c48 = arith.constant 48 : index
    %c0_66 = arith.constant 0 : index
    %146 = vector.load %arg9[%c48, %c0_66] : memref<64x256xf32, #tpu.memory_space<vmem>>, vector<8x256xf32>
    %cst_67 = arith.constant dense<0.000000e+00> : vector<8x256xf32>
    %147 = tpu.matmul %144, %10, %cst_67 {dimension_numbers = #tpu.dot_dimension_numbers<[1], [0], [0], [1], [0, 0, 1, 1], [], []>} : vector<8x64xf32>, vector<64x256xf32>, vector<8x256xf32> -> vector<8x256xf32>
    %148 = arith.addf %146, %147 : vector<8x256xf32>
    %cst_68 = arith.constant 5.000000e-01 : f32
    %149 = vector.broadcast %cst_68 : f32 to vector<8x256xf32>
    %150 = arith.mulf %149, %148 : vector<8x256xf32>
    %151 = math.tanh %150 : vector<8x256xf32>
    %cst_69 = arith.constant 5.000000e-01 : f32
    %152 = vector.broadcast %cst_69 : f32 to vector<8x256xf32>
    %153 = arith.mulf %152, %151 : vector<8x256xf32>
    %cst_70 = arith.constant 5.000000e-01 : f32
    %154 = vector.broadcast %cst_70 : f32 to vector<8x256xf32>
    %155 = arith.addf %153, %154 : vector<8x256xf32>
    %156 = math.tanh %148 : vector<8x256xf32>
    %157 = vector.extract_strided_slice %155 {offsets = [0, 0], sizes = [8, 64], strides = [1, 1]} : vector<8x256xf32> to vector<8x64xf32>
    %158 = vector.extract_strided_slice %155 {offsets = [0, 64], sizes = [8, 64], strides = [1, 1]} : vector<8x256xf32> to vector<8x64xf32>
    %159 = vector.extract_strided_slice %156 {offsets = [0, 128], sizes = [8, 64], strides = [1, 1]} : vector<8x256xf32> to vector<8x64xf32>
    %160 = vector.extract_strided_slice %155 {offsets = [0, 192], sizes = [8, 64], strides = [1, 1]} : vector<8x256xf32> to vector<8x64xf32>
    %161 = arith.mulf %158, %142 : vector<8x64xf32>
    %162 = arith.mulf %157, %159 : vector<8x64xf32>
    %163 = arith.addf %161, %162 : vector<8x64xf32>
    %164 = math.tanh %163 : vector<8x64xf32>
    %165 = arith.mulf %160, %164 : vector<8x64xf32>
    %c48_71 = arith.constant 48 : index
    %c0_72 = arith.constant 0 : index
    %166 = vector.load %arg8[%c48_71, %c0_72] : memref<64x64xf32, #tpu.memory_space<vmem>>, vector<8x64xf32>
    tpu.vector_store %arg8[%c48_71, %c0_72], %165 {strides = array<i32>} : memref<64x64xf32, #tpu.memory_space<vmem>>, vector<8x64xf32>,
    %c56 = arith.constant 56 : index
    %c0_73 = arith.constant 0 : index
    %167 = vector.load %arg9[%c56, %c0_73] : memref<64x256xf32, #tpu.memory_space<vmem>>, vector<8x256xf32>
    %cst_74 = arith.constant dense<0.000000e+00> : vector<8x256xf32>
    %168 = tpu.matmul %165, %10, %cst_74 {dimension_numbers = #tpu.dot_dimension_numbers<[1], [0], [0], [1], [0, 0, 1, 1], [], []>} : vector<8x64xf32>, vector<64x256xf32>, vector<8x256xf32> -> vector<8x256xf32>
    %169 = arith.addf %167, %168 : vector<8x256xf32>
    %cst_75 = arith.constant 5.000000e-01 : f32
    %170 = vector.broadcast %cst_75 : f32 to vector<8x256xf32>
    %171 = arith.mulf %170, %169 : vector<8x256xf32>
    %172 = math.tanh %171 : vector<8x256xf32>
    %cst_76 = arith.constant 5.000000e-01 : f32
    %173 = vector.broadcast %cst_76 : f32 to vector<8x256xf32>
    %174 = arith.mulf %173, %172 : vector<8x256xf32>
    %cst_77 = arith.constant 5.000000e-01 : f32
    %175 = vector.broadcast %cst_77 : f32 to vector<8x256xf32>
    %176 = arith.addf %174, %175 : vector<8x256xf32>
    %177 = math.tanh %169 : vector<8x256xf32>
    %178 = vector.extract_strided_slice %176 {offsets = [0, 0], sizes = [8, 64], strides = [1, 1]} : vector<8x256xf32> to vector<8x64xf32>
    %179 = vector.extract_strided_slice %176 {offsets = [0, 64], sizes = [8, 64], strides = [1, 1]} : vector<8x256xf32> to vector<8x64xf32>
    %180 = vector.extract_strided_slice %177 {offsets = [0, 128], sizes = [8, 64], strides = [1, 1]} : vector<8x256xf32> to vector<8x64xf32>
    %181 = vector.extract_strided_slice %176 {offsets = [0, 192], sizes = [8, 64], strides = [1, 1]} : vector<8x256xf32> to vector<8x64xf32>
    %182 = arith.mulf %179, %163 : vector<8x64xf32>
    %183 = arith.mulf %178, %180 : vector<8x64xf32>
    %184 = arith.addf %182, %183 : vector<8x64xf32>
    %185 = math.tanh %184 : vector<8x64xf32>
    %186 = arith.mulf %181, %185 : vector<8x64xf32>
    %c56_78 = arith.constant 56 : index
    %c0_79 = arith.constant 0 : index
    %187 = vector.load %arg8[%c56_78, %c0_79] : memref<64x64xf32, #tpu.memory_space<vmem>>, vector<8x64xf32>
    tpu.vector_store %arg8[%c56_78, %c0_79], %186 {strides = array<i32>} : memref<64x64xf32, #tpu.memory_space<vmem>>, vector<8x64xf32>,
    %c1 = arith.constant 1 : index
    %c0_80 = arith.constant 0 : index
    %c0_81 = arith.constant 0 : index
    %188 = vector.load %arg4[%c1, %c0_80, %c0_81] : memref<2x64x256xf32, #tpu.memory_space<vmem>>, vector<1x64x256xf32>
    %189 = vector.shape_cast %188 : vector<1x64x256xf32> to vector<64x256xf32>
    %c1_82 = arith.constant 1 : index
    %c0_83 = arith.constant 0 : index
    %c0_84 = arith.constant 0 : index
    %190 = vector.load %arg5[%c1_82, %c0_83, %c0_84] : memref<2x64x256xf32, #tpu.memory_space<vmem>>, vector<1x64x256xf32>
    %191 = vector.shape_cast %190 : vector<1x64x256xf32> to vector<64x256xf32>
    %c1_85 = arith.constant 1 : index
    %c0_86 = arith.constant 0 : index
    %c0_87 = arith.constant 0 : index
    %192 = vector.load %arg6[%c1_85, %c0_86, %c0_87] : memref<2x1x256xf32, #tpu.memory_space<vmem>>, vector<1x1x256xf32>
    %193 = vector.shape_cast %192 : vector<1x1x256xf32> to vector<1x256xf32>
    %c0_88 = arith.constant 0 : index
    %c0_89 = arith.constant 0 : index
    %194 = vector.load %arg8[%c0_88, %c0_89] : memref<64x64xf32, #tpu.memory_space<vmem>>, vector<64x64xf32>
    %cst_90 = arith.constant dense<0.000000e+00> : vector<64x256xf32>
    %195 = tpu.matmul %194, %189, %cst_90 {dimension_numbers = #tpu.dot_dimension_numbers<[1], [0], [0], [1], [0, 0, 1, 1], [], []>} : vector<64x64xf32>, vector<64x256xf32>, vector<64x256xf32> -> vector<64x256xf32>
    %196 = vector.broadcast %193 : vector<1x256xf32> to vector<64x256xf32>
    %197 = arith.addf %195, %196 : vector<64x256xf32>
    %c0_91 = arith.constant 0 : index
    %c0_92 = arith.constant 0 : index
    %198 = vector.load %arg9[%c0_91, %c0_92] : memref<64x256xf32, #tpu.memory_space<vmem>>, vector<64x256xf32>
    tpu.vector_store %arg9[%c0_91, %c0_92], %197 {strides = array<i32>} : memref<64x256xf32, #tpu.memory_space<vmem>>, vector<64x256xf32>,
    %cst_93 = arith.constant 0.000000e+00 : f32
    %199 = vector.broadcast %cst_93 : f32 to vector<8x64xf32>
    %cst_94 = arith.constant 0.000000e+00 : f32
    %200 = vector.broadcast %cst_94 : f32 to vector<8x64xf32>
    %c0_95 = arith.constant 0 : index
    %c0_96 = arith.constant 0 : index
    %201 = vector.load %arg9[%c0_95, %c0_96] : memref<64x256xf32, #tpu.memory_space<vmem>>, vector<8x256xf32>
    %cst_97 = arith.constant dense<0.000000e+00> : vector<8x256xf32>
    %202 = tpu.matmul %199, %191, %cst_97 {dimension_numbers = #tpu.dot_dimension_numbers<[1], [0], [0], [1], [0, 0, 1, 1], [], []>} : vector<8x64xf32>, vector<64x256xf32>, vector<8x256xf32> -> vector<8x256xf32>
    %203 = arith.addf %201, %202 : vector<8x256xf32>
    %cst_98 = arith.constant 5.000000e-01 : f32
    %204 = vector.broadcast %cst_98 : f32 to vector<8x256xf32>
    %205 = arith.mulf %204, %203 : vector<8x256xf32>
    %206 = math.tanh %205 : vector<8x256xf32>
    %cst_99 = arith.constant 5.000000e-01 : f32
    %207 = vector.broadcast %cst_99 : f32 to vector<8x256xf32>
    %208 = arith.mulf %207, %206 : vector<8x256xf32>
    %cst_100 = arith.constant 5.000000e-01 : f32
    %209 = vector.broadcast %cst_100 : f32 to vector<8x256xf32>
    %210 = arith.addf %208, %209 : vector<8x256xf32>
    %211 = math.tanh %203 : vector<8x256xf32>
    %212 = vector.extract_strided_slice %210 {offsets = [0, 0], sizes = [8, 64], strides = [1, 1]} : vector<8x256xf32> to vector<8x64xf32>
    %213 = vector.extract_strided_slice %210 {offsets = [0, 64], sizes = [8, 64], strides = [1, 1]} : vector<8x256xf32> to vector<8x64xf32>
    %214 = vector.extract_strided_slice %211 {offsets = [0, 128], sizes = [8, 64], strides = [1, 1]} : vector<8x256xf32> to vector<8x64xf32>
    %215 = vector.extract_strided_slice %210 {offsets = [0, 192], sizes = [8, 64], strides = [1, 1]} : vector<8x256xf32> to vector<8x64xf32>
    %216 = arith.mulf %213, %200 : vector<8x64xf32>
    %217 = arith.mulf %212, %214 : vector<8x64xf32>
    %218 = arith.addf %216, %217 : vector<8x64xf32>
    %219 = math.tanh %218 : vector<8x64xf32>
    %220 = arith.mulf %215, %219 : vector<8x64xf32>
    %c0_101 = arith.constant 0 : index
    %c0_102 = arith.constant 0 : index
    %c0_103 = arith.constant 0 : index
    %221 = vector.load %arg7[%c0_101, %c0_102, %c0_103] : memref<8x8x64xf32, #tpu.memory_space<vmem>>, vector<1x8x64xf32>
    %222 = vector.shape_cast %221 : vector<1x8x64xf32> to vector<8x64xf32>
    %223 = vector.shape_cast %220 : vector<8x64xf32> to vector<1x8x64xf32>
    tpu.vector_store %arg7[%c0_101, %c0_102, %c0_103], %223 {strides = array<i32>} : memref<8x8x64xf32, #tpu.memory_space<vmem>>, vector<1x8x64xf32>,
    %c8_104 = arith.constant 8 : index
    %c0_105 = arith.constant 0 : index
    %224 = vector.load %arg9[%c8_104, %c0_105] : memref<64x256xf32, #tpu.memory_space<vmem>>, vector<8x256xf32>
    %cst_106 = arith.constant dense<0.000000e+00> : vector<8x256xf32>
    %225 = tpu.matmul %220, %191, %cst_106 {dimension_numbers = #tpu.dot_dimension_numbers<[1], [0], [0], [1], [0, 0, 1, 1], [], []>} : vector<8x64xf32>, vector<64x256xf32>, vector<8x256xf32> -> vector<8x256xf32>
    %226 = arith.addf %224, %225 : vector<8x256xf32>
    %cst_107 = arith.constant 5.000000e-01 : f32
    %227 = vector.broadcast %cst_107 : f32 to vector<8x256xf32>
    %228 = arith.mulf %227, %226 : vector<8x256xf32>
    %229 = math.tanh %228 : vector<8x256xf32>
    %cst_108 = arith.constant 5.000000e-01 : f32
    %230 = vector.broadcast %cst_108 : f32 to vector<8x256xf32>
    %231 = arith.mulf %230, %229 : vector<8x256xf32>
    %cst_109 = arith.constant 5.000000e-01 : f32
    %232 = vector.broadcast %cst_109 : f32 to vector<8x256xf32>
    %233 = arith.addf %231, %232 : vector<8x256xf32>
    %234 = math.tanh %226 : vector<8x256xf32>
    %235 = vector.extract_strided_slice %233 {offsets = [0, 0], sizes = [8, 64], strides = [1, 1]} : vector<8x256xf32> to vector<8x64xf32>
    %236 = vector.extract_strided_slice %233 {offsets = [0, 64], sizes = [8, 64], strides = [1, 1]} : vector<8x256xf32> to vector<8x64xf32>
    %237 = vector.extract_strided_slice %234 {offsets = [0, 128], sizes = [8, 64], strides = [1, 1]} : vector<8x256xf32> to vector<8x64xf32>
    %238 = vector.extract_strided_slice %233 {offsets = [0, 192], sizes = [8, 64], strides = [1, 1]} : vector<8x256xf32> to vector<8x64xf32>
    %239 = arith.mulf %236, %218 : vector<8x64xf32>
    %240 = arith.mulf %235, %237 : vector<8x64xf32>
    %241 = arith.addf %239, %240 : vector<8x64xf32>
    %242 = math.tanh %241 : vector<8x64xf32>
    %243 = arith.mulf %238, %242 : vector<8x64xf32>
    %c1_110 = arith.constant 1 : index
    %c0_111 = arith.constant 0 : index
    %c0_112 = arith.constant 0 : index
    %244 = vector.load %arg7[%c1_110, %c0_111, %c0_112] : memref<8x8x64xf32, #tpu.memory_space<vmem>>, vector<1x8x64xf32>
    %245 = vector.shape_cast %244 : vector<1x8x64xf32> to vector<8x64xf32>
    %246 = vector.shape_cast %243 : vector<8x64xf32> to vector<1x8x64xf32>
    tpu.vector_store %arg7[%c1_110, %c0_111, %c0_112], %246 {strides = array<i32>} : memref<8x8x64xf32, #tpu.memory_space<vmem>>, vector<1x8x64xf32>,
    %c16_113 = arith.constant 16 : index
    %c0_114 = arith.constant 0 : index
    %247 = vector.load %arg9[%c16_113, %c0_114] : memref<64x256xf32, #tpu.memory_space<vmem>>, vector<8x256xf32>
    %cst_115 = arith.constant dense<0.000000e+00> : vector<8x256xf32>
    %248 = tpu.matmul %243, %191, %cst_115 {dimension_numbers = #tpu.dot_dimension_numbers<[1], [0], [0], [1], [0, 0, 1, 1], [], []>} : vector<8x64xf32>, vector<64x256xf32>, vector<8x256xf32> -> vector<8x256xf32>
    %249 = arith.addf %247, %248 : vector<8x256xf32>
    %cst_116 = arith.constant 5.000000e-01 : f32
    %250 = vector.broadcast %cst_116 : f32 to vector<8x256xf32>
    %251 = arith.mulf %250, %249 : vector<8x256xf32>
    %252 = math.tanh %251 : vector<8x256xf32>
    %cst_117 = arith.constant 5.000000e-01 : f32
    %253 = vector.broadcast %cst_117 : f32 to vector<8x256xf32>
    %254 = arith.mulf %253, %252 : vector<8x256xf32>
    %cst_118 = arith.constant 5.000000e-01 : f32
    %255 = vector.broadcast %cst_118 : f32 to vector<8x256xf32>
    %256 = arith.addf %254, %255 : vector<8x256xf32>
    %257 = math.tanh %249 : vector<8x256xf32>
    %258 = vector.extract_strided_slice %256 {offsets = [0, 0], sizes = [8, 64], strides = [1, 1]} : vector<8x256xf32> to vector<8x64xf32>
    %259 = vector.extract_strided_slice %256 {offsets = [0, 64], sizes = [8, 64], strides = [1, 1]} : vector<8x256xf32> to vector<8x64xf32>
    %260 = vector.extract_strided_slice %257 {offsets = [0, 128], sizes = [8, 64], strides = [1, 1]} : vector<8x256xf32> to vector<8x64xf32>
    %261 = vector.extract_strided_slice %256 {offsets = [0, 192], sizes = [8, 64], strides = [1, 1]} : vector<8x256xf32> to vector<8x64xf32>
    %262 = arith.mulf %259, %241 : vector<8x64xf32>
    %263 = arith.mulf %258, %260 : vector<8x64xf32>
    %264 = arith.addf %262, %263 : vector<8x64xf32>
    %265 = math.tanh %264 : vector<8x64xf32>
    %266 = arith.mulf %261, %265 : vector<8x64xf32>
    %c2 = arith.constant 2 : index
    %c0_119 = arith.constant 0 : index
    %c0_120 = arith.constant 0 : index
    %267 = vector.load %arg7[%c2, %c0_119, %c0_120] : memref<8x8x64xf32, #tpu.memory_space<vmem>>, vector<1x8x64xf32>
    %268 = vector.shape_cast %267 : vector<1x8x64xf32> to vector<8x64xf32>
    %269 = vector.shape_cast %266 : vector<8x64xf32> to vector<1x8x64xf32>
    tpu.vector_store %arg7[%c2, %c0_119, %c0_120], %269 {strides = array<i32>} : memref<8x8x64xf32, #tpu.memory_space<vmem>>, vector<1x8x64xf32>,
    %c24_121 = arith.constant 24 : index
    %c0_122 = arith.constant 0 : index
    %270 = vector.load %arg9[%c24_121, %c0_122] : memref<64x256xf32, #tpu.memory_space<vmem>>, vector<8x256xf32>
    %cst_123 = arith.constant dense<0.000000e+00> : vector<8x256xf32>
    %271 = tpu.matmul %266, %191, %cst_123 {dimension_numbers = #tpu.dot_dimension_numbers<[1], [0], [0], [1], [0, 0, 1, 1], [], []>} : vector<8x64xf32>, vector<64x256xf32>, vector<8x256xf32> -> vector<8x256xf32>
    %272 = arith.addf %270, %271 : vector<8x256xf32>
    %cst_124 = arith.constant 5.000000e-01 : f32
    %273 = vector.broadcast %cst_124 : f32 to vector<8x256xf32>
    %274 = arith.mulf %273, %272 : vector<8x256xf32>
    %275 = math.tanh %274 : vector<8x256xf32>
    %cst_125 = arith.constant 5.000000e-01 : f32
    %276 = vector.broadcast %cst_125 : f32 to vector<8x256xf32>
    %277 = arith.mulf %276, %275 : vector<8x256xf32>
    %cst_126 = arith.constant 5.000000e-01 : f32
    %278 = vector.broadcast %cst_126 : f32 to vector<8x256xf32>
    %279 = arith.addf %277, %278 : vector<8x256xf32>
    %280 = math.tanh %272 : vector<8x256xf32>
    %281 = vector.extract_strided_slice %279 {offsets = [0, 0], sizes = [8, 64], strides = [1, 1]} : vector<8x256xf32> to vector<8x64xf32>
    %282 = vector.extract_strided_slice %279 {offsets = [0, 64], sizes = [8, 64], strides = [1, 1]} : vector<8x256xf32> to vector<8x64xf32>
    %283 = vector.extract_strided_slice %280 {offsets = [0, 128], sizes = [8, 64], strides = [1, 1]} : vector<8x256xf32> to vector<8x64xf32>
    %284 = vector.extract_strided_slice %279 {offsets = [0, 192], sizes = [8, 64], strides = [1, 1]} : vector<8x256xf32> to vector<8x64xf32>
    %285 = arith.mulf %282, %264 : vector<8x64xf32>
    %286 = arith.mulf %281, %283 : vector<8x64xf32>
    %287 = arith.addf %285, %286 : vector<8x64xf32>
    %288 = math.tanh %287 : vector<8x64xf32>
    %289 = arith.mulf %284, %288 : vector<8x64xf32>
    %c3 = arith.constant 3 : index
    %c0_127 = arith.constant 0 : index
    %c0_128 = arith.constant 0 : index
    %290 = vector.load %arg7[%c3, %c0_127, %c0_128] : memref<8x8x64xf32, #tpu.memory_space<vmem>>, vector<1x8x64xf32>
    %291 = vector.shape_cast %290 : vector<1x8x64xf32> to vector<8x64xf32>
    %292 = vector.shape_cast %289 : vector<8x64xf32> to vector<1x8x64xf32>
    tpu.vector_store %arg7[%c3, %c0_127, %c0_128], %292 {strides = array<i32>} : memref<8x8x64xf32, #tpu.memory_space<vmem>>, vector<1x8x64xf32>,
    %c32_129 = arith.constant 32 : index
    %c0_130 = arith.constant 0 : index
    %293 = vector.load %arg9[%c32_129, %c0_130] : memref<64x256xf32, #tpu.memory_space<vmem>>, vector<8x256xf32>
    %cst_131 = arith.constant dense<0.000000e+00> : vector<8x256xf32>
    %294 = tpu.matmul %289, %191, %cst_131 {dimension_numbers = #tpu.dot_dimension_numbers<[1], [0], [0], [1], [0, 0, 1, 1], [], []>} : vector<8x64xf32>, vector<64x256xf32>, vector<8x256xf32> -> vector<8x256xf32>
    %295 = arith.addf %293, %294 : vector<8x256xf32>
    %cst_132 = arith.constant 5.000000e-01 : f32
    %296 = vector.broadcast %cst_132 : f32 to vector<8x256xf32>
    %297 = arith.mulf %296, %295 : vector<8x256xf32>
    %298 = math.tanh %297 : vector<8x256xf32>
    %cst_133 = arith.constant 5.000000e-01 : f32
    %299 = vector.broadcast %cst_133 : f32 to vector<8x256xf32>
    %300 = arith.mulf %299, %298 : vector<8x256xf32>
    %cst_134 = arith.constant 5.000000e-01 : f32
    %301 = vector.broadcast %cst_134 : f32 to vector<8x256xf32>
    %302 = arith.addf %300, %301 : vector<8x256xf32>
    %303 = math.tanh %295 : vector<8x256xf32>
    %304 = vector.extract_strided_slice %302 {offsets = [0, 0], sizes = [8, 64], strides = [1, 1]} : vector<8x256xf32> to vector<8x64xf32>
    %305 = vector.extract_strided_slice %302 {offsets = [0, 64], sizes = [8, 64], strides = [1, 1]} : vector<8x256xf32> to vector<8x64xf32>
    %306 = vector.extract_strided_slice %303 {offsets = [0, 128], sizes = [8, 64], strides = [1, 1]} : vector<8x256xf32> to vector<8x64xf32>
    %307 = vector.extract_strided_slice %302 {offsets = [0, 192], sizes = [8, 64], strides = [1, 1]} : vector<8x256xf32> to vector<8x64xf32>
    %308 = arith.mulf %305, %287 : vector<8x64xf32>
    %309 = arith.mulf %304, %306 : vector<8x64xf32>
    %310 = arith.addf %308, %309 : vector<8x64xf32>
    %311 = math.tanh %310 : vector<8x64xf32>
    %312 = arith.mulf %307, %311 : vector<8x64xf32>
    %c4 = arith.constant 4 : index
    %c0_135 = arith.constant 0 : index
    %c0_136 = arith.constant 0 : index
    %313 = vector.load %arg7[%c4, %c0_135, %c0_136] : memref<8x8x64xf32, #tpu.memory_space<vmem>>, vector<1x8x64xf32>
    %314 = vector.shape_cast %313 : vector<1x8x64xf32> to vector<8x64xf32>
    %315 = vector.shape_cast %312 : vector<8x64xf32> to vector<1x8x64xf32>
    tpu.vector_store %arg7[%c4, %c0_135, %c0_136], %315 {strides = array<i32>} : memref<8x8x64xf32, #tpu.memory_space<vmem>>, vector<1x8x64xf32>,
    %c40_137 = arith.constant 40 : index
    %c0_138 = arith.constant 0 : index
    %316 = vector.load %arg9[%c40_137, %c0_138] : memref<64x256xf32, #tpu.memory_space<vmem>>, vector<8x256xf32>
    %cst_139 = arith.constant dense<0.000000e+00> : vector<8x256xf32>
    %317 = tpu.matmul %312, %191, %cst_139 {dimension_numbers = #tpu.dot_dimension_numbers<[1], [0], [0], [1], [0, 0, 1, 1], [], []>} : vector<8x64xf32>, vector<64x256xf32>, vector<8x256xf32> -> vector<8x256xf32>
    %318 = arith.addf %316, %317 : vector<8x256xf32>
    %cst_140 = arith.constant 5.000000e-01 : f32
    %319 = vector.broadcast %cst_140 : f32 to vector<8x256xf32>
    %320 = arith.mulf %319, %318 : vector<8x256xf32>
    %321 = math.tanh %320 : vector<8x256xf32>
    %cst_141 = arith.constant 5.000000e-01 : f32
    %322 = vector.broadcast %cst_141 : f32 to vector<8x256xf32>
    %323 = arith.mulf %322, %321 : vector<8x256xf32>
    %cst_142 = arith.constant 5.000000e-01 : f32
    %324 = vector.broadcast %cst_142 : f32 to vector<8x256xf32>
    %325 = arith.addf %323, %324 : vector<8x256xf32>
    %326 = math.tanh %318 : vector<8x256xf32>
    %327 = vector.extract_strided_slice %325 {offsets = [0, 0], sizes = [8, 64], strides = [1, 1]} : vector<8x256xf32> to vector<8x64xf32>
    %328 = vector.extract_strided_slice %325 {offsets = [0, 64], sizes = [8, 64], strides = [1, 1]} : vector<8x256xf32> to vector<8x64xf32>
    %329 = vector.extract_strided_slice %326 {offsets = [0, 128], sizes = [8, 64], strides = [1, 1]} : vector<8x256xf32> to vector<8x64xf32>
    %330 = vector.extract_strided_slice %325 {offsets = [0, 192], sizes = [8, 64], strides = [1, 1]} : vector<8x256xf32> to vector<8x64xf32>
    %331 = arith.mulf %328, %310 : vector<8x64xf32>
    %332 = arith.mulf %327, %329 : vector<8x64xf32>
    %333 = arith.addf %331, %332 : vector<8x64xf32>
    %334 = math.tanh %333 : vector<8x64xf32>
    %335 = arith.mulf %330, %334 : vector<8x64xf32>
    %c5 = arith.constant 5 : index
    %c0_143 = arith.constant 0 : index
    %c0_144 = arith.constant 0 : index
    %336 = vector.load %arg7[%c5, %c0_143, %c0_144] : memref<8x8x64xf32, #tpu.memory_space<vmem>>, vector<1x8x64xf32>
    %337 = vector.shape_cast %336 : vector<1x8x64xf32> to vector<8x64xf32>
    %338 = vector.shape_cast %335 : vector<8x64xf32> to vector<1x8x64xf32>
    tpu.vector_store %arg7[%c5, %c0_143, %c0_144], %338 {strides = array<i32>} : memref<8x8x64xf32, #tpu.memory_space<vmem>>, vector<1x8x64xf32>,
    %c48_145 = arith.constant 48 : index
    %c0_146 = arith.constant 0 : index
    %339 = vector.load %arg9[%c48_145, %c0_146] : memref<64x256xf32, #tpu.memory_space<vmem>>, vector<8x256xf32>
    %cst_147 = arith.constant dense<0.000000e+00> : vector<8x256xf32>
    %340 = tpu.matmul %335, %191, %cst_147 {dimension_numbers = #tpu.dot_dimension_numbers<[1], [0], [0], [1], [0, 0, 1, 1], [], []>} : vector<8x64xf32>, vector<64x256xf32>, vector<8x256xf32> -> vector<8x256xf32>
    %341 = arith.addf %339, %340 : vector<8x256xf32>
    %cst_148 = arith.constant 5.000000e-01 : f32
    %342 = vector.broadcast %cst_148 : f32 to vector<8x256xf32>
    %343 = arith.mulf %342, %341 : vector<8x256xf32>
    %344 = math.tanh %343 : vector<8x256xf32>
    %cst_149 = arith.constant 5.000000e-01 : f32
    %345 = vector.broadcast %cst_149 : f32 to vector<8x256xf32>
    %346 = arith.mulf %345, %344 : vector<8x256xf32>
    %cst_150 = arith.constant 5.000000e-01 : f32
    %347 = vector.broadcast %cst_150 : f32 to vector<8x256xf32>
    %348 = arith.addf %346, %347 : vector<8x256xf32>
    %349 = math.tanh %341 : vector<8x256xf32>
    %350 = vector.extract_strided_slice %348 {offsets = [0, 0], sizes = [8, 64], strides = [1, 1]} : vector<8x256xf32> to vector<8x64xf32>
    %351 = vector.extract_strided_slice %348 {offsets = [0, 64], sizes = [8, 64], strides = [1, 1]} : vector<8x256xf32> to vector<8x64xf32>
    %352 = vector.extract_strided_slice %349 {offsets = [0, 128], sizes = [8, 64], strides = [1, 1]} : vector<8x256xf32> to vector<8x64xf32>
    %353 = vector.extract_strided_slice %348 {offsets = [0, 192], sizes = [8, 64], strides = [1, 1]} : vector<8x256xf32> to vector<8x64xf32>
    %354 = arith.mulf %351, %333 : vector<8x64xf32>
    %355 = arith.mulf %350, %352 : vector<8x64xf32>
    %356 = arith.addf %354, %355 : vector<8x64xf32>
    %357 = math.tanh %356 : vector<8x64xf32>
    %358 = arith.mulf %353, %357 : vector<8x64xf32>
    %c6 = arith.constant 6 : index
    %c0_151 = arith.constant 0 : index
    %c0_152 = arith.constant 0 : index
    %359 = vector.load %arg7[%c6, %c0_151, %c0_152] : memref<8x8x64xf32, #tpu.memory_space<vmem>>, vector<1x8x64xf32>
    %360 = vector.shape_cast %359 : vector<1x8x64xf32> to vector<8x64xf32>
    %361 = vector.shape_cast %358 : vector<8x64xf32> to vector<1x8x64xf32>
    tpu.vector_store %arg7[%c6, %c0_151, %c0_152], %361 {strides = array<i32>} : memref<8x8x64xf32, #tpu.memory_space<vmem>>, vector<1x8x64xf32>,
    %c56_153 = arith.constant 56 : index
    %c0_154 = arith.constant 0 : index
    %362 = vector.load %arg9[%c56_153, %c0_154] : memref<64x256xf32, #tpu.memory_space<vmem>>, vector<8x256xf32>
    %cst_155 = arith.constant dense<0.000000e+00> : vector<8x256xf32>
    %363 = tpu.matmul %358, %191, %cst_155 {dimension_numbers = #tpu.dot_dimension_numbers<[1], [0], [0], [1], [0, 0, 1, 1], [], []>} : vector<8x64xf32>, vector<64x256xf32>, vector<8x256xf32> -> vector<8x256xf32>
    %364 = arith.addf %362, %363 : vector<8x256xf32>
    %cst_156 = arith.constant 5.000000e-01 : f32
    %365 = vector.broadcast %cst_156 : f32 to vector<8x256xf32>
    %366 = arith.mulf %365, %364 : vector<8x256xf32>
    %367 = math.tanh %366 : vector<8x256xf32>
    %cst_157 = arith.constant 5.000000e-01 : f32
    %368 = vector.broadcast %cst_157 : f32 to vector<8x256xf32>
    %369 = arith.mulf %368, %367 : vector<8x256xf32>
    %cst_158 = arith.constant 5.000000e-01 : f32
    %370 = vector.broadcast %cst_158 : f32 to vector<8x256xf32>
    %371 = arith.addf %369, %370 : vector<8x256xf32>
    %372 = math.tanh %364 : vector<8x256xf32>
    %373 = vector.extract_strided_slice %371 {offsets = [0, 0], sizes = [8, 64], strides = [1, 1]} : vector<8x256xf32> to vector<8x64xf32>
    %374 = vector.extract_strided_slice %371 {offsets = [0, 64], sizes = [8, 64], strides = [1, 1]} : vector<8x256xf32> to vector<8x64xf32>
    %375 = vector.extract_strided_slice %372 {offsets = [0, 128], sizes = [8, 64], strides = [1, 1]} : vector<8x256xf32> to vector<8x64xf32>
    %376 = vector.extract_strided_slice %371 {offsets = [0, 192], sizes = [8, 64], strides = [1, 1]} : vector<8x256xf32> to vector<8x64xf32>
    %377 = arith.mulf %374, %356 : vector<8x64xf32>
    %378 = arith.mulf %373, %375 : vector<8x64xf32>
    %379 = arith.addf %377, %378 : vector<8x64xf32>
    %380 = math.tanh %379 : vector<8x64xf32>
    %381 = arith.mulf %376, %380 : vector<8x64xf32>
    %c7 = arith.constant 7 : index
    %c0_159 = arith.constant 0 : index
    %c0_160 = arith.constant 0 : index
    %382 = vector.load %arg7[%c7, %c0_159, %c0_160] : memref<8x8x64xf32, #tpu.memory_space<vmem>>, vector<1x8x64xf32>
    %383 = vector.shape_cast %382 : vector<1x8x64xf32> to vector<8x64xf32>
    %384 = vector.shape_cast %381 : vector<8x64xf32> to vector<1x8x64xf32>
    tpu.vector_store %arg7[%c7, %c0_159, %c0_160], %384 {strides = array<i32>} : memref<8x8x64xf32, #tpu.memory_space<vmem>>, vector<1x8x64xf32>,
    return
  }
  func.func @transform_0(%arg0: i32) -> (i32, i32) {
    %c0_i32 = arith.constant 0 : i32
    %c0_i32_0 = arith.constant 0 : i32
    %c0_i32_1 = arith.constant 0 : i32
    return %c0_i32, %c0_i32_0 : i32, i32
  }
  func.func @transform_1(%arg0: i32) -> (i32, i32) {
    %c0_i32 = arith.constant 0 : i32
    %c0_i32_0 = arith.constant 0 : i32
    %c0_i32_1 = arith.constant 0 : i32
    return %c0_i32, %c0_i32_0 : i32, i32
  }
  func.func @transform_2(%arg0: i32) -> (i32, i32) {
    %c0_i32 = arith.constant 0 : i32
    %c0_i32_0 = arith.constant 0 : i32
    %c0_i32_1 = arith.constant 0 : i32
    return %c0_i32, %c0_i32_0 : i32, i32
  }
  func.func @transform_3(%arg0: i32) -> (i32, i32, i32) {
    %c0_i32 = arith.constant 0 : i32
    %c0_i32_0 = arith.constant 0 : i32
    %c0_i32_1 = arith.constant 0 : i32
    %c0_i32_2 = arith.constant 0 : i32
    return %c0_i32, %c0_i32_0, %c0_i32_1 : i32, i32, i32
  }
  func.func @transform_4(%arg0: i32) -> (i32, i32, i32) {
    %c0_i32 = arith.constant 0 : i32
    %c0_i32_0 = arith.constant 0 : i32
    %c0_i32_1 = arith.constant 0 : i32
    %c0_i32_2 = arith.constant 0 : i32
    return %c0_i32, %c0_i32_0, %c0_i32_1 : i32, i32, i32
  }
  func.func @transform_5(%arg0: i32) -> (i32, i32, i32) {
    %c0_i32 = arith.constant 0 : i32
    %c0_i32_0 = arith.constant 0 : i32
    %c0_i32_1 = arith.constant 0 : i32
    %c0_i32_2 = arith.constant 0 : i32
    return %c0_i32, %c0_i32_0, %c0_i32_1 : i32, i32, i32
  }
  func.func @transform_6(%arg0: i32) -> (i32, i32, i32) {
    %c0_i32 = arith.constant 0 : i32
    %c0_i32_0 = arith.constant 0 : i32
    %c0_i32_1 = arith.constant 0 : i32
    %c0_i32_2 = arith.constant 0 : i32
    return %c0_i32, %c0_i32_0, %c0_i32_1 : i32, i32, i32
  }
}

</mosaic_0001>

<llo_original>
// kernel: forward.1
$region0: #{forward.1}
  #allocation0 [shape = 'u32[]', space=smem, size = 0x4, offset = 0x4, fixed_abs, tag = 'smem constant byte address 0x4 - core index']
  #allocation1 [shape = 'u32[144,128]{1,0:T(1,128)}', space=vmem, size = 0x12000, scoped, tag = 'internal scratch']
  #allocation2 [shape = 'f32[64,64]{1,0:T(8,128)}', space=vmem, size = 0x8000, scoped, tag = 'scratch operand']
  #allocation3 [shape = 'f32[64,256]{1,0:T(8,128)}', space=vmem, size = 0x10000, scoped, tag = 'scratch operand']
  %s0 = inlined_call_operand.vmem [shape: f32[64,32], index: 0, kind: input, shape index: {}]
  %s1 = inlined_call_operand.vmem [shape: f32[32,64], index: 1, kind: input, shape index: {}]
  %s2 = inlined_call_operand.vmem [shape: f32[1,64], index: 2, kind: input, shape index: {}]
  %s3 = inlined_call_operand.hbm [shape: f32[2,64,256], index: 3, kind: input, shape index: {}]
  %s4 = inlined_call_operand.hbm [shape: f32[2,64,256], index: 4, kind: input, shape index: {}]
  %s5 = inlined_call_operand.vmem [shape: f32[2,1,256], index: 5, kind: input, shape index: {}]
  %s6 = inlined_call_operand.vmem [shape: f32[8,8,64], index: 6, kind: output, shape index: {}]
  %s7 = sld [smem:[#allocation0]]
  $region42: #{forward.1} parent=0
    _
  %s9 = ssub.s32 1, %s7
  %s10 = scalar_select 0, %s9, %s7
  $region1: #{forward.1} parent=0
    #allocation4 [shape = 'u8[131072]{0}', space=vmem, size = 0x20000, scoped, tag = 'input window, operand 3, single buffered']
    #allocation5 [shape = 's32[1]{0}', space=sflag, size = 0x4, scoped, tag = 'scoped memory for forward.1']
    #allocation6 [shape = 'u8[131072]{0}', space=vmem, size = 0x20000, scoped, tag = 'input window, operand 4, single buffered']
    #allocation7 [shape = 's32[1]{0}', space=sflag, size = 0x4, scoped, tag = 'scoped memory for forward.1']
    %11 = vsyncpa [#allocation5], 0
    %12 = vsyncpa [#allocation7], 0
    // Predicated region
    $region2: #{forward.1} parent=1 // pred_check
      _
    $region3: #{forward.1} parent=1 // pred_check_branch
      %14 = sbr.rel (0) target = $region5
    $region4: #{forward.1} parent=1 // pred_region
      _
    $region5: #{forward.1} parent=1 // pred_fallthru
      _
    // Predicated region
    $region6: #{forward.1} parent=1 // pred_check
      _
    $region7: #{forward.1} parent=1 // pred_check_branch
      %16 = sbr.rel (0) target = $region9
    $region8: #{forward.1} parent=1 // pred_region
      _
    $region9: #{forward.1} parent=1 // pred_fallthru
      _
    // Predicated region
    $region10: #{forward.1} parent=1 // pred_check
      _
    $region11: #{forward.1} parent=1 // pred_check_branch
      %18 = sbr.rel (0) target = $region13
    $region12: #{forward.1} parent=1 // pred_region
      _
    $region13: #{forward.1} parent=1 // pred_fallthru
      _
    // Predicated region
    $region14: #{forward.1} parent=1 // pred_check
      _
    $region15: #{forward.1} parent=1 // pred_check_branch
      %20 = sbr.rel (0) target = $region17
    $region16: #{forward.1} parent=1 // pred_region
      %s22 = ssub.s32 4096, 4096
      %23 = vsyncadd [#allocation5], %s22
      %s24 = sshll.u32 [#allocation4], 4
      %s25 = int_to_ptr.vmem [resolvable:$true] %s24
      %30 = dma.hbm_to_vmem [thread:$0]  %s3, 4096, %s25, [#allocation5], 256, 256, 16
    $region17: #{forward.1} parent=1 // pred_fallthru
      _
    // Predicated region
    $region18: #{forward.1} parent=1 // pred_check
      _
    $region19: #{forward.1} parent=1 // pred_check_branch
      %32 = sbr.rel (0) target = $region21
    $region20: #{forward.1} parent=1 // pred_region
      %s34 = ssub.s32 4096, 4096
      %35 = vsyncadd [#allocation7], %s34
      %s36 = sshll.u32 [#allocation6], 4
      %s37 = int_to_ptr.vmem [resolvable:$true] %s36
      %42 = dma.hbm_to_vmem [thread:$0]  %s4, 4096, %s37, [#allocation7], 256, 256, 16
    $region21: #{forward.1} parent=1 // pred_fallthru
      _
    // Predicated region
    $region22: #{forward.1} parent=1 // pred_check
      _
    $region23: #{forward.1} parent=1 // pred_check_branch
      %44 = sbr.rel (0) target = $region25
    $region24: #{forward.1} parent=1 // pred_region
      _
    $region25: #{forward.1} parent=1 // pred_fallthru
      _
    // Predicated region
    $region26: #{forward.1} parent=1 // pred_check
      _
    $region27: #{forward.1} parent=1 // pred_check_branch
      %46 = sbr.rel (0) target = $region29
    $region28: #{forward.1} parent=1 // pred_region
      %47 = dma.done [#allocation5], 4096
    $region29: #{forward.1} parent=1 // pred_fallthru
      _
    // Predicated region
    $region30: #{forward.1} parent=1 // pred_check
      _
    $region31: #{forward.1} parent=1 // pred_check_branch
      %49 = sbr.rel (0) target = $region33
    $region32: #{forward.1} parent=1 // pred_region
      %50 = dma.done [#allocation7], 4096
    $region33: #{forward.1} parent=1 // pred_fallthru
      _
    %v51 = vld [vmem:[%s0] sm:$0xff]
    %v52 = vld [vmem:[%s0 + $0x8] sm:$0xff]
    %v53 = vld [vmem:[%s0 + $0x10] sm:$0xff]
    %v54 = vld [vmem:[%s0 + $0x18] sm:$0xff]
    %v55 = vld [vmem:[%s0 + $0x20] sm:$0xff]
    %v56 = vld [vmem:[%s0 + $0x28] sm:$0xff]
    %v57 = vld [vmem:[%s0 + $0x30] sm:$0xff]
    %v58 = vld [vmem:[%s0 + $0x38] sm:$0xff]
    %v59 = vld [vmem:[%s1] sm:$0xff]
    %v60 = vld [vmem:[%s1 + $0x8] sm:$0xff]
    %v61 = vld [vmem:[%s1 + $0x10] sm:$0xff]
    %v62 = vld [vmem:[%s1 + $0x18] sm:$0xff]
    %v63 = vld [vmem:[%s2] sm:$0x1]
    %v65 = vlaneseq
    %v66 = vshrl.u32 %v65, 7
    %v67 = vsub.s32 0, %v66
    %v68 = vrot.slane %v63, %v67
    %vm70 = vcmask 261120
    %v72 = vsel %vm70, %v51, 0
    %v75 = vsel %vm70, %v52, 0
    %v78 = vsel %vm70, %v53, 0
    %v81 = vsel %vm70, %v54, 0
    %v84 = vsel %vm70, %v55, 0
    %v87 = vsel %vm70, %v56, 0
    %v90 = vsel %vm70, %v57, 0
    %v93 = vsel %vm70, %v58, 0
    %95 = vmatprep.subr.mxu0 0.0
    %96 = vmatpush1.msra.mxu0 %v59
    %97 = vmatprep.subr.mxu0 0.0
    %98 = vmatpush1.msra.mxu0 %v60
    %99 = vmatprep.subr.mxu0 0.0
    %100 = vmatpush1.msra.mxu0 %v61
    %101 = vmatprep.subr.mxu0 0.0
    %102 = vmatpush1.msra.mxu0 %v62
    %103 = vmatprep.subr.mxu0 0.0
    %104 = vmatpush1.msra.mxu0 0.0
    %105 = vmatprep.subr.mxu0 0.0
    %106 = vmatpush1.msra.mxu0 0.0
    %107 = vmatprep.subr.mxu0 0.0
    %108 = vmatpush1.msra.mxu0 0.0
    %109 = vmatprep.subr.mxu0 0.0
    %110 = vmatpush1.msra.mxu0 0.0
    %111 = vmatprep.subr.mxu0 0.0
    %112 = vmatpush1.msra.mxu0 0.0
    %113 = vmatprep.subr.mxu0 0.0
    %114 = vmatpush1.msra.mxu0 0.0
    %115 = vmatprep.subr.mxu0 0.0
    %116 = vmatpush1.msra.mxu0 0.0
    %117 = vmatprep.subr.mxu0 0.0
    %118 = vmatpush1.msra.mxu0 0.0
    %119 = vmatprep.subr.mxu0 0.0
    %120 = vmatpush1.msra.mxu0 0.0
    %121 = vmatprep.subr.mxu0 0.0
    %122 = vmatpush1.msra.mxu0 0.0
    %123 = vmatprep.subr.mxu0 0.0
    %124 = vmatpush1.msra.mxu0 0.0
    %125 = vmatprep.subr.mxu0 0.0
    %126 = vmatpush1.msra.mxu0 0.0
    %127 = vmatprep.subr.mxu0 0.0
    %128 = vmatpush1.msra.mxu0 0.0
    %129 = vmatprep.subr.mxu0 0.0
    %130 = vmatpush1.msra.mxu0 0.0
    %131 = vmatprep.subr.mxu0 0.0
    %132 = vmatpush1.msra.mxu0 0.0
    %133 = vmatprep.subr.mxu0 0.0
    %134 = vmatpush1.msra.mxu0 0.0
    %135 = vmatprep.subr.mxu0 0.0
    %136 = vmatpush1.msra.mxu0 0.0
    %137 = vmatprep.subr.mxu0 0.0
    %138 = vmatpush1.msra.mxu0 0.0
    %139 = vmatprep.subr.mxu0 0.0
    %140 = vmatpush1.msra.mxu0 0.0
    %141 = vmatprep.subr.mxu0 0.0
    %142 = vmatpush1.msra.mxu0 0.0
    %143 = vmatprep.subr.mxu0 0.0
    %144 = vmatpush1.msra.mxu0 0.0
    %145 = vmatprep.subr.mxu0 0.0
    %146 = vmatpush1.msra.mxu0 0.0
    %147 = vmatprep.subr.mxu0 0.0
    %148 = vmatpush1.msra.mxu0 0.0
    %149 = vmatprep.subr.mxu0 0.0
    %150 = vmatpush1.msra.mxu0 0.0
    %151 = vmatprep.subr.mxu0 0.0
    %152 = vmatpush1.msra.mxu0 0.0
    %153 = vmatprep.subr.mxu0 0.0
    %154 = vmatpush1.msra.mxu0 0.0
    %155 = vmatprep.subr.mxu0 0.0
    %156 = vmatpush1.msra.mxu0 0.0
    %157 = vmatprep.subr.mxu0 0.0
    %158 = vmatpush1.msra.mxu0 0.0
    %159 = vmatprep.mubr.f32.mxu0 0.0
    %160 = vmatmul.mubr.f32.gmra.mrb[0].mxu0 %v72
    %v161 = vpop.f32.mrb[0].mxu0
    %v162 = vadd.f32 %v68, %v161
    %v163 = vpop.f32.mrb[0].mxu0
    %164 = vmatprep.mubr.f32.mxu0 0.0
    %165 = vmatmul.mubr.f32.gmra.mrb[0].mxu0 %v75
    %v166 = vpop.f32.mrb[0].mxu0
    %v167 = vadd.f32 %v68, %v166
    %v168 = vpop.f32.mrb[0].mxu0
    %169 = vmatprep.mubr.f32.mxu0 0.0
    %170 = vmatmul.mubr.f32.gmra.mrb[0].mxu0 %v78
    %v171 = vpop.f32.mrb[0].mxu0
    %v172 = vadd.f32 %v68, %v171
    %v173 = vpop.f32.mrb[0].mxu0
    %174 = vmatprep.mubr.f32.mxu0 0.0
    %175 = vmatmul.mubr.f32.gmra.mrb[0].mxu0 %v81
    %v176 = vpop.f32.mrb[0].mxu0
    %v177 = vadd.f32 %v68, %v176
    %v178 = vpop.f32.mrb[0].mxu0
    %179 = vmatprep.mubr.f32.mxu0 0.0
    %180 = vmatmul.mubr.f32.gmra.mrb[0].mxu0 %v84
    %v181 = vpop.f32.mrb[0].mxu0
    %v182 = vadd.f32 %v68, %v181
    %v183 = vpop.f32.mrb[0].mxu0
    %184 = vmatprep.mubr.f32.mxu0 0.0
    %185 = vmatmul.mubr.f32.gmra.mrb[0].mxu0 %v87
    %v186 = vpop.f32.mrb[0].mxu0
    %v187 = vadd.f32 %v68, %v186
    %v188 = vpop.f32.mrb[0].mxu0
    %189 = vmatprep.mubr.f32.mxu0 0.0
    %190 = vmatmul.mubr.f32.gmra.mrb[0].mxu0 %v90
    %v191 = vpop.f32.mrb[0].mxu0
    %v192 = vadd.f32 %v68, %v191
    %v193 = vpop.f32.mrb[0].mxu0
    %194 = vmatprep.mubr.f32.mxu0 0.0
    %195 = vmatmul.mubr.f32.gmra.mrb[0].mxu0 %v93
    %v196 = vpop.f32.mrb[0].mxu0
    %v197 = vadd.f32 %v68, %v196
    %v198 = vpop.f32.mrb[0].mxu0
    %199 = vdwg.mxu0
    %vm200 = vcmask 523264
    %201 = vst.msk [vmem:[#allocation2] sm:$0xff] %vm200, %v162
    %202 = vst.msk [vmem:[#allocation2 + $0x8] sm:$0xff] %vm200, %v167
    %203 = vst.msk [vmem:[#allocation2 + $0x10] sm:$0xff] %vm200, %v172
    %204 = vst.msk [vmem:[#allocation2 + $0x18] sm:$0xff] %vm200, %v177
    %205 = vst.msk [vmem:[#allocation2 + $0x20] sm:$0xff] %vm200, %v182
    %206 = vst.msk [vmem:[#allocation2 + $0x28] sm:$0xff] %vm200, %v187
    %207 = vst.msk [vmem:[#allocation2 + $0x30] sm:$0xff] %vm200, %v192
    %208 = vst.msk [vmem:[#allocation2 + $0x38] sm:$0xff] %vm200, %v197
    %v209 = vld [vmem:[#allocation4] sm:$0xff]
    %v210 = vld [vmem:[#allocation4 + $0x8] sm:$0xff]
    %v211 = vld [vmem:[#allocation4 + $0x10] sm:$0xff]
    %v212 = vld [vmem:[#allocation4 + $0x18] sm:$0xff]
    %v213 = vld [vmem:[#allocation4 + $0x20] sm:$0xff]
    %v214 = vld [vmem:[#allocation4 + $0x28] sm:$0xff]
    %v215 = vld [vmem:[#allocation4 + $0x30] sm:$0xff]
    %v216 = vld [vmem:[#allocation4 + $0x38] sm:$0xff]
    %v217 = vld [vmem:[#allocation4 + $0x40] sm:$0xff]
    %v218 = vld [vmem:[#allocation4 + $0x48] sm:$0xff]
    %v219 = vld [vmem:[#allocation4 + $0x50] sm:$0xff]
    %v220 = vld [vmem:[#allocation4 + $0x58] sm:$0xff]
    %v221 = vld [vmem:[#allocation4 + $0x60] sm:$0xff]
    %v222 = vld [vmem:[#allocation4 + $0x68] sm:$0xff]
    %v223 = vld [vmem:[#allocation4 + $0x70] sm:$0xff]
    %v224 = vld [vmem:[#allocation4 + $0x78] sm:$0xff]
    %v225 = vld [vmem:[#allocation6] sm:$0xff]
    %v226 = vld [vmem:[#allocation6 + $0x8] sm:$0xff]
    %v227 = vld [vmem:[#allocation6 + $0x10] sm:$0xff]
    %v228 = vld [vmem:[#allocation6 + $0x18] sm:$0xff]
    %v229 = vld [vmem:[#allocation6 + $0x20] sm:$0xff]
    %v230 = vld [vmem:[#allocation6 + $0x28] sm:$0xff]
    %v231 = vld [vmem:[#allocation6 + $0x30] sm:$0xff]
    %v232 = vld [vmem:[#allocation6 + $0x38] sm:$0xff]
    %v233 = vld [vmem:[#allocation6 + $0x40] sm:$0xff]
    %v234 = vld [vmem:[#allocation6 + $0x48] sm:$0xff]
    %v235 = vld [vmem:[#allocation6 + $0x50] sm:$0xff]
    %v236 = vld [vmem:[#allocation6 + $0x58] sm:$0xff]
    %v237 = vld [vmem:[#allocation6 + $0x60] sm:$0xff]
    %v238 = vld [vmem:[#allocation6 + $0x68] sm:$0xff]
    %v239 = vld [vmem:[#allocation6 + $0x70] sm:$0xff]
    %v240 = vld [vmem:[#allocation6 + $0x78] sm:$0xff]
    %v241 = vld [vmem:[%s5] sm:$0x3]
    %v242 = vld [vmem:[#allocation2] sm:$0xff]
    %v243 = vld [vmem:[#allocation2 + $0x8] sm:$0xff]
    %v244 = vld [vmem:[#allocation2 + $0x10] sm:$0xff]
    %v245 = vld [vmem:[#allocation2 + $0x18] sm:$0xff]
    %v246 = vld [vmem:[#allocation2 + $0x20] sm:$0xff]
    %v247 = vld [vmem:[#allocation2 + $0x28] sm:$0xff]
    %v248 = vld [vmem:[#allocation2 + $0x30] sm:$0xff]
    %v249 = vld [vmem:[#allocation2 + $0x38] sm:$0xff]
    %v251 = vlaneseq
    %v252 = vshrl.u32 %v251, 7
    %v253 = vsub.s32 0, %v252
    %v254 = vrot.slane %v241, %v253
    %v255 = vlaneseq
    %v256 = vshrl.u32 %v255, 7
    %v257 = vsub.s32 1, %v256
    %v258 = vrot.slane %v241, %v257
    %v262 = vsel %vm200, %v242, 0
    %v265 = vsel %vm200, %v243, 0
    %v268 = vsel %vm200, %v244, 0
    %v271 = vsel %vm200, %v245, 0
    %v274 = vsel %vm200, %v246, 0
    %v277 = vsel %vm200, %v247, 0
    %v280 = vsel %vm200, %v248, 0
    %v283 = vsel %vm200, %v249, 0
    %285 = vmatprep.subr.mxu0 %v210
    %286 = vmatpush1.msra.mxu0 %v209
    %287 = vmatprep.subr.mxu0 %v212
    %288 = vmatpush1.msra.mxu0 %v211
    %289 = vmatprep.subr.mxu0 %v214
    %290 = vmatpush1.msra.mxu0 %v213
    %291 = vmatprep.subr.mxu0 %v216
    %292 = vmatpush1.msra.mxu0 %v215
    %293 = vmatprep.subr.mxu0 %v218
    %294 = vmatpush1.msra.mxu0 %v217
    %295 = vmatprep.subr.mxu0 %v220
    %296 = vmatpush1.msra.mxu0 %v219
    %297 = vmatprep.subr.mxu0 %v222
    %298 = vmatpush1.msra.mxu0 %v221
    %299 = vmatprep.subr.mxu0 %v224
    %300 = vmatpush1.msra.mxu0 %v223
    %301 = vmatprep.subr.mxu0 0.0
    %302 = vmatpush1.msra.mxu0 0.0
    %303 = vmatprep.subr.mxu0 0.0
    %304 = vmatpush1.msra.mxu0 0.0
    %305 = vmatprep.subr.mxu0 0.0
    %306 = vmatpush1.msra.mxu0 0.0
    %307 = vmatprep.subr.mxu0 0.0
    %308 = vmatpush1.msra.mxu0 0.0
    %309 = vmatprep.subr.mxu0 0.0
    %310 = vmatpush1.msra.mxu0 0.0
    %311 = vmatprep.subr.mxu0 0.0
    %312 = vmatpush1.msra.mxu0 0.0
    %313 = vmatprep.subr.mxu0 0.0
    %314 = vmatpush1.msra.mxu0 0.0
    %315 = vmatprep.subr.mxu0 0.0
    %316 = vmatpush1.msra.mxu0 0.0
    %317 = vmatprep.subr.mxu0 0.0
    %318 = vmatpush1.msra.mxu0 0.0
    %319 = vmatprep.subr.mxu0 0.0
    %320 = vmatpush1.msra.mxu0 0.0
    %321 = vmatprep.subr.mxu0 0.0
    %322 = vmatpush1.msra.mxu0 0.0
    %323 = vmatprep.subr.mxu0 0.0
    %324 = vmatpush1.msra.mxu0 0.0
    %325 = vmatprep.subr.mxu0 0.0
    %326 = vmatpush1.msra.mxu0 0.0
    %327 = vmatprep.subr.mxu0 0.0
    %328 = vmatpush1.msra.mxu0 0.0
    %329 = vmatprep.subr.mxu0 0.0
    %330 = vmatpush1.msra.mxu0 0.0
    %331 = vmatprep.subr.mxu0 0.0
    %332 = vmatpush1.msra.mxu0 0.0
    %333 = vmatprep.subr.mxu0 0.0
    %334 = vmatpush1.msra.mxu0 0.0
    %335 = vmatprep.subr.mxu0 0.0
    %336 = vmatpush1.msra.mxu0 0.0
    %337 = vmatprep.subr.mxu0 0.0
    %338 = vmatpush1.msra.mxu0 0.0
    %339 = vmatprep.subr.mxu0 0.0
    %340 = vmatpush1.msra.mxu0 0.0
    %341 = vmatprep.subr.mxu0 0.0
    %342 = vmatpush1.msra.mxu0 0.0
    %343 = vmatprep.subr.mxu0 0.0
    %344 = vmatpush1.msra.mxu0 0.0
    %345 = vmatprep.subr.mxu0 0.0
    %346 = vmatpush1.msra.mxu0 0.0
    %347 = vmatprep.subr.mxu0 0.0
    %348 = vmatpush1.msra.mxu0 0.0
    %349 = vmatprep.mubr.f32.mxu0 0.0
    %350 = vmatmul.mubr.f32.gmra.mrb[0].mxu0 %v262
    %v351 = vpop.f32.mrb[0].mxu0
    %v352 = vadd.f32 %v254, %v351
    %v353 = vpop.f32.mrb[0].mxu0
    %v354 = vadd.f32 %v258, %v353
    %355 = vmatprep.mubr.f32.mxu0 0.0
    %356 = vmatmul.mubr.f32.gmra.mrb[0].mxu0 %v265
    %v357 = vpop.f32.mrb[0].mxu0
    %v358 = vadd.f32 %v254, %v357
    %v359 = vpop.f32.mrb[0].mxu0
    %v360 = vadd.f32 %v258, %v359
    %361 = vmatprep.mubr.f32.mxu0 0.0
    %362 = vmatmul.mubr.f32.gmra.mrb[0].mxu0 %v268
    %v363 = vpop.f32.mrb[0].mxu0
    %v364 = vadd.f32 %v254, %v363
    %v365 = vpop.f32.mrb[0].mxu0
    %v366 = vadd.f32 %v258, %v365
    %367 = vmatprep.mubr.f32.mxu0 0.0
    %368 = vmatmul.mubr.f32.gmra.mrb[0].mxu0 %v271
    %v369 = vpop.f32.mrb[0].mxu0
    %v370 = vadd.f32 %v254, %v369
    %v371 = vpop.f32.mrb[0].mxu0
    %v372 = vadd.f32 %v258, %v371
    %373 = vmatprep.mubr.f32.mxu0 0.0
    %374 = vmatmul.mubr.f32.gmra.mrb[0].mxu0 %v274
    %v375 = vpop.f32.mrb[0].mxu0
    %v376 = vadd.f32 %v254, %v375
    %v377 = vpop.f32.mrb[0].mxu0
    %v378 = vadd.f32 %v258, %v377
    %379 = vmatprep.mubr.f32.mxu0 0.0
    %380 = vmatmul.mubr.f32.gmra.mrb[0].mxu0 %v277
    %v381 = vpop.f32.mrb[0].mxu0
    %v382 = vadd.f32 %v254, %v381
    %v383 = vpop.f32.mrb[0].mxu0
    %v384 = vadd.f32 %v258, %v383
    %385 = vmatprep.mubr.f32.mxu0 0.0
    %386 = vmatmul.mubr.f32.gmra.mrb[0].mxu0 %v280
    %v387 = vpop.f32.mrb[0].mxu0
    %v388 = vadd.f32 %v254, %v387
    %v389 = vpop.f32.mrb[0].mxu0
    %v390 = vadd.f32 %v258, %v389
    %391 = vmatprep.mubr.f32.mxu0 0.0
    %392 = vmatmul.mubr.f32.gmra.mrb[0].mxu0 %v283
    %v393 = vpop.f32.mrb[0].mxu0
    %v394 = vadd.f32 %v254, %v393
    %v395 = vpop.f32.mrb[0].mxu0
    %v396 = vadd.f32 %v258, %v395
    %397 = vdwg.mxu0
    %398 = vst [vmem:[#allocation3] sm:$0xff] %v352
    %399 = vst [vmem:[#allocation3 + $0x8] sm:$0xff] %v354
    %400 = vst [vmem:[#allocation3 + $0x10] sm:$0xff] %v358
    %401 = vst [vmem:[#allocation3 + $0x18] sm:$0xff] %v360
    %402 = vst [vmem:[#allocation3 + $0x20] sm:$0xff] %v364
    %403 = vst [vmem:[#allocation3 + $0x28] sm:$0xff] %v366
    %404 = vst [vmem:[#allocation3 + $0x30] sm:$0xff] %v370
    %405 = vst [vmem:[#allocation3 + $0x38] sm:$0xff] %v372
    %406 = vst [vmem:[#allocation3 + $0x40] sm:$0xff] %v376
    %407 = vst [vmem:[#allocation3 + $0x48] sm:$0xff] %v378
    %408 = vst [vmem:[#allocation3 + $0x50] sm:$0xff] %v382
    %409 = vst [vmem:[#allocation3 + $0x58] sm:$0xff] %v384
    %410 = vst [vmem:[#allocation3 + $0x60] sm:$0xff] %v388
    %411 = vst [vmem:[#allocation3 + $0x68] sm:$0xff] %v390
    %412 = vst [vmem:[#allocation3 + $0x70] sm:$0xff] %v394
    %413 = vst [vmem:[#allocation3 + $0x78] sm:$0xff] %v396
    %v414 = vld [vmem:[#allocation3] sm:$0xff]
    %v415 = vld [vmem:[#allocation3 + $0x8] sm:$0xff]
    %v417 = vsel %vm200, 0.0, 0
    %419 = vmatprep.subr.mxu0 %v226
    %420 = vmatpush1.msra.mxu0 %v225
    %421 = vmatprep.subr.mxu0 %v228
    %422 = vmatpush1.msra.mxu0 %v227
    %423 = vmatprep.subr.mxu0 %v230
    %424 = vmatpush1.msra.mxu0 %v229
    %425 = vmatprep.subr.mxu0 %v232
    %426 = vmatpush1.msra.mxu0 %v231
    %427 = vmatprep.subr.mxu0 %v234
    %428 = vmatpush1.msra.mxu0 %v233
    %429 = vmatprep.subr.mxu0 %v236
    %430 = vmatpush1.msra.mxu0 %v235
    %431 = vmatprep.subr.mxu0 %v238
    %432 = vmatpush1.msra.mxu0 %v237
    %433 = vmatprep.subr.mxu0 %v240
    %434 = vmatpush1.msra.mxu0 %v239
    %435 = vmatprep.subr.mxu0 0.0
    %436 = vmatpush1.msra.mxu0 0.0
    %437 = vmatprep.subr.mxu0 0.0
    %438 = vmatpush1.msra.mxu0 0.0
    %439 = vmatprep.subr.mxu0 0.0
    %440 = vmatpush1.msra.mxu0 0.0
    %441 = vmatprep.subr.mxu0 0.0
    %442 = vmatpush1.msra.mxu0 0.0
    %443 = vmatprep.subr.mxu0 0.0
    %444 = vmatpush1.msra.mxu0 0.0
    %445 = vmatprep.subr.mxu0 0.0
    %446 = vmatpush1.msra.mxu0 0.0
    %447 = vmatprep.subr.mxu0 0.0
    %448 = vmatpush1.msra.mxu0 0.0
    %449 = vmatprep.subr.mxu0 0.0
    %450 = vmatpush1.msra.mxu0 0.0
    %451 = vmatprep.subr.mxu0 0.0
    %452 = vmatpush1.msra.mxu0 0.0
    %453 = vmatprep.subr.mxu0 0.0
    %454 = vmatpush1.msra.mxu0 0.0
    %455 = vmatprep.subr.mxu0 0.0
    %456 = vmatpush1.msra.mxu0 0.0
    %457 = vmatprep.subr.mxu0 0.0
    %458 = vmatpush1.msra.mxu0 0.0
    %459 = vmatprep.subr.mxu0 0.0
    %460 = vmatpush1.msra.mxu0 0.0
    %461 = vmatprep.subr.mxu0 0.0
    %462 = vmatpush1.msra.mxu0 0.0
    %463 = vmatprep.subr.mxu0 0.0
    %464 = vmatpush1.msra.mxu0 0.0
    %465 = vmatprep.subr.mxu0 0.0
    %466 = vmatpush1.msra.mxu0 0.0
    %467 = vmatprep.subr.mxu0 0.0
    %468 = vmatpush1.msra.mxu0 0.0
    %469 = vmatprep.subr.mxu0 0.0
    %470 = vmatpush1.msra.mxu0 0.0
    %471 = vmatprep.subr.mxu0 0.0
    %472 = vmatpush1.msra.mxu0 0.0
    %473 = vmatprep.subr.mxu0 0.0
    %474 = vmatpush1.msra.mxu0 0.0
    %475 = vmatprep.subr.mxu0 0.0
    %476 = vmatpush1.msra.mxu0 0.0
    %477 = vmatprep.subr.mxu0 0.0
    %478 = vmatpush1.msra.mxu0 0.0
    %479 = vmatprep.subr.mxu0 0.0
    %480 = vmatpush1.msra.mxu0 0.0
    %481 = vmatprep.subr.mxu0 0.0
    %482 = vmatpush1.msra.mxu0 0.0
    %483 = vmatprep.mubr.f32.mxu0 0.0
    %484 = vmatmul.mubr.f32.gmra.mrb[0].mxu0 %v417
    %v485 = vpop.f32.mrb[0].mxu0
    %v486 = vadd.f32 0.0, %v485
    %v487 = vpop.f32.mrb[0].mxu0
    %v488 = vadd.f32 0.0, %v487
    %489 = vdwg.mxu0
    %v490 = vadd.f32 %v414, %v486
    %v491 = vadd.f32 %v415, %v488
    %v492 = vmul.f32 %v490, 0.5
    %v493 = vmul.f32 %v491, 0.5
    %v494 = vtanh.pop %v492
    %v495 = vtanh.pop %v493
    %v496 = vmul.f32 %v494, 0.5
    %v497 = vmul.f32 %v495, 0.5
    %v498 = vadd.f32 %v496, 0.5
    %v499 = vadd.f32 %v497, 0.5
    %v500 = vtanh.pop %v491
    %v501 = vmul.f32 %v498, 0.0
    %v502 = vmul.f32 %v498, %v500
    %504 = vrot.lane.b32.xlu0 %v502, 64
    %v505 = vpop.permute.xlu0 %504
    %v507 = vadd.f32 %v501, %v505
    %v508 = vtanh.pop %v507
    %v509 = vmul.f32 %v499, %v508
    %511 = vrot.lane.b32.xlu0 %v509, 64
    %v512 = vpop.permute.xlu0 %511
    %514 = vst.msk [vmem:[#allocation2] sm:$0xff] %vm200, %v512
    %v515 = vld [vmem:[#allocation3 + $0x10] sm:$0xff]
    %v516 = vld [vmem:[#allocation3 + $0x18] sm:$0xff]
    %v517 = vsel %vm200, %v512, 0
    %519 = vmatprep.subr.mxu0 %v226
    %520 = vmatpush1.msra.mxu0 %v225
    %521 = vmatprep.subr.mxu0 %v228
    %522 = vmatpush1.msra.mxu0 %v227
    %523 = vmatprep.subr.mxu0 %v230
    %524 = vmatpush1.msra.mxu0 %v229
    %525 = vmatprep.subr.mxu0 %v232
    %526 = vmatpush1.msra.mxu0 %v231
    %527 = vmatprep.subr.mxu0 %v234
    %528 = vmatpush1.msra.mxu0 %v233
    %529 = vmatprep.subr.mxu0 %v236
    %530 = vmatpush1.msra.mxu0 %v235
    %531 = vmatprep.subr.mxu0 %v238
    %532 = vmatpush1.msra.mxu0 %v237
    %533 = vmatprep.subr.mxu0 %v240
    %534 = vmatpush1.msra.mxu0 %v239
    %535 = vmatprep.subr.mxu0 0.0
    %536 = vmatpush1.msra.mxu0 0.0
    %537 = vmatprep.subr.mxu0 0.0
    %538 = vmatpush1.msra.mxu0 0.0
    %539 = vmatprep.subr.mxu0 0.0
    %540 = vmatpush1.msra.mxu0 0.0
    %541 = vmatprep.subr.mxu0 0.0
    %542 = vmatpush1.msra.mxu0 0.0
    %543 = vmatprep.subr.mxu0 0.0
    %544 = vmatpush1.msra.mxu0 0.0
    %545 = vmatprep.subr.mxu0 0.0
    %546 = vmatpush1.msra.mxu0 0.0
    %547 = vmatprep.subr.mxu0 0.0
    %548 = vmatpush1.msra.mxu0 0.0
    %549 = vmatprep.subr.mxu0 0.0
    %550 = vmatpush1.msra.mxu0 0.0
    %551 = vmatprep.subr.mxu0 0.0
    %552 = vmatpush1.msra.mxu0 0.0
    %553 = vmatprep.subr.mxu0 0.0
    %554 = vmatpush1.msra.mxu0 0.0
    %555 = vmatprep.subr.mxu0 0.0
    %556 = vmatpush1.msra.mxu0 0.0
    %557 = vmatprep.subr.mxu0 0.0
    %558 = vmatpush1.msra.mxu0 0.0
    %559 = vmatprep.subr.mxu0 0.0
    %560 = vmatpush1.msra.mxu0 0.0
    %561 = vmatprep.subr.mxu0 0.0
    %562 = vmatpush1.msra.mxu0 0.0
    %563 = vmatprep.subr.mxu0 0.0
    %564 = vmatpush1.msra.mxu0 0.0
    %565 = vmatprep.subr.mxu0 0.0
    %566 = vmatpush1.msra.mxu0 0.0
    %567 = vmatprep.subr.mxu0 0.0
    %568 = vmatpush1.msra.mxu0 0.0
    %569 = vmatprep.subr.mxu0 0.0
    %570 = vmatpush1.msra.mxu0 0.0
    %571 = vmatprep.subr.mxu0 0.0
    %572 = vmatpush1.msra.mxu0 0.0
    %573 = vmatprep.subr.mxu0 0.0
    %574 = vmatpush1.msra.mxu0 0.0
    %575 = vmatprep.subr.mxu0 0.0
    %576 = vmatpush1.msra.mxu0 0.0
    %577 = vmatprep.subr.mxu0 0.0
    %578 = vmatpush1.msra.mxu0 0.0
    %579 = vmatprep.subr.mxu0 0.0
    %580 = vmatpush1.msra.mxu0 0.0
    %581 = vmatprep.subr.mxu0 0.0
    %582 = vmatpush1.msra.mxu0 0.0
    %583 = vmatprep.mubr.f32.mxu0 0.0
    %584 = vmatmul.mubr.f32.gmra.mrb[0].mxu0 %v517
    %v585 = vpop.f32.mrb[0].mxu0
    %v586 = vadd.f32 0.0, %v585
    %v587 = vpop.f32.mrb[0].mxu0
    %v588 = vadd.f32 0.0, %v587
    %589 = vdwg.mxu0
    %v590 = vadd.f32 %v515, %v586
    %v591 = vadd.f32 %v516, %v588
    %v592 = vmul.f32 %v590, 0.5
    %v593 = vmul.f32 %v591, 0.5
    %v594 = vtanh.pop %v592
    %v595 = vtanh.pop %v593
    %v596 = vmul.f32 %v594, 0.5
    %v597 = vmul.f32 %v595, 0.5
    %v598 = vadd.f32 %v596, 0.5
    %v599 = vadd.f32 %v597, 0.5
    %v600 = vtanh.pop %v591
    %v601 = vmul.f32 %v598, %v507
    %v602 = vmul.f32 %v598, %v600
    %604 = vrot.lane.b32.xlu0 %v602, 64
    %v605 = vpop.permute.xlu0 %604
    %v607 = vadd.f32 %v601, %v605
    %v608 = vtanh.pop %v607
    %v609 = vmul.f32 %v599, %v608
    %611 = vrot.lane.b32.xlu0 %v609, 64
    %v612 = vpop.permute.xlu0 %611
    %614 = vst.msk [vmem:[#allocation2 + $0x8] sm:$0xff] %vm200, %v612
    %v615 = vld [vmem:[#allocation3 + $0x20] sm:$0xff]
    %v616 = vld [vmem:[#allocation3 + $0x28] sm:$0xff]
    %v617 = vsel %vm200, %v612, 0
    %619 = vmatprep.subr.mxu0 %v226
    %620 = vmatpush1.msra.mxu0 %v225
    %621 = vmatprep.subr.mxu0 %v228
    %622 = vmatpush1.msra.mxu0 %v227
    %623 = vmatprep.subr.mxu0 %v230
    %624 = vmatpush1.msra.mxu0 %v229
    %625 = vmatprep.subr.mxu0 %v232
    %626 = vmatpush1.msra.mxu0 %v231
    %627 = vmatprep.subr.mxu0 %v234
    %628 = vmatpush1.msra.mxu0 %v233
    %629 = vmatprep.subr.mxu0 %v236
    %630 = vmatpush1.msra.mxu0 %v235
    %631 = vmatprep.subr.mxu0 %v238
    %632 = vmatpush1.msra.mxu0 %v237
    %633 = vmatprep.subr.mxu0 %v240
    %634 = vmatpush1.msra.mxu0 %v239
    %635 = vmatprep.subr.mxu0 0.0
    %636 = vmatpush1.msra.mxu0 0.0
    %637 = vmatprep.subr.mxu0 0.0
    %638 = vmatpush1.msra.mxu0 0.0
    %639 = vmatprep.subr.mxu0 0.0
    %640 = vmatpush1.msra.mxu0 0.0
    %641 = vmatprep.subr.mxu0 0.0
    %642 = vmatpush1.msra.mxu0 0.0
    %643 = vmatprep.subr.mxu0 0.0
    %644 = vmatpush1.msra.mxu0 0.0
    %645 = vmatprep.subr.mxu0 0.0
    %646 = vmatpush1.msra.mxu0 0.0
    %647 = vmatprep.subr.mxu0 0.0
    %648 = vmatpush1.msra.mxu0 0.0
    %649 = vmatprep.subr.mxu0 0.0
    %650 = vmatpush1.msra.mxu0 0.0
    %651 = vmatprep.subr.mxu0 0.0
    %652 = vmatpush1.msra.mxu0 0.0
    %653 = vmatprep.subr.mxu0 0.0
    %654 = vmatpush1.msra.mxu0 0.0
    %655 = vmatprep.subr.mxu0 0.0
    %656 = vmatpush1.msra.mxu0 0.0
    %657 = vmatprep.subr.mxu0 0.0
    %658 = vmatpush1.msra.mxu0 0.0
    %659 = vmatprep.subr.mxu0 0.0
    %660 = vmatpush1.msra.mxu0 0.0
    %661 = vmatprep.subr.mxu0 0.0
    %662 = vmatpush1.msra.mxu0 0.0
    %663 = vmatprep.subr.mxu0 0.0
    %664 = vmatpush1.msra.mxu0 0.0
    %665 = vmatprep.subr.mxu0 0.0
    %666 = vmatpush1.msra.mxu0 0.0
    %667 = vmatprep.subr.mxu0 0.0
    %668 = vmatpush1.msra.mxu0 0.0
    %669 = vmatprep.subr.mxu0 0.0
    %670 = vmatpush1.msra.mxu0 0.0
    %671 = vmatprep.subr.mxu0 0.0
    %672 = vmatpush1.msra.mxu0 0.0
    %673 = vmatprep.subr.mxu0 0.0
    %674 = vmatpush1.msra.mxu0 0.0
    %675 = vmatprep.subr.mxu0 0.0
    %676 = vmatpush1.msra.mxu0 0.0
    %677 = vmatprep.subr.mxu0 0.0
    %678 = vmatpush1.msra.mxu0 0.0
    %679 = vmatprep.subr.mxu0 0.0
    %680 = vmatpush1.msra.mxu0 0.0
    %681 = vmatprep.subr.mxu0 0.0
    %682 = vmatpush1.msra.mxu0 0.0
    %683 = vmatprep.mubr.f32.mxu0 0.0
    %684 = vmatmul.mubr.f32.gmra.mrb[0].mxu0 %v617
    %v685 = vpop.f32.mrb[0].mxu0
    %v686 = vadd.f32 0.0, %v685
    %v687 = vpop.f32.mrb[0].mxu0
    %v688 = vadd.f32 0.0, %v687
    %689 = vdwg.mxu0
    %v690 = vadd.f32 %v615, %v686
    %v691 = vadd.f32 %v616, %v688
    %v692 = vmul.f32 %v690, 0.5
    %v693 = vmul.f32 %v691, 0.5
    %v694 = vtanh.pop %v692
    %v695 = vtanh.pop %v693
    %v696 = vmul.f32 %v694, 0.5
    %v697 = vmul.f32 %v695, 0.5
    %v698 = vadd.f32 %v696, 0.5
    %v699 = vadd.f32 %v697, 0.5
    %v700 = vtanh.pop %v691
    %v701 = vmul.f32 %v698, %v607
    %v702 = vmul.f32 %v698, %v700
    %704 = vrot.lane.b32.xlu0 %v702, 64
    %v705 = vpop.permute.xlu0 %704
    %v707 = vadd.f32 %v701, %v705
    %v708 = vtanh.pop %v707
    %v709 = vmul.f32 %v699, %v708
    %711 = vrot.lane.b32.xlu0 %v709, 64
    %v712 = vpop.permute.xlu0 %711
    %714 = vst.msk [vmem:[#allocation2 + $0x10] sm:$0xff] %vm200, %v712
    %v715 = vld [vmem:[#allocation3 + $0x30] sm:$0xff]
    %v716 = vld [vmem:[#allocation3 + $0x38] sm:$0xff]
    %v717 = vsel %vm200, %v712, 0
    %719 = vmatprep.subr.mxu0 %v226
    %720 = vmatpush1.msra.mxu0 %v225
    %721 = vmatprep.subr.mxu0 %v228
    %722 = vmatpush1.msra.mxu0 %v227
    %723 = vmatprep.subr.mxu0 %v230
    %724 = vmatpush1.msra.mxu0 %v229
    %725 = vmatprep.subr.mxu0 %v232
    %726 = vmatpush1.msra.mxu0 %v231
    %727 = vmatprep.subr.mxu0 %v234
    %728 = vmatpush1.msra.mxu0 %v233
    %729 = vmatprep.subr.mxu0 %v236
    %730 = vmatpush1.msra.mxu0 %v235
    %731 = vmatprep.subr.mxu0 %v238
    %732 = vmatpush1.msra.mxu0 %v237
    %733 = vmatprep.subr.mxu0 %v240
    %734 = vmatpush1.msra.mxu0 %v239
    %735 = vmatprep.subr.mxu0 0.0
    %736 = vmatpush1.msra.mxu0 0.0
    %737 = vmatprep.subr.mxu0 0.0
    %738 = vmatpush1.msra.mxu0 0.0
    %739 = vmatprep.subr.mxu0 0.0
    %740 = vmatpush1.msra.mxu0 0.0
    %741 = vmatprep.subr.mxu0 0.0
    %742 = vmatpush1.msra.mxu0 0.0
    %743 = vmatprep.subr.mxu0 0.0
    %744 = vmatpush1.msra.mxu0 0.0
    %745 = vmatprep.subr.mxu0 0.0
    %746 = vmatpush1.msra.mxu0 0.0
    %747 = vmatprep.subr.mxu0 0.0
    %748 = vmatpush1.msra.mxu0 0.0
    %749 = vmatprep.subr.mxu0 0.0
    %750 = vmatpush1.msra.mxu0 0.0
    %751 = vmatprep.subr.mxu0 0.0
    %752 = vmatpush1.msra.mxu0 0.0
    %753 = vmatprep.subr.mxu0 0.0
    %754 = vmatpush1.msra.mxu0 0.0
    %755 = vmatprep.subr.mxu0 0.0
    %756 = vmatpush1.msra.mxu0 0.0
    %757 = vmatprep.subr.mxu0 0.0
    %758 = vmatpush1.msra.mxu0 0.0
    %759 = vmatprep.subr.mxu0 0.0
    %760 = vmatpush1.msra.mxu0 0.0
    %761 = vmatprep.subr.mxu0 0.0
    %762 = vmatpush1.msra.mxu0 0.0
    %763 = vmatprep.subr.mxu0 0.0
    %764 = vmatpush1.msra.mxu0 0.0
    %765 = vmatprep.subr.mxu0 0.0
    %766 = vmatpush1.msra.mxu0 0.0
    %767 = vmatprep.subr.mxu0 0.0
    %768 = vmatpush1.msra.mxu0 0.0
    %769 = vmatprep.subr.mxu0 0.0
    %770 = vmatpush1.msra.mxu0 0.0
    %771 = vmatprep.subr.mxu0 0.0
    %772 = vmatpush1.msra.mxu0 0.0
    %773 = vmatprep.subr.mxu0 0.0
    %774 = vmatpush1.msra.mxu0 0.0
    %775 = vmatprep.subr.mxu0 0.0
    %776 = vmatpush1.msra.mxu0 0.0
    %777 = vmatprep.subr.mxu0 0.0
    %778 = vmatpush1.msra.mxu0 0.0
    %779 = vmatprep.subr.mxu0 0.0
    %780 = vmatpush1.msra.mxu0 0.0
    %781 = vmatprep.subr.mxu0 0.0
    %782 = vmatpush1.msra.mxu0 0.0
    %783 = vmatprep.mubr.f32.mxu0 0.0
    %784 = vmatmul.mubr.f32.gmra.mrb[0].mxu0 %v717
    %v785 = vpop.f32.mrb[0].mxu0
    %v786 = vadd.f32 0.0, %v785
    %v787 = vpop.f32.mrb[0].mxu0
    %v788 = vadd.f32 0.0, %v787
    %789 = vdwg.mxu0
    %v790 = vadd.f32 %v715, %v786
    %v791 = vadd.f32 %v716, %v788
    %v792 = vmul.f32 %v790, 0.5
    %v793 = vmul.f32 %v791, 0.5
    %v794 = vtanh.pop %v792
    %v795 = vtanh.pop %v793
    %v796 = vmul.f32 %v794, 0.5
    %v797 = vmul.f32 %v795, 0.5
    %v798 = vadd.f32 %v796, 0.5
    %v799 = vadd.f32 %v797, 0.5
    %v800 = vtanh.pop %v791
    %v801 = vmul.f32 %v798, %v707
    %v802 = vmul.f32 %v798, %v800
    %804 = vrot.lane.b32.xlu0 %v802, 64
    %v805 = vpop.permute.xlu0 %804
    %v807 = vadd.f32 %v801, %v805
    %v808 = vtanh.pop %v807
    %v809 = vmul.f32 %v799, %v808
    %811 = vrot.lane.b32.xlu0 %v809, 64
    %v812 = vpop.permute.xlu0 %811
    %814 = vst.msk [vmem:[#allocation2 + $0x18] sm:$0xff] %vm200, %v812
    %v815 = vld [vmem:[#allocation3 + $0x40] sm:$0xff]
    %v816 = vld [vmem:[#allocation3 + $0x48] sm:$0xff]
    %v817 = vsel %vm200, %v812, 0
    %819 = vmatprep.subr.mxu0 %v226
    %820 = vmatpush1.msra.mxu0 %v225
    %821 = vmatprep.subr.mxu0 %v228
    %822 = vmatpush1.msra.mxu0 %v227
    %823 = vmatprep.subr.mxu0 %v230
    %824 = vmatpush1.msra.mxu0 %v229
    %825 = vmatprep.subr.mxu0 %v232
    %826 = vmatpush1.msra.mxu0 %v231
    %827 = vmatprep.subr.mxu0 %v234
    %828 = vmatpush1.msra.mxu0 %v233
    %829 = vmatprep.subr.mxu0 %v236
    %830 = vmatpush1.msra.mxu0 %v235
    %831 = vmatprep.subr.mxu0 %v238
    %832 = vmatpush1.msra.mxu0 %v237
    %833 = vmatprep.subr.mxu0 %v240
    %834 = vmatpush1.msra.mxu0 %v239
    %835 = vmatprep.subr.mxu0 0.0
    %836 = vmatpush1.msra.mxu0 0.0
    %837 = vmatprep.subr.mxu0 0.0
    %838 = vmatpush1.msra.mxu0 0.0
    %839 = vmatprep.subr.mxu0 0.0
    %840 = vmatpush1.msra.mxu0 0.0
    %841 = vmatprep.subr.mxu0 0.0
    %842 = vmatpush1.msra.mxu0 0.0
    %843 = vmatprep.subr.mxu0 0.0
    %844 = vmatpush1.msra.mxu0 0.0
    %845 = vmatprep.subr.mxu0 0.0
    %846 = vmatpush1.msra.mxu0 0.0
    %847 = vmatprep.subr.mxu0 0.0
    %848 = vmatpush1.msra.mxu0 0.0
    %849 = vmatprep.subr.mxu0 0.0
    %850 = vmatpush1.msra.mxu0 0.0
    %851 = vmatprep.subr.mxu0 0.0
    %852 = vmatpush1.msra.mxu0 0.0
    %853 = vmatprep.subr.mxu0 0.0
    %854 = vmatpush1.msra.mxu0 0.0
    %855 = vmatprep.subr.mxu0 0.0
    %856 = vmatpush1.msra.mxu0 0.0
    %857 = vmatprep.subr.mxu0 0.0
    %858 = vmatpush1.msra.mxu0 0.0
    %859 = vmatprep.subr.mxu0 0.0
    %860 = vmatpush1.msra.mxu0 0.0
    %861 = vmatprep.subr.mxu0 0.0
    %862 = vmatpush1.msra.mxu0 0.0
    %863 = vmatprep.subr.mxu0 0.0
    %864 = vmatpush1.msra.mxu0 0.0
    %865 = vmatprep.subr.mxu0 0.0
    %866 = vmatpush1.msra.mxu0 0.0
    %867 = vmatprep.subr.mxu0 0.0
    %868 = vmatpush1.msra.mxu0 0.0
    %869 = vmatprep.subr.mxu0 0.0
    %870 = vmatpush1.msra.mxu0 0.0
    %871 = vmatprep.subr.mxu0 0.0
    %872 = vmatpush1.msra.mxu0 0.0
    %873 = vmatprep.subr.mxu0 0.0
    %874 = vmatpush1.msra.mxu0 0.0
    %875 = vmatprep.subr.mxu0 0.0
    %876 = vmatpush1.msra.mxu0 0.0
    %877 = vmatprep.subr.mxu0 0.0
    %878 = vmatpush1.msra.mxu0 0.0
    %879 = vmatprep.subr.mxu0 0.0
    %880 = vmatpush1.msra.mxu0 0.0
    %881 = vmatprep.subr.mxu0 0.0
    %882 = vmatpush1.msra.mxu0 0.0
    %883 = vmatprep.mubr.f32.mxu0 0.0
    %884 = vmatmul.mubr.f32.gmra.mrb[0].mxu0 %v817
    %v885 = vpop.f32.mrb[0].mxu0
    %v886 = vadd.f32 0.0, %v885
    %v887 = vpop.f32.mrb[0].mxu0
    %v888 = vadd.f32 0.0, %v887
    %889 = vdwg.mxu0
    %v890 = vadd.f32 %v815, %v886
    %v891 = vadd.f32 %v816, %v888
    %v892 = vmul.f32 %v890, 0.5
    %v893 = vmul.f32 %v891, 0.5
    %v894 = vtanh.pop %v892
    %v895 = vtanh.pop %v893
    %v896 = vmul.f32 %v894, 0.5
    %v897 = vmul.f32 %v895, 0.5
    %v898 = vadd.f32 %v896, 0.5
    %v899 = vadd.f32 %v897, 0.5
    %v900 = vtanh.pop %v891
    %v901 = vmul.f32 %v898, %v807
    %v902 = vmul.f32 %v898, %v900
    %904 = vrot.lane.b32.xlu0 %v902, 64
    %v905 = vpop.permute.xlu0 %904
    %v907 = vadd.f32 %v901, %v905
    %v908 = vtanh.pop %v907
    %v909 = vmul.f32 %v899, %v908
    %911 = vrot.lane.b32.xlu0 %v909, 64
    %v912 = vpop.permute.xlu0 %911
    %914 = vst.msk [vmem:[#allocation2 + $0x20] sm:$0xff] %vm200, %v912
    %v915 = vld [vmem:[#allocation3 + $0x50] sm:$0xff]
    %v916 = vld [vmem:[#allocation3 + $0x58] sm:$0xff]
    %v917 = vsel %vm200, %v912, 0
    %919 = vmatprep.subr.mxu0 %v226
    %920 = vmatpush1.msra.mxu0 %v225
    %921 = vmatprep.subr.mxu0 %v228
    %922 = vmatpush1.msra.mxu0 %v227
    %923 = vmatprep.subr.mxu0 %v230
    %924 = vmatpush1.msra.mxu0 %v229
    %925 = vmatprep.subr.mxu0 %v232
    %926 = vmatpush1.msra.mxu0 %v231
    %927 = vmatprep.subr.mxu0 %v234
    %928 = vmatpush1.msra.mxu0 %v233
    %929 = vmatprep.subr.mxu0 %v236
    %930 = vmatpush1.msra.mxu0 %v235
    %931 = vmatprep.subr.mxu0 %v238
    %932 = vmatpush1.msra.mxu0 %v237
    %933 = vmatprep.subr.mxu0 %v240
    %934 = vmatpush1.msra.mxu0 %v239
    %935 = vmatprep.subr.mxu0 0.0
    %936 = vmatpush1.msra.mxu0 0.0
    %937 = vmatprep.subr.mxu0 0.0
    %938 = vmatpush1.msra.mxu0 0.0
    %939 = vmatprep.subr.mxu0 0.0
    %940 = vmatpush1.msra.mxu0 0.0
    %941 = vmatprep.subr.mxu0 0.0
    %942 = vmatpush1.msra.mxu0 0.0
    %943 = vmatprep.subr.mxu0 0.0
    %944 = vmatpush1.msra.mxu0 0.0
    %945 = vmatprep.subr.mxu0 0.0
    %946 = vmatpush1.msra.mxu0 0.0
    %947 = vmatprep.subr.mxu0 0.0
    %948 = vmatpush1.msra.mxu0 0.0
    %949 = vmatprep.subr.mxu0 0.0
    %950 = vmatpush1.msra.mxu0 0.0
    %951 = vmatprep.subr.mxu0 0.0
    %952 = vmatpush1.msra.mxu0 0.0
    %953 = vmatprep.subr.mxu0 0.0
    %954 = vmatpush1.msra.mxu0 0.0
    %955 = vmatprep.subr.mxu0 0.0
    %956 = vmatpush1.msra.mxu0 0.0
    %957 = vmatprep.subr.mxu0 0.0
    %958 = vmatpush1.msra.mxu0 0.0
    %959 = vmatprep.subr.mxu0 0.0
    %960 = vmatpush1.msra.mxu0 0.0
    %961 = vmatprep.subr.mxu0 0.0
    %962 = vmatpush1.msra.mxu0 0.0
    %963 = vmatprep.subr.mxu0 0.0
    %964 = vmatpush1.msra.mxu0 0.0
    %965 = vmatprep.subr.mxu0 0.0
    %966 = vmatpush1.msra.mxu0 0.0
    %967 = vmatprep.subr.mxu0 0.0
    %968 = vmatpush1.msra.mxu0 0.0
    %969 = vmatprep.subr.mxu0 0.0
    %970 = vmatpush1.msra.mxu0 0.0
    %971 = vmatprep.subr.mxu0 0.0
    %972 = vmatpush1.msra.mxu0 0.0
    %973 = vmatprep.subr.mxu0 0.0
    %974 = vmatpush1.msra.mxu0 0.0
    %975 = vmatprep.subr.mxu0 0.0
    %976 = vmatpush1.msra.mxu0 0.0
    %977 = vmatprep.subr.mxu0 0.0
    %978 = vmatpush1.msra.mxu0 0.0
    %979 = vmatprep.subr.mxu0 0.0
    %980 = vmatpush1.msra.mxu0 0.0
    %981 = vmatprep.subr.mxu0 0.0
    %982 = vmatpush1.msra.mxu0 0.0
    %983 = vmatprep.mubr.f32.mxu0 0.0
    %984 = vmatmul.mubr.f32.gmra.mrb[0].mxu0 %v917
    %v985 = vpop.f32.mrb[0].mxu0
    %v986 = vadd.f32 0.0, %v985
    %v987 = vpop.f32.mrb[0].mxu0
    %v988 = vadd.f32 0.0, %v987
    %989 = vdwg.mxu0
    %v990 = vadd.f32 %v915, %v986
    %v991 = vadd.f32 %v916, %v988
    %v992 = vmul.f32 %v990, 0.5
    %v993 = vmul.f32 %v991, 0.5
    %v994 = vtanh.pop %v992
    %v995 = vtanh.pop %v993
    %v996 = vmul.f32 %v994, 0.5
    %v997 = vmul.f32 %v995, 0.5
    %v998 = vadd.f32 %v996, 0.5
    %v999 = vadd.f32 %v997, 0.5
    %v1000 = vtanh.pop %v991
    %v1001 = vmul.f32 %v998, %v907
    %v1002 = vmul.f32 %v998, %v1000
    %1004 = vrot.lane.b32.xlu0 %v1002, 64
    %v1005 = vpop.permute.xlu0 %1004
    %v1007 = vadd.f32 %v1001, %v1005
    %v1008 = vtanh.pop %v1007
    %v1009 = vmul.f32 %v999, %v1008
    %1011 = vrot.lane.b32.xlu0 %v1009, 64
    %v1012 = vpop.permute.xlu0 %1011
    %1014 = vst.msk [vmem:[#allocation2 + $0x28] sm:$0xff] %vm200, %v1012
    %v1015 = vld [vmem:[#allocation3 + $0x60] sm:$0xff]
    %v1016 = vld [vmem:[#allocation3 + $0x68] sm:$0xff]
    %v1017 = vsel %vm200, %v1012, 0
    %1019 = vmatprep.subr.mxu0 %v226
    %1020 = vmatpush1.msra.mxu0 %v225
    %1021 = vmatprep.subr.mxu0 %v228
    %1022 = vmatpush1.msra.mxu0 %v227
    %1023 = vmatprep.subr.mxu0 %v230
    %1024 = vmatpush1.msra.mxu0 %v229
    %1025 = vmatprep.subr.mxu0 %v232
    %1026 = vmatpush1.msra.mxu0 %v231
    %1027 = vmatprep.subr.mxu0 %v234
    %1028 = vmatpush1.msra.mxu0 %v233
    %1029 = vmatprep.subr.mxu0 %v236
    %1030 = vmatpush1.msra.mxu0 %v235
    %1031 = vmatprep.subr.mxu0 %v238
    %1032 = vmatpush1.msra.mxu0 %v237
    %1033 = vmatprep.subr.mxu0 %v240
    %1034 = vmatpush1.msra.mxu0 %v239
    %1035 = vmatprep.subr.mxu0 0.0
    %1036 = vmatpush1.msra.mxu0 0.0
    %1037 = vmatprep.subr.mxu0 0.0
    %1038 = vmatpush1.msra.mxu0 0.0
    %1039 = vmatprep.subr.mxu0 0.0
    %1040 = vmatpush1.msra.mxu0 0.0
    %1041 = vmatprep.subr.mxu0 0.0
    %1042 = vmatpush1.msra.mxu0 0.0
    %1043 = vmatprep.subr.mxu0 0.0
    %1044 = vmatpush1.msra.mxu0 0.0
    %1045 = vmatprep.subr.mxu0 0.0
    %1046 = vmatpush1.msra.mxu0 0.0
    %1047 = vmatprep.subr.mxu0 0.0
    %1048 = vmatpush1.msra.mxu0 0.0
    %1049 = vmatprep.subr.mxu0 0.0
    %1050 = vmatpush1.msra.mxu0 0.0
    %1051 = vmatprep.subr.mxu0 0.0
    %1052 = vmatpush1.msra.mxu0 0.0
    %1053 = vmatprep.subr.mxu0 0.0
    %1054 = vmatpush1.msra.mxu0 0.0
    %1055 = vmatprep.subr.mxu0 0.0
    %1056 = vmatpush1.msra.mxu0 0.0
    %1057 = vmatprep.subr.mxu0 0.0
    %1058 = vmatpush1.msra.mxu0 0.0
    %1059 = vmatprep.subr.mxu0 0.0
    %1060 = vmatpush1.msra.mxu0 0.0
    %1061 = vmatprep.subr.mxu0 0.0
    %1062 = vmatpush1.msra.mxu0 0.0
    %1063 = vmatprep.subr.mxu0 0.0
    %1064 = vmatpush1.msra.mxu0 0.0
    %1065 = vmatprep.subr.mxu0 0.0
    %1066 = vmatpush1.msra.mxu0 0.0
    %1067 = vmatprep.subr.mxu0 0.0
    %1068 = vmatpush1.msra.mxu0 0.0
    %1069 = vmatprep.subr.mxu0 0.0
    %1070 = vmatpush1.msra.mxu0 0.0
    %1071 = vmatprep.subr.mxu0 0.0
    %1072 = vmatpush1.msra.mxu0 0.0
    %1073 = vmatprep.subr.mxu0 0.0
    %1074 = vmatpush1.msra.mxu0 0.0
    %1075 = vmatprep.subr.mxu0 0.0
    %1076 = vmatpush1.msra.mxu0 0.0
    %1077 = vmatprep.subr.mxu0 0.0
    %1078 = vmatpush1.msra.mxu0 0.0
    %1079 = vmatprep.subr.mxu0 0.0
    %1080 = vmatpush1.msra.mxu0 0.0
    %1081 = vmatprep.subr.mxu0 0.0
    %1082 = vmatpush1.msra.mxu0 0.0
    %1083 = vmatprep.mubr.f32.mxu0 0.0
    %1084 = vmatmul.mubr.f32.gmra.mrb[0].mxu0 %v1017
    %v1085 = vpop.f32.mrb[0].mxu0
    %v1086 = vadd.f32 0.0, %v1085
    %v1087 = vpop.f32.mrb[0].mxu0
    %v1088 = vadd.f32 0.0, %v1087
    %1089 = vdwg.mxu0
    %v1090 = vadd.f32 %v1015, %v1086
    %v1091 = vadd.f32 %v1016, %v1088
    %v1092 = vmul.f32 %v1090, 0.5
    %v1093 = vmul.f32 %v1091, 0.5
    %v1094 = vtanh.pop %v1092
    %v1095 = vtanh.pop %v1093
    %v1096 = vmul.f32 %v1094, 0.5
    %v1097 = vmul.f32 %v1095, 0.5
    %v1098 = vadd.f32 %v1096, 0.5
    %v1099 = vadd.f32 %v1097, 0.5
    %v1100 = vtanh.pop %v1091
    %v1101 = vmul.f32 %v1098, %v1007
    %v1102 = vmul.f32 %v1098, %v1100
    %1104 = vrot.lane.b32.xlu0 %v1102, 64
    %v1105 = vpop.permute.xlu0 %1104
    %v1107 = vadd.f32 %v1101, %v1105
    %v1108 = vtanh.pop %v1107
    %v1109 = vmul.f32 %v1099, %v1108
    %1111 = vrot.lane.b32.xlu0 %v1109, 64
    %v1112 = vpop.permute.xlu0 %1111
    %1114 = vst.msk [vmem:[#allocation2 + $0x30] sm:$0xff] %vm200, %v1112
    %v1115 = vld [vmem:[#allocation3 + $0x70] sm:$0xff]
    %v1116 = vld [vmem:[#allocation3 + $0x78] sm:$0xff]
    %v1117 = vsel %vm200, %v1112, 0
    %1119 = vmatprep.subr.mxu0 %v226
    %1120 = vmatpush1.msra.mxu0 %v225
    %1121 = vmatprep.subr.mxu0 %v228
    %1122 = vmatpush1.msra.mxu0 %v227
    %1123 = vmatprep.subr.mxu0 %v230
    %1124 = vmatpush1.msra.mxu0 %v229
    %1125 = vmatprep.subr.mxu0 %v232
    %1126 = vmatpush1.msra.mxu0 %v231
    %1127 = vmatprep.subr.mxu0 %v234
    %1128 = vmatpush1.msra.mxu0 %v233
    %1129 = vmatprep.subr.mxu0 %v236
    %1130 = vmatpush1.msra.mxu0 %v235
    %1131 = vmatprep.subr.mxu0 %v238
    %1132 = vmatpush1.msra.mxu0 %v237
    %1133 = vmatprep.subr.mxu0 %v240
    %1134 = vmatpush1.msra.mxu0 %v239
    %1135 = vmatprep.subr.mxu0 0.0
    %1136 = vmatpush1.msra.mxu0 0.0
    %1137 = vmatprep.subr.mxu0 0.0
    %1138 = vmatpush1.msra.mxu0 0.0
    %1139 = vmatprep.subr.mxu0 0.0
    %1140 = vmatpush1.msra.mxu0 0.0
    %1141 = vmatprep.subr.mxu0 0.0
    %1142 = vmatpush1.msra.mxu0 0.0
    %1143 = vmatprep.subr.mxu0 0.0
    %1144 = vmatpush1.msra.mxu0 0.0
    %1145 = vmatprep.subr.mxu0 0.0
    %1146 = vmatpush1.msra.mxu0 0.0
    %1147 = vmatprep.subr.mxu0 0.0
    %1148 = vmatpush1.msra.mxu0 0.0
    %1149 = vmatprep.subr.mxu0 0.0
    %1150 = vmatpush1.msra.mxu0 0.0
    %1151 = vmatprep.subr.mxu0 0.0
    %1152 = vmatpush1.msra.mxu0 0.0
    %1153 = vmatprep.subr.mxu0 0.0
    %1154 = vmatpush1.msra.mxu0 0.0
    %1155 = vmatprep.subr.mxu0 0.0
    %1156 = vmatpush1.msra.mxu0 0.0
    %1157 = vmatprep.subr.mxu0 0.0
    %1158 = vmatpush1.msra.mxu0 0.0
    %1159 = vmatprep.subr.mxu0 0.0
    %1160 = vmatpush1.msra.mxu0 0.0
    %1161 = vmatprep.subr.mxu0 0.0
    %1162 = vmatpush1.msra.mxu0 0.0
    %1163 = vmatprep.subr.mxu0 0.0
    %1164 = vmatpush1.msra.mxu0 0.0
    %1165 = vmatprep.subr.mxu0 0.0
    %1166 = vmatpush1.msra.mxu0 0.0
    %1167 = vmatprep.subr.mxu0 0.0
    %1168 = vmatpush1.msra.mxu0 0.0
    %1169 = vmatprep.subr.mxu0 0.0
    %1170 = vmatpush1.msra.mxu0 0.0
    %1171 = vmatprep.subr.mxu0 0.0
    %1172 = vmatpush1.msra.mxu0 0.0
    %1173 = vmatprep.subr.mxu0 0.0
    %1174 = vmatpush1.msra.mxu0 0.0
    %1175 = vmatprep.subr.mxu0 0.0
    %1176 = vmatpush1.msra.mxu0 0.0
    %1177 = vmatprep.subr.mxu0 0.0
    %1178 = vmatpush1.msra.mxu0 0.0
    %1179 = vmatprep.subr.mxu0 0.0
    %1180 = vmatpush1.msra.mxu0 0.0
    %1181 = vmatprep.subr.mxu0 0.0
    %1182 = vmatpush1.msra.mxu0 0.0
    %1183 = vmatprep.mubr.f32.mxu0 0.0
    %1184 = vmatmul.mubr.f32.gmra.mrb[0].mxu0 %v1117
    %v1185 = vpop.f32.mrb[0].mxu0
    %v1186 = vadd.f32 0.0, %v1185
    %v1187 = vpop.f32.mrb[0].mxu0
    %v1188 = vadd.f32 0.0, %v1187
    %1189 = vdwg.mxu0
    %v1190 = vadd.f32 %v1115, %v1186
    %v1191 = vadd.f32 %v1116, %v1188
    %v1192 = vmul.f32 %v1190, 0.5
    %v1193 = vmul.f32 %v1191, 0.5
    %v1194 = vtanh.pop %v1192
    %v1195 = vtanh.pop %v1193
    %v1196 = vmul.f32 %v1194, 0.5
    %v1197 = vmul.f32 %v1195, 0.5
    %v1198 = vadd.f32 %v1196, 0.5
    %v1199 = vadd.f32 %v1197, 0.5
    %v1200 = vtanh.pop %v1191
    %v1201 = vmul.f32 %v1198, %v1107
    %v1202 = vmul.f32 %v1198, %v1200
    %1204 = vrot.lane.b32.xlu0 %v1202, 64
    %v1205 = vpop.permute.xlu0 %1204
    %v1207 = vadd.f32 %v1201, %v1205
    %v1208 = vtanh.pop %v1207
    %v1209 = vmul.f32 %v1199, %v1208
    %1211 = vrot.lane.b32.xlu0 %v1209, 64
    %v1212 = vpop.permute.xlu0 %1211
    %1214 = vst.msk [vmem:[#allocation2 + $0x38] sm:$0xff] %vm200, %v1212
    %s1215 = scalar_lea.vmem [#allocation4], 128
    %v1216 = vld [vmem:[%s1215] sm:$0xff]
    %v1217 = vld [vmem:[%s1215 + $0x8] sm:$0xff]
    %v1218 = vld [vmem:[%s1215 + $0x10] sm:$0xff]
    %v1219 = vld [vmem:[%s1215 + $0x18] sm:$0xff]
    %v1220 = vld [vmem:[%s1215 + $0x20] sm:$0xff]
    %v1221 = vld [vmem:[%s1215 + $0x28] sm:$0xff]
    %v1222 = vld [vmem:[%s1215 + $0x30] sm:$0xff]
    %v1223 = vld [vmem:[%s1215 + $0x38] sm:$0xff]
    %v1224 = vld [vmem:[%s1215 + $0x40] sm:$0xff]
    %v1225 = vld [vmem:[%s1215 + $0x48] sm:$0xff]
    %v1226 = vld [vmem:[%s1215 + $0x50] sm:$0xff]
    %v1227 = vld [vmem:[%s1215 + $0x58] sm:$0xff]
    %v1228 = vld [vmem:[%s1215 + $0x60] sm:$0xff]
    %v1229 = vld [vmem:[%s1215 + $0x68] sm:$0xff]
    %v1230 = vld [vmem:[%s1215 + $0x70] sm:$0xff]
    %v1231 = vld [vmem:[%s1215 + $0x78] sm:$0xff]
    %s1232 = scalar_lea.vmem [#allocation6], 128
    %v1233 = vld [vmem:[%s1232] sm:$0xff]
    %v1234 = vld [vmem:[%s1232 + $0x8] sm:$0xff]
    %v1235 = vld [vmem:[%s1232 + $0x10] sm:$0xff]
    %v1236 = vld [vmem:[%s1232 + $0x18] sm:$0xff]
    %v1237 = vld [vmem:[%s1232 + $0x20] sm:$0xff]
    %v1238 = vld [vmem:[%s1232 + $0x28] sm:$0xff]
    %v1239 = vld [vmem:[%s1232 + $0x30] sm:$0xff]
    %v1240 = vld [vmem:[%s1232 + $0x38] sm:$0xff]
    %v1241 = vld [vmem:[%s1232 + $0x40] sm:$0xff]
    %v1242 = vld [vmem:[%s1232 + $0x48] sm:$0xff]
    %v1243 = vld [vmem:[%s1232 + $0x50] sm:$0xff]
    %v1244 = vld [vmem:[%s1232 + $0x58] sm:$0xff]
    %v1245 = vld [vmem:[%s1232 + $0x60] sm:$0xff]
    %v1246 = vld [vmem:[%s1232 + $0x68] sm:$0xff]
    %v1247 = vld [vmem:[%s1232 + $0x70] sm:$0xff]
    %v1248 = vld [vmem:[%s1232 + $0x78] sm:$0xff]
    %s1249 = scalar_lea.vmem %s5, 2
    %v1250 = vld [vmem:[%s1249] sm:$0x3]
    %v1251 = vld [vmem:[#allocation2] sm:$0xff]
    %v1252 = vld [vmem:[#allocation2 + $0x8] sm:$0xff]
    %v1253 = vld [vmem:[#allocation2 + $0x10] sm:$0xff]
    %v1254 = vld [vmem:[#allocation2 + $0x18] sm:$0xff]
    %v1255 = vld [vmem:[#allocation2 + $0x20] sm:$0xff]
    %v1256 = vld [vmem:[#allocation2 + $0x28] sm:$0xff]
    %v1257 = vld [vmem:[#allocation2 + $0x30] sm:$0xff]
    %v1258 = vld [vmem:[#allocation2 + $0x38] sm:$0xff]
    %v1260 = vlaneseq
    %v1261 = vshrl.u32 %v1260, 7
    %v1262 = vsub.s32 0, %v1261
    %v1263 = vrot.slane %v1250, %v1262
    %v1264 = vlaneseq
    %v1265 = vshrl.u32 %v1264, 7
    %v1266 = vsub.s32 1, %v1265
    %v1267 = vrot.slane %v1250, %v1266
    %v1271 = vsel %vm200, %v1251, 0
    %v1274 = vsel %vm200, %v1252, 0
    %v1277 = vsel %vm200, %v1253, 0
    %v1280 = vsel %vm200, %v1254, 0
    %v1283 = vsel %vm200, %v1255, 0
    %v1286 = vsel %vm200, %v1256, 0
    %v1289 = vsel %vm200, %v1257, 0
    %v1292 = vsel %vm200, %v1258, 0
    %1294 = vmatprep.subr.mxu0 %v1217
    %1295 = vmatpush1.msra.mxu0 %v1216
    %1296 = vmatprep.subr.mxu0 %v1219
    %1297 = vmatpush1.msra.mxu0 %v1218
    %1298 = vmatprep.subr.mxu0 %v1221
    %1299 = vmatpush1.msra.mxu0 %v1220
    %1300 = vmatprep.subr.mxu0 %v1223
    %1301 = vmatpush1.msra.mxu0 %v1222
    %1302 = vmatprep.subr.mxu0 %v1225
    %1303 = vmatpush1.msra.mxu0 %v1224
    %1304 = vmatprep.subr.mxu0 %v1227
    %1305 = vmatpush1.msra.mxu0 %v1226
    %1306 = vmatprep.subr.mxu0 %v1229
    %1307 = vmatpush1.msra.mxu0 %v1228
    %1308 = vmatprep.subr.mxu0 %v1231
    %1309 = vmatpush1.msra.mxu0 %v1230
    %1310 = vmatprep.subr.mxu0 0.0
    %1311 = vmatpush1.msra.mxu0 0.0
    %1312 = vmatprep.subr.mxu0 0.0
    %1313 = vmatpush1.msra.mxu0 0.0
    %1314 = vmatprep.subr.mxu0 0.0
    %1315 = vmatpush1.msra.mxu0 0.0
    %1316 = vmatprep.subr.mxu0 0.0
    %1317 = vmatpush1.msra.mxu0 0.0
    %1318 = vmatprep.subr.mxu0 0.0
    %1319 = vmatpush1.msra.mxu0 0.0
    %1320 = vmatprep.subr.mxu0 0.0
    %1321 = vmatpush1.msra.mxu0 0.0
    %1322 = vmatprep.subr.mxu0 0.0
    %1323 = vmatpush1.msra.mxu0 0.0
    %1324 = vmatprep.subr.mxu0 0.0
    %1325 = vmatpush1.msra.mxu0 0.0
    %1326 = vmatprep.subr.mxu0 0.0
    %1327 = vmatpush1.msra.mxu0 0.0
    %1328 = vmatprep.subr.mxu0 0.0
    %1329 = vmatpush1.msra.mxu0 0.0
    %1330 = vmatprep.subr.mxu0 0.0
    %1331 = vmatpush1.msra.mxu0 0.0
    %1332 = vmatprep.subr.mxu0 0.0
    %1333 = vmatpush1.msra.mxu0 0.0
    %1334 = vmatprep.subr.mxu0 0.0
    %1335 = vmatpush1.msra.mxu0 0.0
    %1336 = vmatprep.subr.mxu0 0.0
    %1337 = vmatpush1.msra.mxu0 0.0
    %1338 = vmatprep.subr.mxu0 0.0
    %1339 = vmatpush1.msra.mxu0 0.0
    %1340 = vmatprep.subr.mxu0 0.0
    %1341 = vmatpush1.msra.mxu0 0.0
    %1342 = vmatprep.subr.mxu0 0.0
    %1343 = vmatpush1.msra.mxu0 0.0
    %1344 = vmatprep.subr.mxu0 0.0
    %1345 = vmatpush1.msra.mxu0 0.0
    %1346 = vmatprep.subr.mxu0 0.0
    %1347 = vmatpush1.msra.mxu0 0.0
    %1348 = vmatprep.subr.mxu0 0.0
    %1349 = vmatpush1.msra.mxu0 0.0
    %1350 = vmatprep.subr.mxu0 0.0
    %1351 = vmatpush1.msra.mxu0 0.0
    %1352 = vmatprep.subr.mxu0 0.0
    %1353 = vmatpush1.msra.mxu0 0.0
    %1354 = vmatprep.subr.mxu0 0.0
    %1355 = vmatpush1.msra.mxu0 0.0
    %1356 = vmatprep.subr.mxu0 0.0
    %1357 = vmatpush1.msra.mxu0 0.0
    %1358 = vmatprep.mubr.f32.mxu0 0.0
    %1359 = vmatmul.mubr.f32.gmra.mrb[0].mxu0 %v1271
    %v1360 = vpop.f32.mrb[0].mxu0
    %v1361 = vadd.f32 %v1263, %v1360
    %v1362 = vpop.f32.mrb[0].mxu0
    %v1363 = vadd.f32 %v1267, %v1362
    %1364 = vmatprep.mubr.f32.mxu0 0.0
    %1365 = vmatmul.mubr.f32.gmra.mrb[0].mxu0 %v1274
    %v1366 = vpop.f32.mrb[0].mxu0
    %v1367 = vadd.f32 %v1263, %v1366
    %v1368 = vpop.f32.mrb[0].mxu0
    %v1369 = vadd.f32 %v1267, %v1368
    %1370 = vmatprep.mubr.f32.mxu0 0.0
    %1371 = vmatmul.mubr.f32.gmra.mrb[0].mxu0 %v1277
    %v1372 = vpop.f32.mrb[0].mxu0
    %v1373 = vadd.f32 %v1263, %v1372
    %v1374 = vpop.f32.mrb[0].mxu0
    %v1375 = vadd.f32 %v1267, %v1374
    %1376 = vmatprep.mubr.f32.mxu0 0.0
    %1377 = vmatmul.mubr.f32.gmra.mrb[0].mxu0 %v1280
    %v1378 = vpop.f32.mrb[0].mxu0
    %v1379 = vadd.f32 %v1263, %v1378
    %v1380 = vpop.f32.mrb[0].mxu0
    %v1381 = vadd.f32 %v1267, %v1380
    %1382 = vmatprep.mubr.f32.mxu0 0.0
    %1383 = vmatmul.mubr.f32.gmra.mrb[0].mxu0 %v1283
    %v1384 = vpop.f32.mrb[0].mxu0
    %v1385 = vadd.f32 %v1263, %v1384
    %v1386 = vpop.f32.mrb[0].mxu0
    %v1387 = vadd.f32 %v1267, %v1386
    %1388 = vmatprep.mubr.f32.mxu0 0.0
    %1389 = vmatmul.mubr.f32.gmra.mrb[0].mxu0 %v1286
    %v1390 = vpop.f32.mrb[0].mxu0
    %v1391 = vadd.f32 %v1263, %v1390
    %v1392 = vpop.f32.mrb[0].mxu0
    %v1393 = vadd.f32 %v1267, %v1392
    %1394 = vmatprep.mubr.f32.mxu0 0.0
    %1395 = vmatmul.mubr.f32.gmra.mrb[0].mxu0 %v1289
    %v1396 = vpop.f32.mrb[0].mxu0
    %v1397 = vadd.f32 %v1263, %v1396
    %v1398 = vpop.f32.mrb[0].mxu0
    %v1399 = vadd.f32 %v1267, %v1398
    %1400 = vmatprep.mubr.f32.mxu0 0.0
    %1401 = vmatmul.mubr.f32.gmra.mrb[0].mxu0 %v1292
    %v1402 = vpop.f32.mrb[0].mxu0
    %v1403 = vadd.f32 %v1263, %v1402
    %v1404 = vpop.f32.mrb[0].mxu0
    %v1405 = vadd.f32 %v1267, %v1404
    %1406 = vdwg.mxu0
    %1407 = vst [vmem:[#allocation3] sm:$0xff] %v1361
    %1408 = vst [vmem:[#allocation3 + $0x8] sm:$0xff] %v1363
    %1409 = vst [vmem:[#allocation3 + $0x10] sm:$0xff] %v1367
    %1410 = vst [vmem:[#allocation3 + $0x18] sm:$0xff] %v1369
    %1411 = vst [vmem:[#allocation3 + $0x20] sm:$0xff] %v1373
    %1412 = vst [vmem:[#allocation3 + $0x28] sm:$0xff] %v1375
    %1413 = vst [vmem:[#allocation3 + $0x30] sm:$0xff] %v1379
    %1414 = vst [vmem:[#allocation3 + $0x38] sm:$0xff] %v1381
    %1415 = vst [vmem:[#allocation3 + $0x40] sm:$0xff] %v1385
    %1416 = vst [vmem:[#allocation3 + $0x48] sm:$0xff] %v1387
    %1417 = vst [vmem:[#allocation3 + $0x50] sm:$0xff] %v1391
    %1418 = vst [vmem:[#allocation3 + $0x58] sm:$0xff] %v1393
    %1419 = vst [vmem:[#allocation3 + $0x60] sm:$0xff] %v1397
    %1420 = vst [vmem:[#allocation3 + $0x68] sm:$0xff] %v1399
    %1421 = vst [vmem:[#allocation3 + $0x70] sm:$0xff] %v1403
    %1422 = vst [vmem:[#allocation3 + $0x78] sm:$0xff] %v1405
    %v1423 = vld [vmem:[#allocation3] sm:$0xff]
    %v1424 = vld [vmem:[#allocation3 + $0x8] sm:$0xff]
    %1425 = vmatprep.subr.mxu0 %v1234
    %1426 = vmatpush1.msra.mxu0 %v1233
    %1427 = vmatprep.subr.mxu0 %v1236
    %1428 = vmatpush1.msra.mxu0 %v1235
    %1429 = vmatprep.subr.mxu0 %v1238
    %1430 = vmatpush1.msra.mxu0 %v1237
    %1431 = vmatprep.subr.mxu0 %v1240
    %1432 = vmatpush1.msra.mxu0 %v1239
    %1433 = vmatprep.subr.mxu0 %v1242
    %1434 = vmatpush1.msra.mxu0 %v1241
    %1435 = vmatprep.subr.mxu0 %v1244
    %1436 = vmatpush1.msra.mxu0 %v1243
    %1437 = vmatprep.subr.mxu0 %v1246
    %1438 = vmatpush1.msra.mxu0 %v1245
    %1439 = vmatprep.subr.mxu0 %v1248
    %1440 = vmatpush1.msra.mxu0 %v1247
    %1441 = vmatprep.subr.mxu0 0.0
    %1442 = vmatpush1.msra.mxu0 0.0
    %1443 = vmatprep.subr.mxu0 0.0
    %1444 = vmatpush1.msra.mxu0 0.0
    %1445 = vmatprep.subr.mxu0 0.0
    %1446 = vmatpush1.msra.mxu0 0.0
    %1447 = vmatprep.subr.mxu0 0.0
    %1448 = vmatpush1.msra.mxu0 0.0
    %1449 = vmatprep.subr.mxu0 0.0
    %1450 = vmatpush1.msra.mxu0 0.0
    %1451 = vmatprep.subr.mxu0 0.0
    %1452 = vmatpush1.msra.mxu0 0.0
    %1453 = vmatprep.subr.mxu0 0.0
    %1454 = vmatpush1.msra.mxu0 0.0
    %1455 = vmatprep.subr.mxu0 0.0
    %1456 = vmatpush1.msra.mxu0 0.0
    %1457 = vmatprep.subr.mxu0 0.0
    %1458 = vmatpush1.msra.mxu0 0.0
    %1459 = vmatprep.subr.mxu0 0.0
    %1460 = vmatpush1.msra.mxu0 0.0
    %1461 = vmatprep.subr.mxu0 0.0
    %1462 = vmatpush1.msra.mxu0 0.0
    %1463 = vmatprep.subr.mxu0 0.0
    %1464 = vmatpush1.msra.mxu0 0.0
    %1465 = vmatprep.subr.mxu0 0.0
    %1466 = vmatpush1.msra.mxu0 0.0
    %1467 = vmatprep.subr.mxu0 0.0
    %1468 = vmatpush1.msra.mxu0 0.0
    %1469 = vmatprep.subr.mxu0 0.0
    %1470 = vmatpush1.msra.mxu0 0.0
    %1471 = vmatprep.subr.mxu0 0.0
    %1472 = vmatpush1.msra.mxu0 0.0
    %1473 = vmatprep.subr.mxu0 0.0
    %1474 = vmatpush1.msra.mxu0 0.0
    %1475 = vmatprep.subr.mxu0 0.0
    %1476 = vmatpush1.msra.mxu0 0.0
    %1477 = vmatprep.subr.mxu0 0.0
    %1478 = vmatpush1.msra.mxu0 0.0
    %1479 = vmatprep.subr.mxu0 0.0
    %1480 = vmatpush1.msra.mxu0 0.0
    %1481 = vmatprep.subr.mxu0 0.0
    %1482 = vmatpush1.msra.mxu0 0.0
    %1483 = vmatprep.subr.mxu0 0.0
    %1484 = vmatpush1.msra.mxu0 0.0
    %1485 = vmatprep.subr.mxu0 0.0
    %1486 = vmatpush1.msra.mxu0 0.0
    %1487 = vmatprep.subr.mxu0 0.0
    %1488 = vmatpush1.msra.mxu0 0.0
    %1489 = vmatprep.mubr.f32.mxu0 0.0
    %1490 = vmatmul.mubr.f32.gmra.mrb[0].mxu0 %v417
    %v1491 = vpop.f32.mrb[0].mxu0
    %v1492 = vadd.f32 0.0, %v1491
    %v1493 = vpop.f32.mrb[0].mxu0
    %v1494 = vadd.f32 0.0, %v1493
    %1495 = vdwg.mxu0
    %v1496 = vadd.f32 %v1423, %v1492
    %v1497 = vadd.f32 %v1424, %v1494
    %v1498 = vmul.f32 %v1496, 0.5
    %v1499 = vmul.f32 %v1497, 0.5
    %v1500 = vtanh.pop %v1498
    %v1501 = vtanh.pop %v1499
    %v1502 = vmul.f32 %v1500, 0.5
    %v1503 = vmul.f32 %v1501, 0.5
    %v1504 = vadd.f32 %v1502, 0.5
    %v1505 = vadd.f32 %v1503, 0.5
    %v1506 = vtanh.pop %v1497
    %v1507 = vmul.f32 %v1504, 0.0
    %v1508 = vmul.f32 %v1504, %v1506
    %1510 = vrot.lane.b32.xlu0 %v1508, 64
    %v1511 = vpop.permute.xlu0 %1510
    %v1513 = vadd.f32 %v1507, %v1511
    %v1514 = vtanh.pop %v1513
    %v1515 = vmul.f32 %v1505, %v1514
    %1517 = vrot.lane.b32.xlu0 %v1515, 64
    %v1518 = vpop.permute.xlu0 %1517
    %1520 = vst.msk [vmem:[%s6] sm:$0xff] %vm200, %v1518
    %v1521 = vld [vmem:[#allocation3 + $0x10] sm:$0xff]
    %v1522 = vld [vmem:[#allocation3 + $0x18] sm:$0xff]
    %v1523 = vsel %vm200, %v1518, 0
    %1525 = vmatprep.subr.mxu0 %v1234
    %1526 = vmatpush1.msra.mxu0 %v1233
    %1527 = vmatprep.subr.mxu0 %v1236
    %1528 = vmatpush1.msra.mxu0 %v1235
    %1529 = vmatprep.subr.mxu0 %v1238
    %1530 = vmatpush1.msra.mxu0 %v1237
    %1531 = vmatprep.subr.mxu0 %v1240
    %1532 = vmatpush1.msra.mxu0 %v1239
    %1533 = vmatprep.subr.mxu0 %v1242
    %1534 = vmatpush1.msra.mxu0 %v1241
    %1535 = vmatprep.subr.mxu0 %v1244
    %1536 = vmatpush1.msra.mxu0 %v1243
    %1537 = vmatprep.subr.mxu0 %v1246
    %1538 = vmatpush1.msra.mxu0 %v1245
    %1539 = vmatprep.subr.mxu0 %v1248
    %1540 = vmatpush1.msra.mxu0 %v1247
    %1541 = vmatprep.subr.mxu0 0.0
    %1542 = vmatpush1.msra.mxu0 0.0
    %1543 = vmatprep.subr.mxu0 0.0
    %1544 = vmatpush1.msra.mxu0 0.0
    %1545 = vmatprep.subr.mxu0 0.0
    %1546 = vmatpush1.msra.mxu0 0.0
    %1547 = vmatprep.subr.mxu0 0.0
    %1548 = vmatpush1.msra.mxu0 0.0
    %1549 = vmatprep.subr.mxu0 0.0
    %1550 = vmatpush1.msra.mxu0 0.0
    %1551 = vmatprep.subr.mxu0 0.0
    %1552 = vmatpush1.msra.mxu0 0.0
    %1553 = vmatprep.subr.mxu0 0.0
    %1554 = vmatpush1.msra.mxu0 0.0
    %1555 = vmatprep.subr.mxu0 0.0
    %1556 = vmatpush1.msra.mxu0 0.0
    %1557 = vmatprep.subr.mxu0 0.0
    %1558 = vmatpush1.msra.mxu0 0.0
    %1559 = vmatprep.subr.mxu0 0.0
    %1560 = vmatpush1.msra.mxu0 0.0
    %1561 = vmatprep.subr.mxu0 0.0
    %1562 = vmatpush1.msra.mxu0 0.0
    %1563 = vmatprep.subr.mxu0 0.0
    %1564 = vmatpush1.msra.mxu0 0.0
    %1565 = vmatprep.subr.mxu0 0.0
    %1566 = vmatpush1.msra.mxu0 0.0
    %1567 = vmatprep.subr.mxu0 0.0
    %1568 = vmatpush1.msra.mxu0 0.0
    %1569 = vmatprep.subr.mxu0 0.0
    %1570 = vmatpush1.msra.mxu0 0.0
    %1571 = vmatprep.subr.mxu0 0.0
    %1572 = vmatpush1.msra.mxu0 0.0
    %1573 = vmatprep.subr.mxu0 0.0
    %1574 = vmatpush1.msra.mxu0 0.0
    %1575 = vmatprep.subr.mxu0 0.0
    %1576 = vmatpush1.msra.mxu0 0.0
    %1577 = vmatprep.subr.mxu0 0.0
    %1578 = vmatpush1.msra.mxu0 0.0
    %1579 = vmatprep.subr.mxu0 0.0
    %1580 = vmatpush1.msra.mxu0 0.0
    %1581 = vmatprep.subr.mxu0 0.0
    %1582 = vmatpush1.msra.mxu0 0.0
    %1583 = vmatprep.subr.mxu0 0.0
    %1584 = vmatpush1.msra.mxu0 0.0
    %1585 = vmatprep.subr.mxu0 0.0
    %1586 = vmatpush1.msra.mxu0 0.0
    %1587 = vmatprep.subr.mxu0 0.0
    %1588 = vmatpush1.msra.mxu0 0.0
    %1589 = vmatprep.mubr.f32.mxu0 0.0
    %1590 = vmatmul.mubr.f32.gmra.mrb[0].mxu0 %v1523
    %v1591 = vpop.f32.mrb[0].mxu0
    %v1592 = vadd.f32 0.0, %v1591
    %v1593 = vpop.f32.mrb[0].mxu0
    %v1594 = vadd.f32 0.0, %v1593
    %1595 = vdwg.mxu0
    %v1596 = vadd.f32 %v1521, %v1592
    %v1597 = vadd.f32 %v1522, %v1594
    %v1598 = vmul.f32 %v1596, 0.5
    %v1599 = vmul.f32 %v1597, 0.5
    %v1600 = vtanh.pop %v1598
    %v1601 = vtanh.pop %v1599
    %v1602 = vmul.f32 %v1600, 0.5
    %v1603 = vmul.f32 %v1601, 0.5
    %v1604 = vadd.f32 %v1602, 0.5
    %v1605 = vadd.f32 %v1603, 0.5
    %v1606 = vtanh.pop %v1597
    %v1607 = vmul.f32 %v1604, %v1513
    %v1608 = vmul.f32 %v1604, %v1606
    %1610 = vrot.lane.b32.xlu0 %v1608, 64
    %v1611 = vpop.permute.xlu0 %1610
    %v1613 = vadd.f32 %v1607, %v1611
    %v1614 = vtanh.pop %v1613
    %v1615 = vmul.f32 %v1605, %v1614
    %1617 = vrot.lane.b32.xlu0 %v1615, 64
    %v1618 = vpop.permute.xlu0 %1617
    %s1620 = scalar_lea.vmem %s6, 8
    %1621 = vst.msk [vmem:[%s1620] sm:$0xff] %vm200, %v1618
    %v1622 = vld [vmem:[#allocation3 + $0x20] sm:$0xff]
    %v1623 = vld [vmem:[#allocation3 + $0x28] sm:$0xff]
    %v1624 = vsel %vm200, %v1618, 0
    %1626 = vmatprep.subr.mxu0 %v1234
    %1627 = vmatpush1.msra.mxu0 %v1233
    %1628 = vmatprep.subr.mxu0 %v1236
    %1629 = vmatpush1.msra.mxu0 %v1235
    %1630 = vmatprep.subr.mxu0 %v1238
    %1631 = vmatpush1.msra.mxu0 %v1237
    %1632 = vmatprep.subr.mxu0 %v1240
    %1633 = vmatpush1.msra.mxu0 %v1239
    %1634 = vmatprep.subr.mxu0 %v1242
    %1635 = vmatpush1.msra.mxu0 %v1241
    %1636 = vmatprep.subr.mxu0 %v1244
    %1637 = vmatpush1.msra.mxu0 %v1243
    %1638 = vmatprep.subr.mxu0 %v1246
    %1639 = vmatpush1.msra.mxu0 %v1245
    %1640 = vmatprep.subr.mxu0 %v1248
    %1641 = vmatpush1.msra.mxu0 %v1247
    %1642 = vmatprep.subr.mxu0 0.0
    %1643 = vmatpush1.msra.mxu0 0.0
    %1644 = vmatprep.subr.mxu0 0.0
    %1645 = vmatpush1.msra.mxu0 0.0
    %1646 = vmatprep.subr.mxu0 0.0
    %1647 = vmatpush1.msra.mxu0 0.0
    %1648 = vmatprep.subr.mxu0 0.0
    %1649 = vmatpush1.msra.mxu0 0.0
    %1650 = vmatprep.subr.mxu0 0.0
    %1651 = vmatpush1.msra.mxu0 0.0
    %1652 = vmatprep.subr.mxu0 0.0
    %1653 = vmatpush1.msra.mxu0 0.0
    %1654 = vmatprep.subr.mxu0 0.0
    %1655 = vmatpush1.msra.mxu0 0.0
    %1656 = vmatprep.subr.mxu0 0.0
    %1657 = vmatpush1.msra.mxu0 0.0
    %1658 = vmatprep.subr.mxu0 0.0
    %1659 = vmatpush1.msra.mxu0 0.0
    %1660 = vmatprep.subr.mxu0 0.0
    %1661 = vmatpush1.msra.mxu0 0.0
    %1662 = vmatprep.subr.mxu0 0.0
    %1663 = vmatpush1.msra.mxu0 0.0
    %1664 = vmatprep.subr.mxu0 0.0
    %1665 = vmatpush1.msra.mxu0 0.0
    %1666 = vmatprep.subr.mxu0 0.0
    %1667 = vmatpush1.msra.mxu0 0.0
    %1668 = vmatprep.subr.mxu0 0.0
    %1669 = vmatpush1.msra.mxu0 0.0
    %1670 = vmatprep.subr.mxu0 0.0
    %1671 = vmatpush1.msra.mxu0 0.0
    %1672 = vmatprep.subr.mxu0 0.0
    %1673 = vmatpush1.msra.mxu0 0.0
    %1674 = vmatprep.subr.mxu0 0.0
    %1675 = vmatpush1.msra.mxu0 0.0
    %1676 = vmatprep.subr.mxu0 0.0
    %1677 = vmatpush1.msra.mxu0 0.0
    %1678 = vmatprep.subr.mxu0 0.0
    %1679 = vmatpush1.msra.mxu0 0.0
    %1680 = vmatprep.subr.mxu0 0.0
    %1681 = vmatpush1.msra.mxu0 0.0
    %1682 = vmatprep.subr.mxu0 0.0
    %1683 = vmatpush1.msra.mxu0 0.0
    %1684 = vmatprep.subr.mxu0 0.0
    %1685 = vmatpush1.msra.mxu0 0.0
    %1686 = vmatprep.subr.mxu0 0.0
    %1687 = vmatpush1.msra.mxu0 0.0
    %1688 = vmatprep.subr.mxu0 0.0
    %1689 = vmatpush1.msra.mxu0 0.0
    %1690 = vmatprep.mubr.f32.mxu0 0.0
    %1691 = vmatmul.mubr.f32.gmra.mrb[0].mxu0 %v1624
    %v1692 = vpop.f32.mrb[0].mxu0
    %v1693 = vadd.f32 0.0, %v1692
    %v1694 = vpop.f32.mrb[0].mxu0
    %v1695 = vadd.f32 0.0, %v1694
    %1696 = vdwg.mxu0
    %v1697 = vadd.f32 %v1622, %v1693
    %v1698 = vadd.f32 %v1623, %v1695
    %v1699 = vmul.f32 %v1697, 0.5
    %v1700 = vmul.f32 %v1698, 0.5
    %v1701 = vtanh.pop %v1699
    %v1702 = vtanh.pop %v1700
    %v1703 = vmul.f32 %v1701, 0.5
    %v1704 = vmul.f32 %v1702, 0.5
    %v1705 = vadd.f32 %v1703, 0.5
    %v1706 = vadd.f32 %v1704, 0.5
    %v1707 = vtanh.pop %v1698
    %v1708 = vmul.f32 %v1705, %v1613
    %v1709 = vmul.f32 %v1705, %v1707
    %1711 = vrot.lane.b32.xlu0 %v1709, 64
    %v1712 = vpop.permute.xlu0 %1711
    %v1714 = vadd.f32 %v1708, %v1712
    %v1715 = vtanh.pop %v1714
    %v1716 = vmul.f32 %v1706, %v1715
    %1718 = vrot.lane.b32.xlu0 %v1716, 64
    %v1719 = vpop.permute.xlu0 %1718
    %s1721 = scalar_lea.vmem %s6, 16
    %1722 = vst.msk [vmem:[%s1721] sm:$0xff] %vm200, %v1719
    %v1723 = vld [vmem:[#allocation3 + $0x30] sm:$0xff]
    %v1724 = vld [vmem:[#allocation3 + $0x38] sm:$0xff]
    %v1725 = vsel %vm200, %v1719, 0
    %1727 = vmatprep.subr.mxu0 %v1234
    %1728 = vmatpush1.msra.mxu0 %v1233
    %1729 = vmatprep.subr.mxu0 %v1236
    %1730 = vmatpush1.msra.mxu0 %v1235
    %1731 = vmatprep.subr.mxu0 %v1238
    %1732 = vmatpush1.msra.mxu0 %v1237
    %1733 = vmatprep.subr.mxu0 %v1240
    %1734 = vmatpush1.msra.mxu0 %v1239
    %1735 = vmatprep.subr.mxu0 %v1242
    %1736 = vmatpush1.msra.mxu0 %v1241
    %1737 = vmatprep.subr.mxu0 %v1244
    %1738 = vmatpush1.msra.mxu0 %v1243
    %1739 = vmatprep.subr.mxu0 %v1246
    %1740 = vmatpush1.msra.mxu0 %v1245
    %1741 = vmatprep.subr.mxu0 %v1248
    %1742 = vmatpush1.msra.mxu0 %v1247
    %1743 = vmatprep.subr.mxu0 0.0
    %1744 = vmatpush1.msra.mxu0 0.0
    %1745 = vmatprep.subr.mxu0 0.0
    %1746 = vmatpush1.msra.mxu0 0.0
    %1747 = vmatprep.subr.mxu0 0.0
    %1748 = vmatpush1.msra.mxu0 0.0
    %1749 = vmatprep.subr.mxu0 0.0
    %1750 = vmatpush1.msra.mxu0 0.0
    %1751 = vmatprep.subr.mxu0 0.0
    %1752 = vmatpush1.msra.mxu0 0.0
    %1753 = vmatprep.subr.mxu0 0.0
    %1754 = vmatpush1.msra.mxu0 0.0
    %1755 = vmatprep.subr.mxu0 0.0
    %1756 = vmatpush1.msra.mxu0 0.0
    %1757 = vmatprep.subr.mxu0 0.0
    %1758 = vmatpush1.msra.mxu0 0.0
    %1759 = vmatprep.subr.mxu0 0.0
    %1760 = vmatpush1.msra.mxu0 0.0
    %1761 = vmatprep.subr.mxu0 0.0
    %1762 = vmatpush1.msra.mxu0 0.0
    %1763 = vmatprep.subr.mxu0 0.0
    %1764 = vmatpush1.msra.mxu0 0.0
    %1765 = vmatprep.subr.mxu0 0.0
    %1766 = vmatpush1.msra.mxu0 0.0
    %1767 = vmatprep.subr.mxu0 0.0
    %1768 = vmatpush1.msra.mxu0 0.0
    %1769 = vmatprep.subr.mxu0 0.0
    %1770 = vmatpush1.msra.mxu0 0.0
    %1771 = vmatprep.subr.mxu0 0.0
    %1772 = vmatpush1.msra.mxu0 0.0
    %1773 = vmatprep.subr.mxu0 0.0
    %1774 = vmatpush1.msra.mxu0 0.0
    %1775 = vmatprep.subr.mxu0 0.0
    %1776 = vmatpush1.msra.mxu0 0.0
    %1777 = vmatprep.subr.mxu0 0.0
    %1778 = vmatpush1.msra.mxu0 0.0
    %1779 = vmatprep.subr.mxu0 0.0
    %1780 = vmatpush1.msra.mxu0 0.0
    %1781 = vmatprep.subr.mxu0 0.0
    %1782 = vmatpush1.msra.mxu0 0.0
    %1783 = vmatprep.subr.mxu0 0.0
    %1784 = vmatpush1.msra.mxu0 0.0
    %1785 = vmatprep.subr.mxu0 0.0
    %1786 = vmatpush1.msra.mxu0 0.0
    %1787 = vmatprep.subr.mxu0 0.0
    %1788 = vmatpush1.msra.mxu0 0.0
    %1789 = vmatprep.subr.mxu0 0.0
    %1790 = vmatpush1.msra.mxu0 0.0
    %1791 = vmatprep.mubr.f32.mxu0 0.0
    %1792 = vmatmul.mubr.f32.gmra.mrb[0].mxu0 %v1725
    %v1793 = vpop.f32.mrb[0].mxu0
    %v1794 = vadd.f32 0.0, %v1793
    %v1795 = vpop.f32.mrb[0].mxu0
    %v1796 = vadd.f32 0.0, %v1795
    %1797 = vdwg.mxu0
    %v1798 = vadd.f32 %v1723, %v1794
    %v1799 = vadd.f32 %v1724, %v1796
    %v1800 = vmul.f32 %v1798, 0.5
    %v1801 = vmul.f32 %v1799, 0.5
    %v1802 = vtanh.pop %v1800
    %v1803 = vtanh.pop %v1801
    %v1804 = vmul.f32 %v1802, 0.5
    %v1805 = vmul.f32 %v1803, 0.5
    %v1806 = vadd.f32 %v1804, 0.5
    %v1807 = vadd.f32 %v1805, 0.5
    %v1808 = vtanh.pop %v1799
    %v1809 = vmul.f32 %v1806, %v1714
    %v1810 = vmul.f32 %v1806, %v1808
    %1812 = vrot.lane.b32.xlu0 %v1810, 64
    %v1813 = vpop.permute.xlu0 %1812
    %v1815 = vadd.f32 %v1809, %v1813
    %v1816 = vtanh.pop %v1815
    %v1817 = vmul.f32 %v1807, %v1816
    %1819 = vrot.lane.b32.xlu0 %v1817, 64
    %v1820 = vpop.permute.xlu0 %1819
    %s1822 = scalar_lea.vmem %s6, 24
    %1823 = vst.msk [vmem:[%s1822] sm:$0xff] %vm200, %v1820
    %v1824 = vld [vmem:[#allocation3 + $0x40] sm:$0xff]
    %v1825 = vld [vmem:[#allocation3 + $0x48] sm:$0xff]
    %v1826 = vsel %vm200, %v1820, 0
    %1828 = vmatprep.subr.mxu0 %v1234
    %1829 = vmatpush1.msra.mxu0 %v1233
    %1830 = vmatprep.subr.mxu0 %v1236
    %1831 = vmatpush1.msra.mxu0 %v1235
    %1832 = vmatprep.subr.mxu0 %v1238
    %1833 = vmatpush1.msra.mxu0 %v1237
    %1834 = vmatprep.subr.mxu0 %v1240
    %1835 = vmatpush1.msra.mxu0 %v1239
    %1836 = vmatprep.subr.mxu0 %v1242
    %1837 = vmatpush1.msra.mxu0 %v1241
    %1838 = vmatprep.subr.mxu0 %v1244
    %1839 = vmatpush1.msra.mxu0 %v1243
    %1840 = vmatprep.subr.mxu0 %v1246
    %1841 = vmatpush1.msra.mxu0 %v1245
    %1842 = vmatprep.subr.mxu0 %v1248
    %1843 = vmatpush1.msra.mxu0 %v1247
    %1844 = vmatprep.subr.mxu0 0.0
    %1845 = vmatpush1.msra.mxu0 0.0
    %1846 = vmatprep.subr.mxu0 0.0
    %1847 = vmatpush1.msra.mxu0 0.0
    %1848 = vmatprep.subr.mxu0 0.0
    %1849 = vmatpush1.msra.mxu0 0.0
    %1850 = vmatprep.subr.mxu0 0.0
    %1851 = vmatpush1.msra.mxu0 0.0
    %1852 = vmatprep.subr.mxu0 0.0
    %1853 = vmatpush1.msra.mxu0 0.0
    %1854 = vmatprep.subr.mxu0 0.0
    %1855 = vmatpush1.msra.mxu0 0.0
    %1856 = vmatprep.subr.mxu0 0.0
    %1857 = vmatpush1.msra.mxu0 0.0
    %1858 = vmatprep.subr.mxu0 0.0
    %1859 = vmatpush1.msra.mxu0 0.0
    %1860 = vmatprep.subr.mxu0 0.0
    %1861 = vmatpush1.msra.mxu0 0.0
    %1862 = vmatprep.subr.mxu0 0.0
    %1863 = vmatpush1.msra.mxu0 0.0
    %1864 = vmatprep.subr.mxu0 0.0
    %1865 = vmatpush1.msra.mxu0 0.0
    %1866 = vmatprep.subr.mxu0 0.0
    %1867 = vmatpush1.msra.mxu0 0.0
    %1868 = vmatprep.subr.mxu0 0.0
    %1869 = vmatpush1.msra.mxu0 0.0
    %1870 = vmatprep.subr.mxu0 0.0
    %1871 = vmatpush1.msra.mxu0 0.0
    %1872 = vmatprep.subr.mxu0 0.0
    %1873 = vmatpush1.msra.mxu0 0.0
    %1874 = vmatprep.subr.mxu0 0.0
    %1875 = vmatpush1.msra.mxu0 0.0
    %1876 = vmatprep.subr.mxu0 0.0
    %1877 = vmatpush1.msra.mxu0 0.0
    %1878 = vmatprep.subr.mxu0 0.0
    %1879 = vmatpush1.msra.mxu0 0.0
    %1880 = vmatprep.subr.mxu0 0.0
    %1881 = vmatpush1.msra.mxu0 0.0
    %1882 = vmatprep.subr.mxu0 0.0
    %1883 = vmatpush1.msra.mxu0 0.0
    %1884 = vmatprep.subr.mxu0 0.0
    %1885 = vmatpush1.msra.mxu0 0.0
    %1886 = vmatprep.subr.mxu0 0.0
    %1887 = vmatpush1.msra.mxu0 0.0
    %1888 = vmatprep.subr.mxu0 0.0
    %1889 = vmatpush1.msra.mxu0 0.0
    %1890 = vmatprep.subr.mxu0 0.0
    %1891 = vmatpush1.msra.mxu0 0.0
    %1892 = vmatprep.mubr.f32.mxu0 0.0
    %1893 = vmatmul.mubr.f32.gmra.mrb[0].mxu0 %v1826
    %v1894 = vpop.f32.mrb[0].mxu0
    %v1895 = vadd.f32 0.0, %v1894
    %v1896 = vpop.f32.mrb[0].mxu0
    %v1897 = vadd.f32 0.0, %v1896
    %1898 = vdwg.mxu0
    %v1899 = vadd.f32 %v1824, %v1895
    %v1900 = vadd.f32 %v1825, %v1897
    %v1901 = vmul.f32 %v1899, 0.5
    %v1902 = vmul.f32 %v1900, 0.5
    %v1903 = vtanh.pop %v1901
    %v1904 = vtanh.pop %v1902
    %v1905 = vmul.f32 %v1903, 0.5
    %v1906 = vmul.f32 %v1904, 0.5
    %v1907 = vadd.f32 %v1905, 0.5
    %v1908 = vadd.f32 %v1906, 0.5
    %v1909 = vtanh.pop %v1900
    %v1910 = vmul.f32 %v1907, %v1815
    %v1911 = vmul.f32 %v1907, %v1909
    %1913 = vrot.lane.b32.xlu0 %v1911, 64
    %v1914 = vpop.permute.xlu0 %1913
    %v1916 = vadd.f32 %v1910, %v1914
    %v1917 = vtanh.pop %v1916
    %v1918 = vmul.f32 %v1908, %v1917
    %1920 = vrot.lane.b32.xlu0 %v1918, 64
    %v1921 = vpop.permute.xlu0 %1920
    %s1923 = scalar_lea.vmem %s6, 32
    %1924 = vst.msk [vmem:[%s1923] sm:$0xff] %vm200, %v1921
    %v1925 = vld [vmem:[#allocation3 + $0x50] sm:$0xff]
    %v1926 = vld [vmem:[#allocation3 + $0x58] sm:$0xff]
    %v1927 = vsel %vm200, %v1921, 0
    %1929 = vmatprep.subr.mxu0 %v1234
    %1930 = vmatpush1.msra.mxu0 %v1233
    %1931 = vmatprep.subr.mxu0 %v1236
    %1932 = vmatpush1.msra.mxu0 %v1235
    %1933 = vmatprep.subr.mxu0 %v1238
    %1934 = vmatpush1.msra.mxu0 %v1237
    %1935 = vmatprep.subr.mxu0 %v1240
    %1936 = vmatpush1.msra.mxu0 %v1239
    %1937 = vmatprep.subr.mxu0 %v1242
    %1938 = vmatpush1.msra.mxu0 %v1241
    %1939 = vmatprep.subr.mxu0 %v1244
    %1940 = vmatpush1.msra.mxu0 %v1243
    %1941 = vmatprep.subr.mxu0 %v1246
    %1942 = vmatpush1.msra.mxu0 %v1245
    %1943 = vmatprep.subr.mxu0 %v1248
    %1944 = vmatpush1.msra.mxu0 %v1247
    %1945 = vmatprep.subr.mxu0 0.0
    %1946 = vmatpush1.msra.mxu0 0.0
    %1947 = vmatprep.subr.mxu0 0.0
    %1948 = vmatpush1.msra.mxu0 0.0
    %1949 = vmatprep.subr.mxu0 0.0
    %1950 = vmatpush1.msra.mxu0 0.0
    %1951 = vmatprep.subr.mxu0 0.0
    %1952 = vmatpush1.msra.mxu0 0.0
    %1953 = vmatprep.subr.mxu0 0.0
    %1954 = vmatpush1.msra.mxu0 0.0
    %1955 = vmatprep.subr.mxu0 0.0
    %1956 = vmatpush1.msra.mxu0 0.0
    %1957 = vmatprep.subr.mxu0 0.0
    %1958 = vmatpush1.msra.mxu0 0.0
    %1959 = vmatprep.subr.mxu0 0.0
    %1960 = vmatpush1.msra.mxu0 0.0
    %1961 = vmatprep.subr.mxu0 0.0
    %1962 = vmatpush1.msra.mxu0 0.0
    %1963 = vmatprep.subr.mxu0 0.0
    %1964 = vmatpush1.msra.mxu0 0.0
    %1965 = vmatprep.subr.mxu0 0.0
    %1966 = vmatpush1.msra.mxu0 0.0
    %1967 = vmatprep.subr.mxu0 0.0
    %1968 = vmatpush1.msra.mxu0 0.0
    %1969 = vmatprep.subr.mxu0 0.0
    %1970 = vmatpush1.msra.mxu0 0.0
    %1971 = vmatprep.subr.mxu0 0.0
    %1972 = vmatpush1.msra.mxu0 0.0
    %1973 = vmatprep.subr.mxu0 0.0
    %1974 = vmatpush1.msra.mxu0 0.0
    %1975 = vmatprep.subr.mxu0 0.0
    %1976 = vmatpush1.msra.mxu0 0.0
    %1977 = vmatprep.subr.mxu0 0.0
    %1978 = vmatpush1.msra.mxu0 0.0
    %1979 = vmatprep.subr.mxu0 0.0
    %1980 = vmatpush1.msra.mxu0 0.0
    %1981 = vmatprep.subr.mxu0 0.0
    %1982 = vmatpush1.msra.mxu0 0.0
    %1983 = vmatprep.subr.mxu0 0.0
    %1984 = vmatpush1.msra.mxu0 0.0
    %1985 = vmatprep.subr.mxu0 0.0
    %1986 = vmatpush1.msra.mxu0 0.0
    %1987 = vmatprep.subr.mxu0 0.0
    %1988 = vmatpush1.msra.mxu0 0.0
    %1989 = vmatprep.subr.mxu0 0.0
    %1990 = vmatpush1.msra.mxu0 0.0
    %1991 = vmatprep.subr.mxu0 0.0
    %1992 = vmatpush1.msra.mxu0 0.0
    %1993 = vmatprep.mubr.f32.mxu0 0.0
    %1994 = vmatmul.mubr.f32.gmra.mrb[0].mxu0 %v1927
    %v1995 = vpop.f32.mrb[0].mxu0
    %v1996 = vadd.f32 0.0, %v1995
    %v1997 = vpop.f32.mrb[0].mxu0
    %v1998 = vadd.f32 0.0, %v1997
    %1999 = vdwg.mxu0
    %v2000 = vadd.f32 %v1925, %v1996
    %v2001 = vadd.f32 %v1926, %v1998
    %v2002 = vmul.f32 %v2000, 0.5
    %v2003 = vmul.f32 %v2001, 0.5
    %v2004 = vtanh.pop %v2002
    %v2005 = vtanh.pop %v2003
    %v2006 = vmul.f32 %v2004, 0.5
    %v2007 = vmul.f32 %v2005, 0.5
    %v2008 = vadd.f32 %v2006, 0.5
    %v2009 = vadd.f32 %v2007, 0.5
    %v2010 = vtanh.pop %v2001
    %v2011 = vmul.f32 %v2008, %v1916
    %v2012 = vmul.f32 %v2008, %v2010
    %2014 = vrot.lane.b32.xlu0 %v2012, 64
    %v2015 = vpop.permute.xlu0 %2014
    %v2017 = vadd.f32 %v2011, %v2015
    %v2018 = vtanh.pop %v2017
    %v2019 = vmul.f32 %v2009, %v2018
    %2021 = vrot.lane.b32.xlu0 %v2019, 64
    %v2022 = vpop.permute.xlu0 %2021
    %s2024 = scalar_lea.vmem %s6, 40
    %2025 = vst.msk [vmem:[%s2024] sm:$0xff] %vm200, %v2022
    %v2026 = vld [vmem:[#allocation3 + $0x60] sm:$0xff]
    %v2027 = vld [vmem:[#allocation3 + $0x68] sm:$0xff]
    %v2028 = vsel %vm200, %v2022, 0
    %2030 = vmatprep.subr.mxu0 %v1234
    %2031 = vmatpush1.msra.mxu0 %v1233
    %2032 = vmatprep.subr.mxu0 %v1236
    %2033 = vmatpush1.msra.mxu0 %v1235
    %2034 = vmatprep.subr.mxu0 %v1238
    %2035 = vmatpush1.msra.mxu0 %v1237
    %2036 = vmatprep.subr.mxu0 %v1240
    %2037 = vmatpush1.msra.mxu0 %v1239
    %2038 = vmatprep.subr.mxu0 %v1242
    %2039 = vmatpush1.msra.mxu0 %v1241
    %2040 = vmatprep.subr.mxu0 %v1244
    %2041 = vmatpush1.msra.mxu0 %v1243
    %2042 = vmatprep.subr.mxu0 %v1246
    %2043 = vmatpush1.msra.mxu0 %v1245
    %2044 = vmatprep.subr.mxu0 %v1248
    %2045 = vmatpush1.msra.mxu0 %v1247
    %2046 = vmatprep.subr.mxu0 0.0
    %2047 = vmatpush1.msra.mxu0 0.0
    %2048 = vmatprep.subr.mxu0 0.0
    %2049 = vmatpush1.msra.mxu0 0.0
    %2050 = vmatprep.subr.mxu0 0.0
    %2051 = vmatpush1.msra.mxu0 0.0
    %2052 = vmatprep.subr.mxu0 0.0
    %2053 = vmatpush1.msra.mxu0 0.0
    %2054 = vmatprep.subr.mxu0 0.0
    %2055 = vmatpush1.msra.mxu0 0.0
    %2056 = vmatprep.subr.mxu0 0.0
    %2057 = vmatpush1.msra.mxu0 0.0
    %2058 = vmatprep.subr.mxu0 0.0
    %2059 = vmatpush1.msra.mxu0 0.0
    %2060 = vmatprep.subr.mxu0 0.0
    %2061 = vmatpush1.msra.mxu0 0.0
    %2062 = vmatprep.subr.mxu0 0.0
    %2063 = vmatpush1.msra.mxu0 0.0
    %2064 = vmatprep.subr.mxu0 0.0
    %2065 = vmatpush1.msra.mxu0 0.0
    %2066 = vmatprep.subr.mxu0 0.0
    %2067 = vmatpush1.msra.mxu0 0.0
    %2068 = vmatprep.subr.mxu0 0.0
    %2069 = vmatpush1.msra.mxu0 0.0
    %2070 = vmatprep.subr.mxu0 0.0
    %2071 = vmatpush1.msra.mxu0 0.0
    %2072 = vmatprep.subr.mxu0 0.0
    %2073 = vmatpush1.msra.mxu0 0.0
    %2074 = vmatprep.subr.mxu0 0.0
    %2075 = vmatpush1.msra.mxu0 0.0
    %2076 = vmatprep.subr.mxu0 0.0
    %2077 = vmatpush1.msra.mxu0 0.0
    %2078 = vmatprep.subr.mxu0 0.0
    %2079 = vmatpush1.msra.mxu0 0.0
    %2080 = vmatprep.subr.mxu0 0.0
    %2081 = vmatpush1.msra.mxu0 0.0
    %2082 = vmatprep.subr.mxu0 0.0
    %2083 = vmatpush1.msra.mxu0 0.0
    %2084 = vmatprep.subr.mxu0 0.0
    %2085 = vmatpush1.msra.mxu0 0.0
    %2086 = vmatprep.subr.mxu0 0.0
    %2087 = vmatpush1.msra.mxu0 0.0
    %2088 = vmatprep.subr.mxu0 0.0
    %2089 = vmatpush1.msra.mxu0 0.0
    %2090 = vmatprep.subr.mxu0 0.0
    %2091 = vmatpush1.msra.mxu0 0.0
    %2092 = vmatprep.subr.mxu0 0.0
    %2093 = vmatpush1.msra.mxu0 0.0
    %2094 = vmatprep.mubr.f32.mxu0 0.0
    %2095 = vmatmul.mubr.f32.gmra.mrb[0].mxu0 %v2028
    %v2096 = vpop.f32.mrb[0].mxu0
    %v2097 = vadd.f32 0.0, %v2096
    %v2098 = vpop.f32.mrb[0].mxu0
    %v2099 = vadd.f32 0.0, %v2098
    %2100 = vdwg.mxu0
    %v2101 = vadd.f32 %v2026, %v2097
    %v2102 = vadd.f32 %v2027, %v2099
    %v2103 = vmul.f32 %v2101, 0.5
    %v2104 = vmul.f32 %v2102, 0.5
    %v2105 = vtanh.pop %v2103
    %v2106 = vtanh.pop %v2104
    %v2107 = vmul.f32 %v2105, 0.5
    %v2108 = vmul.f32 %v2106, 0.5
    %v2109 = vadd.f32 %v2107, 0.5
    %v2110 = vadd.f32 %v2108, 0.5
    %v2111 = vtanh.pop %v2102
    %v2112 = vmul.f32 %v2109, %v2017
    %v2113 = vmul.f32 %v2109, %v2111
    %2115 = vrot.lane.b32.xlu0 %v2113, 64
    %v2116 = vpop.permute.xlu0 %2115
    %v2118 = vadd.f32 %v2112, %v2116
    %v2119 = vtanh.pop %v2118
    %v2120 = vmul.f32 %v2110, %v2119
    %2122 = vrot.lane.b32.xlu0 %v2120, 64
    %v2123 = vpop.permute.xlu0 %2122
    %s2125 = scalar_lea.vmem %s6, 48
    %2126 = vst.msk [vmem:[%s2125] sm:$0xff] %vm200, %v2123
    %v2127 = vld [vmem:[#allocation3 + $0x70] sm:$0xff]
    %v2128 = vld [vmem:[#allocation3 + $0x78] sm:$0xff]
    %v2129 = vsel %vm200, %v2123, 0
    %2131 = vmatprep.subr.mxu0 %v1234
    %2132 = vmatpush1.msra.mxu0 %v1233
    %2133 = vmatprep.subr.mxu0 %v1236
    %2134 = vmatpush1.msra.mxu0 %v1235
    %2135 = vmatprep.subr.mxu0 %v1238
    %2136 = vmatpush1.msra.mxu0 %v1237
    %2137 = vmatprep.subr.mxu0 %v1240
    %2138 = vmatpush1.msra.mxu0 %v1239
    %2139 = vmatprep.subr.mxu0 %v1242
    %2140 = vmatpush1.msra.mxu0 %v1241
    %2141 = vmatprep.subr.mxu0 %v1244
    %2142 = vmatpush1.msra.mxu0 %v1243
    %2143 = vmatprep.subr.mxu0 %v1246
    %2144 = vmatpush1.msra.mxu0 %v1245
    %2145 = vmatprep.subr.mxu0 %v1248
    %2146 = vmatpush1.msra.mxu0 %v1247
    %2147 = vmatprep.subr.mxu0 0.0
    %2148 = vmatpush1.msra.mxu0 0.0
    %2149 = vmatprep.subr.mxu0 0.0
    %2150 = vmatpush1.msra.mxu0 0.0
    %2151 = vmatprep.subr.mxu0 0.0
    %2152 = vmatpush1.msra.mxu0 0.0
    %2153 = vmatprep.subr.mxu0 0.0
    %2154 = vmatpush1.msra.mxu0 0.0
    %2155 = vmatprep.subr.mxu0 0.0
    %2156 = vmatpush1.msra.mxu0 0.0
    %2157 = vmatprep.subr.mxu0 0.0
    %2158 = vmatpush1.msra.mxu0 0.0
    %2159 = vmatprep.subr.mxu0 0.0
    %2160 = vmatpush1.msra.mxu0 0.0
    %2161 = vmatprep.subr.mxu0 0.0
    %2162 = vmatpush1.msra.mxu0 0.0
    %2163 = vmatprep.subr.mxu0 0.0
    %2164 = vmatpush1.msra.mxu0 0.0
    %2165 = vmatprep.subr.mxu0 0.0
    %2166 = vmatpush1.msra.mxu0 0.0
    %2167 = vmatprep.subr.mxu0 0.0
    %2168 = vmatpush1.msra.mxu0 0.0
    %2169 = vmatprep.subr.mxu0 0.0
    %2170 = vmatpush1.msra.mxu0 0.0
    %2171 = vmatprep.subr.mxu0 0.0
    %2172 = vmatpush1.msra.mxu0 0.0
    %2173 = vmatprep.subr.mxu0 0.0
    %2174 = vmatpush1.msra.mxu0 0.0
    %2175 = vmatprep.subr.mxu0 0.0
    %2176 = vmatpush1.msra.mxu0 0.0
    %2177 = vmatprep.subr.mxu0 0.0
    %2178 = vmatpush1.msra.mxu0 0.0
    %2179 = vmatprep.subr.mxu0 0.0
    %2180 = vmatpush1.msra.mxu0 0.0
    %2181 = vmatprep.subr.mxu0 0.0
    %2182 = vmatpush1.msra.mxu0 0.0
    %2183 = vmatprep.subr.mxu0 0.0
    %2184 = vmatpush1.msra.mxu0 0.0
    %2185 = vmatprep.subr.mxu0 0.0
    %2186 = vmatpush1.msra.mxu0 0.0
    %2187 = vmatprep.subr.mxu0 0.0
    %2188 = vmatpush1.msra.mxu0 0.0
    %2189 = vmatprep.subr.mxu0 0.0
    %2190 = vmatpush1.msra.mxu0 0.0
    %2191 = vmatprep.subr.mxu0 0.0
    %2192 = vmatpush1.msra.mxu0 0.0
    %2193 = vmatprep.subr.mxu0 0.0
    %2194 = vmatpush1.msra.mxu0 0.0
    %2195 = vmatprep.mubr.f32.mxu0 0.0
    %2196 = vmatmul.mubr.f32.gmra.mrb[0].mxu0 %v2129
    %v2197 = vpop.f32.mrb[0].mxu0
    %v2198 = vadd.f32 0.0, %v2197
    %v2199 = vpop.f32.mrb[0].mxu0
    %v2200 = vadd.f32 0.0, %v2199
    %2201 = vdwg.mxu0
    %v2202 = vadd.f32 %v2127, %v2198
    %v2203 = vadd.f32 %v2128, %v2200
    %v2204 = vmul.f32 %v2202, 0.5
    %v2205 = vmul.f32 %v2203, 0.5
    %v2206 = vtanh.pop %v2204
    %v2207 = vtanh.pop %v2205
    %v2208 = vmul.f32 %v2206, 0.5
    %v2209 = vmul.f32 %v2207, 0.5
    %v2210 = vadd.f32 %v2208, 0.5
    %v2211 = vadd.f32 %v2209, 0.5
    %v2212 = vtanh.pop %v2203
    %v2213 = vmul.f32 %v2210, %v2118
    %v2214 = vmul.f32 %v2210, %v2212
    %2216 = vrot.lane.b32.xlu0 %v2214, 64
    %v2217 = vpop.permute.xlu0 %2216
    %v2219 = vadd.f32 %v2213, %v2217
    %v2220 = vtanh.pop %v2219
    %v2221 = vmul.f32 %v2211, %v2220
    %2223 = vrot.lane.b32.xlu0 %v2221, 64
    %v2224 = vpop.permute.xlu0 %2223
    %s2226 = scalar_lea.vmem %s6, 56
    %2227 = vst.msk [vmem:[%s2226] sm:$0xff] %vm200, %v2224
    // Predicated region
    $region34: #{forward.1} parent=1 // pred_check
      _
    $region35: #{forward.1} parent=1 // pred_check_branch
      %2229 = sbr.rel (0) target = $region37
    $region36: #{forward.1} parent=1 // pred_region
      _
    $region37: #{forward.1} parent=1 // pred_fallthru
      _
    // Predicated region
    $region38: #{forward.1} parent=1 // pred_check
      _
    $region39: #{forward.1} parent=1 // pred_check_branch
      %2231 = sbr.rel (0) target = $region41
    $region40: #{forward.1} parent=1 // pred_region
      _
    $region41: #{forward.1} parent=1 // pred_fallthru
      _
    %2232 = vsyncpa [#allocation5], 1
    %2233 = vsyncpa [#allocation7], 1

</llo_original>
